<compile_context>
chip_gen: v6e
topology: v6e:2x2x1
jax: 0.10.0
libtpu: 0.0.40
codegen_flags: <defaults>
</compile_context>

<pallas_src>
import functools

import jax
import jax.numpy as jnp
from jax import lax
from jax.experimental import pallas as pl
from jax.experimental.pallas import tpu as pltpu


def _round_up(x, m):
    return (x + m - 1) // m * m


def _query_kernel(z_ref, cb_ref, cbt_ref, cbt_sq_ref, zq_ref, maps_ref,
                  *, depth, use_bf16):
    """One row-tile of the problem; codebooks are VMEM-resident.

    z_ref      : (TB, d)          float32  input rows for this grid step
    cb_ref     : (N, d)           float32  codebook (delta lookup)
    cbt_ref    : (N, d)           float32  transformed codebook (distances)
    cbt_sq_ref : (1, N)           float32  ||codebook_t||^2, lane-major
    zq_ref     : (TB, d)          float32  quantized output rows
    maps_ref   : (depth, TB, N)   float32  distance maps for these rows
    """
    z = z_ref[...]
    cb = cb_ref[...]
    cbt = cbt_ref[...]
    cbt_sq = cbt_sq_ref[...]                                  # (1, N)

    TB, _ = z.shape
    N = cb.shape[0]

    # Fold the -2 into the codebook once; amortized over the depth loop.
    cbt_m2 = cbt * (-2.0)                                     # (N, d)
    cbt_mm = cbt_m2.astype(jnp.bfloat16) if use_bf16 else cbt_m2

    # Lane-index iota for argmin / one-hot construction (2-D iota for TPU).
    col_ids = lax.broadcasted_iota(jnp.int32, (TB, N), 1)     # (TB, N)

    def step(i, residual):
        r_sq = jnp.sum(residual * residual, axis=1, keepdims=True)      # (TB, 1)
        lhs = residual.astype(cbt_mm.dtype)
        # residual @ (-2 * codebook_t).T  (contract d with d) -> MXU.
        cross = lax.dot_general(
            lhs, cbt_mm,
            dimension_numbers=(((1,), (1,)), ((), ())),
            preferred_element_type=jnp.float32,
        )                                                                # (TB, N)
        dist = r_sq + cbt_sq + cross                                     # (TB, N)
        maps_ref[i] = dist

        # argmin along N with first-occurrence tie break (matches torch.argmin).
        min_val = jnp.min(dist, axis=1, keepdims=True)                   # (TB, 1)
        idx = jnp.min(
            jnp.where(dist == min_val, col_ids, jnp.int32(N)),
            axis=1, keepdims=True,
        )                                                                # (TB, 1)
        one_hot = (col_ids == idx).astype(jnp.float32)                   # (TB, N)

        # delta = one_hot @ codebook -> MXU gather of the selected code rows.
        delta = jnp.dot(one_hot, cb, preferred_element_type=jnp.float32)  # (TB, d)
        return residual - delta

    residual = z
    if depth <= 8:
        # Small trip count: unroll for LLO scheduling visibility.
        for i in range(depth):
            residual = step(i, residual)
    else:
        # Large depth: keep register pressure flat.
        residual = lax.fori_loop(0, depth, step, residual)

    # z_q = sum of deltas = z - final residual (no per-step accumulator).
    zq_ref[...] = z - residual


def query_module(z, codebook, codebook_transform, depth, *, use_bf16_matmul=False):
    """Pallas wrapper. Returns (z_q, [dist_map_0, ..., dist_map_{depth-1}])."""
    B, d = z.shape
    N, d2 = codebook.shape
    assert d == d2 and codebook_transform.shape == (N, d)

    z = z.astype(jnp.float32)
    cb = codebook.astype(jnp.float32)
    cbt = codebook_transform.astype(jnp.float32)

    # Row tile: at most 256 rows per grid step (halved vs. a v6e-max budget so
    # the same tiling fits v7x's 64 MiB VMEM); pad B so the grid divides evenly.
    TB = 256 if B > 256 else _round_up(B, 8)
    B_pad = _round_up(B, TB)
    z_in = jnp.pad(z, ((0, B_pad - B), (0, 0))) if B_pad != B else z

    # ||codebook_t||^2 precomputed lane-major (1, N): no in-kernel
    # sublane->lane transpose for the (TB, N) broadcast.
    cbt_sq = jnp.sum(cbt * cbt, axis=1)[None, :]

    grid = (B_pad // TB,)

    # Explicit VMEM budget: resident codebooks + double-buffered row tiles,
    # clamped to v7x's 64 MiB per-core VMEM.
    resident = 2 * N * d * 4 + _round_up(N, 128) * 4
    per_tile = 2 * TB * d * 4 + depth * TB * N * 4
    vmem_limit = int(min(max(2 * (resident + per_tile) + (2 << 20), 8 << 20),
                         64 << 20))

    kernel = functools.partial(_query_kernel, depth=depth, use_bf16=use_bf16_matmul)

    z_q, maps = pl.pallas_call(
        kernel,
        grid=grid,
        in_specs=[
            pl.BlockSpec((TB, d), lambda i: (i, 0)),        # z: tiled over rows
            pl.BlockSpec((N, d), lambda i: (0, 0)),         # codebook: resident
            pl.BlockSpec((N, d), lambda i: (0, 0)),         # codebook_transform: resident
            pl.BlockSpec((1, N), lambda i: (0, 0)),         # ||cbt||^2: resident
        ],
        out_specs=(
            pl.BlockSpec((TB, d), lambda i: (i, 0)),
            pl.BlockSpec((depth, TB, N), lambda i: (0, i, 0)),
        ),
        out_shape=(
            jax.ShapeDtypeStruct((B_pad, d), jnp.float32),
            jax.ShapeDtypeStruct((depth, B_pad, N), jnp.float32),
        ),
        compiler_params=pltpu.CompilerParams(
            dimension_semantics=("parallel",),
            vmem_limit_bytes=vmem_limit,
        ),
    )(z_in, cb, cbt, cbt_sq)

    if B_pad != B:
        z_q = z_q[:B]
        maps = maps[:, :B, :]
    return z_q, [maps[i] for i in range(depth)]


def query_module_ref(z, codebook, codebook_transform, depth):
    """Pure-JAX reference mirroring the PyTorch forward."""
    residual = z
    z_q = jnp.zeros_like(z)
    maps = []
    N = codebook.shape[0]
    for _ in range(depth):
        dist = (
            jnp.sum(residual ** 2, axis=1, keepdims=True)
            + jnp.sum(codebook_transform ** 2, axis=1)
            - 2.0 * residual @ codebook_transform.T
        )
        maps.append(dist)
        pred = jnp.argmin(dist, axis=1)
        one_hot = jax.nn.one_hot(pred, N, dtype=jnp.float32)
        delta = one_hot @ codebook
        z_q = z_q + delta
        residual = residual - delta
    return z_q, maps


if __name__ == "__main__":
    # Lane-dense sizes (N = d = 128); B = 384 exercises both the row grid
    # (two 256-row steps) and the padding path.
    B, N, d, depth = 384, 128, 128, 3

    key = jax.random.PRNGKey(0)
    k_z, k_cb, k_cbt = jax.random.split(key, 3)

    z = jax.random.normal(k_z, (B, d), dtype=jnp.float32)
    codebook = jax.random.normal(k_cb, (N, d), dtype=jnp.float32)
    # codebook_transform is None in __init__ and assigned externally in the
    # original code; initialize it deterministically here.
    codebook_transform = codebook + 0.05 * jax.random.normal(
        k_cbt, (N, d), dtype=jnp.float32
    )

    z_q, maps = query_module(z, codebook, codebook_transform, depth)
    jax.block_until_ready(z_q)
    jax.block_until_ready(maps)

    z_q_ref, maps_ref_list = query_module_ref(z, codebook, codebook_transform, depth)

    assert z_q.shape == (B, d)
    assert jnp.allclose(z_q, z_q_ref, atol=1e-3, rtol=1e-3)
    for m, m_ref in zip(maps, maps_ref_list):
        assert m.shape == (B, N)
        assert jnp.allclose(m, m_ref, atol=1e-3, rtol=1e-3)

    print("KERNEL_OK")
</pallas_src>

<mosaic_0001>
module attributes {stable_mosaic.version = 11 : i64} {
  func.func @_query_kernel(%arg0: i32, %arg1: memref<256x128xf32, #tpu.memory_space<vmem>>, %arg2: memref<128x128xf32, #tpu.memory_space<vmem>>, %arg3: memref<128x128xf32, #tpu.memory_space<vmem>>, %arg4: memref<1x128xf32, #tpu.memory_space<vmem>>, %arg5: memref<256x128xf32, #tpu.memory_space<vmem>>, %arg6: memref<3x256x128xf32, #tpu.memory_space<vmem>>) attributes {dimension_semantics = [#tpu.dimension_semantics<parallel>], iteration_bounds = array<i64: 2>, scalar_prefetch = 0 : i64, scratch_operands = 0 : i64, tpu.core_type = #tpu.core_type<tc>, window_params = [{transform_indices = @transform_0, window_bounds = array<i64: 256, 128>}, {pipeline_mode = #tpu.pipeline_mode<synchronous>, transform_indices = @transform_1, window_bounds = array<i64: 128, 128>}, {pipeline_mode = #tpu.pipeline_mode<synchronous>, transform_indices = @transform_2, window_bounds = array<i64: 128, 128>}, {pipeline_mode = #tpu.pipeline_mode<synchronous>, transform_indices = @transform_3, window_bounds = array<i64: 1, 128>}, {transform_indices = @transform_4, window_bounds = array<i64: 256, 128>}, {transform_indices = @transform_5, window_bounds = array<i64: 3, 256, 128>}]} {
    %c0 = arith.constant 0 : index
    %c0_0 = arith.constant 0 : index
    %0 = vector.load %arg1[%c0, %c0_0] : memref<256x128xf32, #tpu.memory_space<vmem>>, vector<256x128xf32>
    %c0_1 = arith.constant 0 : index
    %c0_2 = arith.constant 0 : index
    %1 = vector.load %arg2[%c0_1, %c0_2] : memref<128x128xf32, #tpu.memory_space<vmem>>, vector<128x128xf32>
    %c0_3 = arith.constant 0 : index
    %c0_4 = arith.constant 0 : index
    %2 = vector.load %arg3[%c0_3, %c0_4] : memref<128x128xf32, #tpu.memory_space<vmem>>, vector<128x128xf32>
    %c0_5 = arith.constant 0 : index
    %c0_6 = arith.constant 0 : index
    %3 = vector.load %arg4[%c0_5, %c0_6] : memref<1x128xf32, #tpu.memory_space<vmem>>, vector<1x128xf32>
    %cst = arith.constant -2.000000e+00 : f32
    %4 = vector.broadcast %cst : f32 to vector<128x128xf32>
    %5 = arith.mulf %2, %4 : vector<128x128xf32>
    %6 = tpu.iota {dimensions = array<i32: 1>} : vector<256x128xi32>
    %7 = arith.mulf %0, %0 : vector<256x128xf32>
    %cst_7 = arith.constant dense<0.000000e+00> : vector<256xf32>
    %8 = vector.multi_reduction <add>, %7, %cst_7 [1] : vector<256x128xf32> to vector<256xf32>
    %9 = vector.shape_cast %8 : vector<256xf32> to vector<256x1xf32>
    %cst_8 = arith.constant dense<0.000000e+00> : vector<256x128xf32>
    %10 = tpu.matmul %0, %5, %cst_8 {dimension_numbers = #tpu.dot_dimension_numbers<[1], [1], [0], [0], [0, 0, 1, 0], [], []>} : vector<256x128xf32>, vector<128x128xf32>, vector<256x128xf32> -> vector<256x128xf32>
    %11 = vector.broadcast %9 : vector<256x1xf32> to vector<256x128xf32>
    %12 = vector.broadcast %3 : vector<1x128xf32> to vector<256x128xf32>
    %13 = arith.addf %11, %12 : vector<256x128xf32>
    %14 = arith.addf %13, %10 : vector<256x128xf32>
    %c0_9 = arith.constant 0 : index
    %c0_10 = arith.constant 0 : index
    %c0_11 = arith.constant 0 : index
    %15 = vector.load %arg6[%c0_9, %c0_10, %c0_11] : memref<3x256x128xf32, #tpu.memory_space<vmem>>, vector<1x256x128xf32>
    %16 = vector.shape_cast %15 : vector<1x256x128xf32> to vector<256x128xf32>
    %17 = vector.shape_cast %14 : vector<256x128xf32> to vector<1x256x128xf32>
    tpu.vector_store %arg6[%c0_9, %c0_10, %c0_11], %17 {strides = array<i32>} : memref<3x256x128xf32, #tpu.memory_space<vmem>>, vector<1x256x128xf32>,
    %cst_12 = arith.constant dense<0x7F800000> : vector<256xf32>
    %18 = vector.multi_reduction <minimumf>, %14, %cst_12 [1] : vector<256x128xf32> to vector<256xf32>
    %19 = vector.shape_cast %18 : vector<256xf32> to vector<256x1xf32>
    %20 = vector.broadcast %19 : vector<256x1xf32> to vector<256x128xf32>
    %21 = arith.cmpf oeq, %14, %20 : vector<256x128xf32>
    %c128_i32 = arith.constant 128 : i32
    %22 = vector.broadcast %c128_i32 : i32 to vector<256x128xi32>
    %23 = arith.select %21, %6, %22 : vector<256x128xi1>, vector<256x128xi32>
    %cst_13 = arith.constant dense<2147483647> : vector<256xi32>
    %24 = vector.multi_reduction <minsi>, %23, %cst_13 [1] : vector<256x128xi32> to vector<256xi32>
    %25 = vector.shape_cast %24 : vector<256xi32> to vector<256x1xi32>
    %26 = vector.broadcast %25 : vector<256x1xi32> to vector<256x128xi32>
    %27 = arith.cmpi eq, %6, %26 : vector<256x128xi32>
    %28 = arith.extui %27 : vector<256x128xi1> to vector<256x128xi32>
    %29 = arith.sitofp %28 : vector<256x128xi32> to vector<256x128xf32>
    %cst_14 = arith.constant dense<0.000000e+00> : vector<256x128xf32>
    %30 = tpu.matmul %29, %1, %cst_14 {dimension_numbers = #tpu.dot_dimension_numbers<[1], [0], [0], [1], [0, 0, 1, 1], [], []>} : vector<256x128xf32>, vector<128x128xf32>, vector<256x128xf32> -> vector<256x128xf32>
    %31 = arith.subf %0, %30 : vector<256x128xf32>
    %32 = arith.mulf %31, %31 : vector<256x128xf32>
    %cst_15 = arith.constant dense<0.000000e+00> : vector<256xf32>
    %33 = vector.multi_reduction <add>, %32, %cst_15 [1] : vector<256x128xf32> to vector<256xf32>
    %34 = vector.shape_cast %33 : vector<256xf32> to vector<256x1xf32>
    %cst_16 = arith.constant dense<0.000000e+00> : vector<256x128xf32>
    %35 = tpu.matmul %31, %5, %cst_16 {dimension_numbers = #tpu.dot_dimension_numbers<[1], [1], [0], [0], [0, 0, 1, 0], [], []>} : vector<256x128xf32>, vector<128x128xf32>, vector<256x128xf32> -> vector<256x128xf32>
    %36 = vector.broadcast %34 : vector<256x1xf32> to vector<256x128xf32>
    %37 = vector.broadcast %3 : vector<1x128xf32> to vector<256x128xf32>
    %38 = arith.addf %36, %37 : vector<256x128xf32>
    %39 = arith.addf %38, %35 : vector<256x128xf32>
    %c1 = arith.constant 1 : index
    %c0_17 = arith.constant 0 : index
    %c0_18 = arith.constant 0 : index
    %40 = vector.load %arg6[%c1, %c0_17, %c0_18] : memref<3x256x128xf32, #tpu.memory_space<vmem>>, vector<1x256x128xf32>
    %41 = vector.shape_cast %40 : vector<1x256x128xf32> to vector<256x128xf32>
    %42 = vector.shape_cast %39 : vector<256x128xf32> to vector<1x256x128xf32>
    tpu.vector_store %arg6[%c1, %c0_17, %c0_18], %42 {strides = array<i32>} : memref<3x256x128xf32, #tpu.memory_space<vmem>>, vector<1x256x128xf32>,
    %cst_19 = arith.constant dense<0x7F800000> : vector<256xf32>
    %43 = vector.multi_reduction <minimumf>, %39, %cst_19 [1] : vector<256x128xf32> to vector<256xf32>
    %44 = vector.shape_cast %43 : vector<256xf32> to vector<256x1xf32>
    %45 = vector.broadcast %44 : vector<256x1xf32> to vector<256x128xf32>
    %46 = arith.cmpf oeq, %39, %45 : vector<256x128xf32>
    %c128_i32_20 = arith.constant 128 : i32
    %47 = vector.broadcast %c128_i32_20 : i32 to vector<256x128xi32>
    %48 = arith.select %46, %6, %47 : vector<256x128xi1>, vector<256x128xi32>
    %cst_21 = arith.constant dense<2147483647> : vector<256xi32>
    %49 = vector.multi_reduction <minsi>, %48, %cst_21 [1] : vector<256x128xi32> to vector<256xi32>
    %50 = vector.shape_cast %49 : vector<256xi32> to vector<256x1xi32>
    %51 = vector.broadcast %50 : vector<256x1xi32> to vector<256x128xi32>
    %52 = arith.cmpi eq, %6, %51 : vector<256x128xi32>
    %53 = arith.extui %52 : vector<256x128xi1> to vector<256x128xi32>
    %54 = arith.sitofp %53 : vector<256x128xi32> to vector<256x128xf32>
    %cst_22 = arith.constant dense<0.000000e+00> : vector<256x128xf32>
    %55 = tpu.matmul %54, %1, %cst_22 {dimension_numbers = #tpu.dot_dimension_numbers<[1], [0], [0], [1], [0, 0, 1, 1], [], []>} : vector<256x128xf32>, vector<128x128xf32>, vector<256x128xf32> -> vector<256x128xf32>
    %56 = arith.subf %31, %55 : vector<256x128xf32>
    %57 = arith.mulf %56, %56 : vector<256x128xf32>
    %cst_23 = arith.constant dense<0.000000e+00> : vector<256xf32>
    %58 = vector.multi_reduction <add>, %57, %cst_23 [1] : vector<256x128xf32> to vector<256xf32>
    %59 = vector.shape_cast %58 : vector<256xf32> to vector<256x1xf32>
    %cst_24 = arith.constant dense<0.000000e+00> : vector<256x128xf32>
    %60 = tpu.matmul %56, %5, %cst_24 {dimension_numbers = #tpu.dot_dimension_numbers<[1], [1], [0], [0], [0, 0, 1, 0], [], []>} : vector<256x128xf32>, vector<128x128xf32>, vector<256x128xf32> -> vector<256x128xf32>
    %61 = vector.broadcast %59 : vector<256x1xf32> to vector<256x128xf32>
    %62 = vector.broadcast %3 : vector<1x128xf32> to vector<256x128xf32>
    %63 = arith.addf %61, %62 : vector<256x128xf32>
    %64 = arith.addf %63, %60 : vector<256x128xf32>
    %c2 = arith.constant 2 : index
    %c0_25 = arith.constant 0 : index
    %c0_26 = arith.constant 0 : index
    %65 = vector.load %arg6[%c2, %c0_25, %c0_26] : memref<3x256x128xf32, #tpu.memory_space<vmem>>, vector<1x256x128xf32>
    %66 = vector.shape_cast %65 : vector<1x256x128xf32> to vector<256x128xf32>
    %67 = vector.shape_cast %64 : vector<256x128xf32> to vector<1x256x128xf32>
    tpu.vector_store %arg6[%c2, %c0_25, %c0_26], %67 {strides = array<i32>} : memref<3x256x128xf32, #tpu.memory_space<vmem>>, vector<1x256x128xf32>,
    %cst_27 = arith.constant dense<0x7F800000> : vector<256xf32>
    %68 = vector.multi_reduction <minimumf>, %64, %cst_27 [1] : vector<256x128xf32> to vector<256xf32>
    %69 = vector.shape_cast %68 : vector<256xf32> to vector<256x1xf32>
    %70 = vector.broadcast %69 : vector<256x1xf32> to vector<256x128xf32>
    %71 = arith.cmpf oeq, %64, %70 : vector<256x128xf32>
    %c128_i32_28 = arith.constant 128 : i32
    %72 = vector.broadcast %c128_i32_28 : i32 to vector<256x128xi32>
    %73 = arith.select %71, %6, %72 : vector<256x128xi1>, vector<256x128xi32>
    %cst_29 = arith.constant dense<2147483647> : vector<256xi32>
    %74 = vector.multi_reduction <minsi>, %73, %cst_29 [1] : vector<256x128xi32> to vector<256xi32>
    %75 = vector.shape_cast %74 : vector<256xi32> to vector<256x1xi32>
    %76 = vector.broadcast %75 : vector<256x1xi32> to vector<256x128xi32>
    %77 = arith.cmpi eq, %6, %76 : vector<256x128xi32>
    %78 = arith.extui %77 : vector<256x128xi1> to vector<256x128xi32>
    %79 = arith.sitofp %78 : vector<256x128xi32> to vector<256x128xf32>
    %cst_30 = arith.constant dense<0.000000e+00> : vector<256x128xf32>
    %80 = tpu.matmul %79, %1, %cst_30 {dimension_numbers = #tpu.dot_dimension_numbers<[1], [0], [0], [1], [0, 0, 1, 1], [], []>} : vector<256x128xf32>, vector<128x128xf32>, vector<256x128xf32> -> vector<256x128xf32>
    %81 = arith.subf %56, %80 : vector<256x128xf32>
    %82 = arith.subf %0, %81 : vector<256x128xf32>
    %c0_31 = arith.constant 0 : index
    %c0_32 = arith.constant 0 : index
    %83 = vector.load %arg5[%c0_31, %c0_32] : memref<256x128xf32, #tpu.memory_space<vmem>>, vector<256x128xf32>
    tpu.vector_store %arg5[%c0_31, %c0_32], %82 {strides = array<i32>} : memref<256x128xf32, #tpu.memory_space<vmem>>, vector<256x128xf32>,
    return
  }
  func.func @transform_0(%arg0: i32) -> (i32, i32) {
    %c0_i32 = arith.constant 0 : i32
    %c0_i32_0 = arith.constant 0 : i32
    return %arg0, %c0_i32 : i32, i32
  }
  func.func @transform_1(%arg0: i32) -> (i32, i32) {
    %c0_i32 = arith.constant 0 : i32
    %c0_i32_0 = arith.constant 0 : i32
    %c0_i32_1 = arith.constant 0 : i32
    return %c0_i32, %c0_i32_0 : i32, i32
  }
  func.func @transform_2(%arg0: i32) -> (i32, i32) {
    %c0_i32 = arith.constant 0 : i32
    %c0_i32_0 = arith.constant 0 : i32
    %c0_i32_1 = arith.constant 0 : i32
    return %c0_i32, %c0_i32_0 : i32, i32
  }
  func.func @transform_3(%arg0: i32) -> (i32, i32) {
    %c0_i32 = arith.constant 0 : i32
    %c0_i32_0 = arith.constant 0 : i32
    %c0_i32_1 = arith.constant 0 : i32
    return %c0_i32, %c0_i32_0 : i32, i32
  }
  func.func @transform_4(%arg0: i32) -> (i32, i32) {
    %c0_i32 = arith.constant 0 : i32
    %c0_i32_0 = arith.constant 0 : i32
    return %arg0, %c0_i32 : i32, i32
  }
  func.func @transform_5(%arg0: i32) -> (i32, i32, i32) {
    %c0_i32 = arith.constant 0 : i32
    %c0_i32_0 = arith.constant 0 : i32
    %c0_i32_1 = arith.constant 0 : i32
    return %c0_i32, %arg0, %c0_i32_0 : i32, i32, i32
  }
}

</mosaic_0001>

<llo_original>
// kernel: tpu_custom_call.1
$region0: #{tpu_custom_call.1}
  #allocation0 [shape = 'u32[]', space=smem, size = 0x4, offset = 0x4, fixed_abs, tag = 'smem constant byte address 0x4 - core index']
  #allocation1 [shape = 'u32[144,128]{1,0:T(1,128)}', space=vmem, size = 0x12000, scoped, tag = 'internal scratch']
  #allocation11 [shape = 's32[]', space=sflag, size = 0x4, offset = 0, fixed_abs, tag = 'sflag constant byte address 0x0 - dummy sync flag']
  %s0 = inlined_call_operand.hbm [shape: f32[512,128], index: 0, kind: input, shape index: {}]
  %s1 = inlined_call_operand.hbm [shape: f32[128,128], index: 1, kind: input, shape index: {}]
  %s2 = inlined_call_operand.hbm [shape: f32[128,128], index: 2, kind: input, shape index: {}]
  %s3 = inlined_call_operand.vmem [shape: f32[1,128], index: 3, kind: input, shape index: {}]
  %s4 = inlined_call_operand.hbm [shape: f32[512,128], index: 4, kind: output, shape index: {0}]
  %s5 = inlined_call_operand.hbm [shape: f32[3,512,128], index: 5, kind: output, shape index: {1}]
  %6 = xla_tuple %s4, %s5
  %s7 = sld [smem:[#allocation0]]
  $region69: #{tpu_custom_call.1} parent=0
    _
  %s9 = ssub.s32 1, %s7
  %s10 = scalar_select 0, %s9, %s7
  $region1: #{tpu_custom_call.1} parent=0
    #allocation2 [shape = 'u8[262144]{0}', space=vmem, size = 0x40000, scoped, tag = 'input window, operand 0']
    #allocation3 [shape = 's32[2]{0}', space=sflag, size = 0x8, scoped, tag = 'scoped memory for tpu_custom_call.1']
    #allocation4 [shape = 's32[2]{0}', space=sflag, size = 0x8, scoped, tag = 'scoped memory for tpu_custom_call.1']
    #allocation5 [shape = 'u8[65536]{0}', space=vmem, size = 0x10000, scoped, tag = 'input window, operand 1, single buffered']
    #allocation6 [shape = 's32[1]{0}', space=sflag, size = 0x4, scoped, tag = 'scoped memory for tpu_custom_call.1']
    #allocation7 [shape = 'u8[65536]{0}', space=vmem, size = 0x10000, scoped, tag = 'input window, operand 2, single buffered']
    #allocation8 [shape = 'u8[262144]{0}', space=vmem, size = 0x40000, scoped, tag = 'output window, operand 0']
    #allocation9 [shape = 'u8[786432]{0}', space=vmem, size = 0xc0000, scoped, tag = 'output window, operand 1']
    #allocation10 [shape = 's32[2]{0}', space=sflag, size = 0x8, scoped, tag = 'scoped memory for tpu_custom_call.1']
    %11 = vsyncpa [#allocation3], 0
    %s12 = scalar_lea.sflag [#allocation3], 1
    %13 = vsyncpa %s12, 0
    %14 = vsyncpa [#allocation6], 0
    %15 = vsyncpa [#allocation4], 0
    %s16 = scalar_lea.sflag [#allocation4], 1
    %17 = vsyncpa %s16, 0
    %18 = vsyncpa [#allocation10], 0
    %s19 = scalar_lea.sflag [#allocation10], 1
    %20 = vsyncpa %s19, 0
    loop: start=0, step=1, limit=4
    $region2: #{tpu_custom_call.1} parent=1 // loop_pre_header
      _
    $region3: #{tpu_custom_call.1} parent=1 // loop_header
      %s22 = sphi 0, %s26
      %p23 = scmp.ge.s32.totalorder %s22, 4
      %s32 = sphi 0, %s34
      %s35 = sphi 0, %s32
      %s36 = sphi 0, %s35
      %s52 = sphi 0, %s36
      %s56 = sphi 0, %s56
      %s58 = sphi 0, %s56
      %s59 = sphi 0, %s58
      %s73 = sphi 0, %s59
      %s77 = sphi 0, %s77
      %s79 = sphi 0, %s77
      %s80 = sphi 0, %s79
      %s94 = sphi 0, %s80
      %s98 = sphi 0, %s98
      %s100 = sphi 0, %s98
      %s101 = sphi 0, %s100
      %s115 = sphi 0, %s101
      %s121 = sphi 0, %s123
      %s124 = sphi 0, %s121
      %s125 = sphi 0, %s124
      %s141 = sphi 0, %s125
      %s147 = sphi 0, %s149
      %s150 = sphi 0, %s147
      %s151 = sphi 0, %s150
      %s167 = sphi 0, %s151
    $region4: #{tpu_custom_call.1} parent=1 // loop_header_branch
      %25 = sbr.rel (%p23) target = $region8
    $region5: #{tpu_custom_call.1} parent=1 // loop_body
      %s27 = ssub.s32 %s22, 1
      %s28 = ssub.s32 %s22, 2
      %s29 = sadd.s32 %s22, 1
      %s30 = ssub.s32 %s22, %s29
      %p31 = scmp.eq.s32.totalorder %s30, 0
      %s33 = sadd.s32 %s32, 1
      %s34 = scalar_select %p31, %s32, %s33
      %p37 = pneg %p31
      %p38 = scmp.eq.s32.totalorder %s22, 1
      %p39 = por %p37, %p38
      %p40 = scmp.ne.s32.totalorder %s32, %s35
      %p41 = scmp.eq.s32.totalorder %s22, 0
      %p42 = por %p40, %p41
      %p43 = scmp.ne.s32.totalorder %s32, %s35
      %p44 = scmp.eq.s32.totalorder %s27, 1
      %p45 = por %p43, %p44
      %p46 = scmp.ne.s32.totalorder %s35, %s36
      %p47 = scmp.eq.s32.totalorder %s27, 0
      %p48 = por %p46, %p47
      %p49 = scmp.ne.s32.totalorder %s35, %s36
      %p50 = scmp.eq.s32.totalorder %s28, 1
      %p51 = por %p49, %p50
      %p53 = scmp.ne.s32.totalorder %s36, %s52
      %p54 = scmp.eq.s32.totalorder %s28, 0
      %p55 = por %p53, %p54
      %s57 = sadd.s32 %s56, 1
      %p60 = scmp.eq.s32.totalorder %s22, 1
      %p61 = scmp.ne.s32.totalorder %s56, %s58
      %p62 = scmp.eq.s32.totalorder %s22, 0
      %p63 = por %p61, %p62
      %p64 = scmp.ne.s32.totalorder %s56, %s58
      %p65 = scmp.eq.s32.totalorder %s27, 1
      %p66 = por %p64, %p65
      %p67 = scmp.ne.s32.totalorder %s58, %s59
      %p68 = scmp.eq.s32.totalorder %s27, 0
      %p69 = por %p67, %p68
      %p70 = scmp.ne.s32.totalorder %s58, %s59
      %p71 = scmp.eq.s32.totalorder %s28, 1
      %p72 = por %p70, %p71
      %p74 = scmp.ne.s32.totalorder %s59, %s73
      %p75 = scmp.eq.s32.totalorder %s28, 0
      %p76 = por %p74, %p75
      %s78 = sadd.s32 %s77, 1
      %p81 = scmp.eq.s32.totalorder %s22, 1
      %p82 = scmp.ne.s32.totalorder %s77, %s79
      %p83 = scmp.eq.s32.totalorder %s22, 0
      %p84 = por %p82, %p83
      %p85 = scmp.ne.s32.totalorder %s77, %s79
      %p86 = scmp.eq.s32.totalorder %s27, 1
      %p87 = por %p85, %p86
      %p88 = scmp.ne.s32.totalorder %s79, %s80
      %p89 = scmp.eq.s32.totalorder %s27, 0
      %p90 = por %p88, %p89
      %p91 = scmp.ne.s32.totalorder %s79, %s80
      %p92 = scmp.eq.s32.totalorder %s28, 1
      %p93 = por %p91, %p92
      %p95 = scmp.ne.s32.totalorder %s80, %s94
      %p96 = scmp.eq.s32.totalorder %s28, 0
      %p97 = por %p95, %p96
      %s99 = sadd.s32 %s98, 1
      %p102 = scmp.eq.s32.totalorder %s22, 1
      %p103 = scmp.ne.s32.totalorder %s98, %s100
      %p104 = scmp.eq.s32.totalorder %s22, 0
      %p105 = por %p103, %p104
      %p106 = scmp.ne.s32.totalorder %s98, %s100
      %p107 = scmp.eq.s32.totalorder %s27, 1
      %p108 = por %p106, %p107
      %p109 = scmp.ne.s32.totalorder %s100, %s101
      %p110 = scmp.eq.s32.totalorder %s27, 0
      %p111 = por %p109, %p110
      %p112 = scmp.ne.s32.totalorder %s100, %s101
      %p113 = scmp.eq.s32.totalorder %s28, 1
      %p114 = por %p112, %p113
      %p116 = scmp.ne.s32.totalorder %s101, %s115
      %p117 = scmp.eq.s32.totalorder %s28, 0
      %p118 = por %p116, %p117
      %s119 = ssub.s32 %s22, %s29
      %p120 = scmp.eq.s32.totalorder %s119, 0
      %s122 = sadd.s32 %s121, 1
      %s123 = scalar_select %p120, %s121, %s122
      %p126 = pneg %p120
      %p127 = scmp.eq.s32.totalorder %s22, 1
      %p128 = por %p126, %p127
      %p129 = scmp.ne.s32.totalorder %s121, %s124
      %p130 = scmp.eq.s32.totalorder %s22, 0
      %p131 = por %p129, %p130
      %p132 = scmp.ne.s32.totalorder %s121, %s124
      %p133 = scmp.eq.s32.totalorder %s27, 1
      %p134 = por %p132, %p133
      %p135 = scmp.ne.s32.totalorder %s124, %s125
      %p136 = scmp.eq.s32.totalorder %s27, 0
      %p137 = por %p135, %p136
      %p138 = scmp.ne.s32.totalorder %s124, %s125
      %p139 = scmp.eq.s32.totalorder %s28, 1
      %p140 = por %p138, %p139
      %p142 = scmp.ne.s32.totalorder %s125, %s141
      %p143 = scmp.eq.s32.totalorder %s28, 0
      %p144 = por %p142, %p143
      %s145 = ssub.s32 %s22, %s29
      %p146 = scmp.eq.s32.totalorder %s145, 0
      %s148 = sadd.s32 %s147, 1
      %s149 = scalar_select %p146, %s147, %s148
      %p152 = pneg %p146
      %p153 = scmp.eq.s32.totalorder %s22, 1
      %p154 = por %p152, %p153
      %p155 = scmp.ne.s32.totalorder %s147, %s150
      %p156 = scmp.eq.s32.totalorder %s22, 0
      %p157 = por %p155, %p156
      %p158 = scmp.ne.s32.totalorder %s147, %s150
      %p159 = scmp.eq.s32.totalorder %s27, 1
      %p160 = por %p158, %p159
      %p161 = scmp.ne.s32.totalorder %s150, %s151
      %p162 = scmp.eq.s32.totalorder %s27, 0
      %p163 = por %p161, %p162
      %p164 = scmp.ne.s32.totalorder %s150, %s151
      %p165 = scmp.eq.s32.totalorder %s28, 1
      %p166 = por %p164, %p165
      %p168 = scmp.ne.s32.totalorder %s151, %s167
      %p169 = scmp.eq.s32.totalorder %s28, 0
      %p170 = por %p168, %p169
      %p171 = scmp.le.s32.totalorder 1, %s22
      %p172 = scmp.lt.s32.totalorder %s22, 3
      %p173 = pnand %p171, %p172
      %p174 = pneg %p173
      // Predicated region
      $region9: #{tpu_custom_call.1} parent=5 // pred_check
        _
      $region10: #{tpu_custom_call.1} parent=5 // pred_check_branch
        %176 = sbr.rel (%p173) target = $region12
      $region11: #{tpu_custom_call.1} parent=5 // pred_region
        %s177 = ssub.s32 %s22, 1
        // Predicated region
        $region13: #{tpu_custom_call.1} parent=11 // pred_check
          %p178 = pneg %p69
        $region14: #{tpu_custom_call.1} parent=11 // pred_check_branch
          %180 = sbr.rel (%p178) target = $region16
        $region15: #{tpu_custom_call.1} parent=11 // pred_region
          %s182 = ssub.s32 2048, 2048
          %183 = vsyncadd [#allocation6], %s182
          %s184 = sshll.u32 [#allocation5], 4
          %s185 = int_to_ptr.vmem [resolvable:$true] %s184
          %190 = dma.hbm_to_vmem [thread:$0]  %s1, 2048, %s185, [#allocation6], 128, 128, 8
        $region16: #{tpu_custom_call.1} parent=11 // pred_fallthru
          _
        // Predicated region
        $region17: #{tpu_custom_call.1} parent=11 // pred_check
          %p191 = pneg %p90
        $region18: #{tpu_custom_call.1} parent=11 // pred_check_branch
          %193 = sbr.rel (%p191) target = $region20
        $region19: #{tpu_custom_call.1} parent=11 // pred_region
          %s195 = ssub.s32 2048, 2048
          %196 = vsyncadd [#allocation6], %s195
          %s197 = sshll.u32 [#allocation7], 4
          %s198 = int_to_ptr.vmem [resolvable:$true] %s197
          %203 = dma.hbm_to_vmem [thread:$0]  %s2, 2048, %s198, [#allocation6], 128, 128, 8
        $region20: #{tpu_custom_call.1} parent=11 // pred_fallthru
          _
        // Predicated region
        $region21: #{tpu_custom_call.1} parent=11 // pred_check
          %p204 = pneg %p111
        $region22: #{tpu_custom_call.1} parent=11 // pred_check_branch
          %206 = sbr.rel (%p204) target = $region24
        $region23: #{tpu_custom_call.1} parent=11 // pred_region
          _
        $region24: #{tpu_custom_call.1} parent=11 // pred_fallthru
          _
      $region12: #{tpu_custom_call.1} parent=5 // pred_fallthru
        _
      %p207 = scmp.lt.s32.totalorder %s22, 2
      // Predicated region
      $region25: #{tpu_custom_call.1} parent=5 // pred_check
        %p208 = pneg %p207
      $region26: #{tpu_custom_call.1} parent=5 // pred_check_branch
        %210 = sbr.rel (%p208) target = $region28
      $region27: #{tpu_custom_call.1} parent=5 // pred_region
        // Predicated region
        $region29: #{tpu_custom_call.1} parent=27 // pred_check
          %p211 = pneg %p42
        $region30: #{tpu_custom_call.1} parent=27 // pred_check_branch
          %213 = sbr.rel (%p211) target = $region32
        $region31: #{tpu_custom_call.1} parent=27 // pred_region
          %s214 = sand.u32 %s32, 1
          %s215 = scalar_lea.sflag [#allocation3], %s214
          %s216 = sand.u32 %s32, 1
          %s217 = smul.addr %s216, 256
          %s218 = scalar_lea.vmem [#allocation2], %s217
          %s219 = smul.u32 32, %s22
          %s221 = ssub.s32 4096, 4096
          %222 = vsyncadd %s215, %s221
          %s223 = smul.addr %s219, 128
          %s224 = scalar_lea.hbm %s0, %s223
          %s225 = sshll.u32 %s218, 4
          %s226 = int_to_ptr.vmem [resolvable:$true] %s225
          %231 = dma.hbm_to_vmem [thread:$0]  %s224, 4096, %s226, %s215, 128, 128, 8
        $region32: #{tpu_custom_call.1} parent=27 // pred_fallthru
          _
      $region28: #{tpu_custom_call.1} parent=5 // pred_fallthru
        _
      %p232 = scmp.le.s32.totalorder 1, %s22
      %p233 = scmp.lt.s32.totalorder %s22, 3
      %p234 = pnand %p232, %p233
      %p235 = pneg %p234
      // Predicated region
      $region33: #{tpu_custom_call.1} parent=5 // pred_check
        _
      $region34: #{tpu_custom_call.1} parent=5 // pred_check_branch
        %237 = sbr.rel (%p234) target = $region36
      $region35: #{tpu_custom_call.1} parent=5 // pred_region
        %s238 = ssub.s32 %s22, 1
        %s239 = sand.u32 %s35, 1
        %s240 = scalar_lea.sflag [#allocation3], %s239
        %s241 = sand.u32 %s35, 1
        %s242 = smul.addr %s241, 256
        %s243 = scalar_lea.vmem [#allocation2], %s242
        // Predicated region
        $region37: #{tpu_custom_call.1} parent=35 // pred_check
          %p244 = pneg %p48
        $region38: #{tpu_custom_call.1} parent=35 // pred_check_branch
          %246 = sbr.rel (%p244) target = $region40
        $region39: #{tpu_custom_call.1} parent=35 // pred_region
          %247 = dma.done %s240, 4096
        $region40: #{tpu_custom_call.1} parent=35 // pred_fallthru
          _
        // Predicated region
        $region41: #{tpu_custom_call.1} parent=35 // pred_check
          %p248 = pneg %p69
        $region42: #{tpu_custom_call.1} parent=35 // pred_check_branch
          %250 = sbr.rel (%p248) target = $region44
        $region43: #{tpu_custom_call.1} parent=35 // pred_region
          %251 = dma.done [#allocation6], 2048
        $region44: #{tpu_custom_call.1} parent=35 // pred_fallthru
          _
        // Predicated region
        $region45: #{tpu_custom_call.1} parent=35 // pred_check
          %p252 = pneg %p90
        $region46: #{tpu_custom_call.1} parent=35 // pred_check_branch
          %254 = sbr.rel (%p252) target = $region48
        $region47: #{tpu_custom_call.1} parent=35 // pred_region
          %255 = dma.done [#allocation6], 2048
        $region48: #{tpu_custom_call.1} parent=35 // pred_fallthru
          _
        %s256 = sand.u32 %s35, 1
        %s257 = scalar_lea.sflag [#allocation3], %s256
        %s258 = sand.u32 %s35, 1
        %s259 = smul.addr %s258, 256
        %s260 = scalar_lea.vmem [#allocation2], %s259
        %p261 = pneg %p48
        %p262 = pneg %p45
        %p263 = pneg %p69
        %p264 = pneg %p66
        %p265 = pneg %p90
        %p266 = pneg %p87
        %p267 = pneg %p111
        %p268 = pneg %p108
        %p269 = pneg %p137
        %p270 = pneg %p134
        %s271 = sand.u32 %s124, 1
        %s272 = scalar_lea.sflag [#allocation4], %s271
        %s273 = sand.u32 %s124, 1
        %s274 = smul.addr %s273, 256
        %s275 = scalar_lea.vmem [#allocation8], %s274
        %p276 = pneg %p163
        %p277 = pneg %p160
        %s278 = sand.u32 %s150, 1
        %s279 = scalar_lea.sflag [#allocation10], %s278
        %s280 = sand.u32 %s150, 1
        %s281 = smul.addr %s280, 768
        %s282 = scalar_lea.vmem [#allocation9], %s281
        %s283 = smul.u32 32, %s27
        %s284 = smul.u32 32, %s27
        %s285 = smul.u32 32, %s27
        %v286 = vld [vmem:[%s243] sm:$0xff]
        %v287 = vld [vmem:[%s243 + $0x8] sm:$0xff]
        %v288 = vld [vmem:[%s243 + $0x10] sm:$0xff]
        %v289 = vld [vmem:[%s243 + $0x18] sm:$0xff]
        %v290 = vld [vmem:[%s243 + $0x20] sm:$0xff]
        %v291 = vld [vmem:[%s243 + $0x28] sm:$0xff]
        %v292 = vld [vmem:[%s243 + $0x30] sm:$0xff]
        %v293 = vld [vmem:[%s243 + $0x38] sm:$0xff]
        %v294 = vld [vmem:[%s243 + $0x40] sm:$0xff]
        %v295 = vld [vmem:[%s243 + $0x48] sm:$0xff]
        %v296 = vld [vmem:[%s243 + $0x50] sm:$0xff]
        %v297 = vld [vmem:[%s243 + $0x58] sm:$0xff]
        %v298 = vld [vmem:[%s243 + $0x60] sm:$0xff]
        %v299 = vld [vmem:[%s243 + $0x68] sm:$0xff]
        %v300 = vld [vmem:[%s243 + $0x70] sm:$0xff]
        %v301 = vld [vmem:[%s243 + $0x78] sm:$0xff]
        %v302 = vld [vmem:[%s243 + $0x80] sm:$0xff]
        %v303 = vld [vmem:[%s243 + $0x88] sm:$0xff]
        %v304 = vld [vmem:[%s243 + $0x90] sm:$0xff]
        %v305 = vld [vmem:[%s243 + $0x98] sm:$0xff]
        %v306 = vld [vmem:[%s243 + $0xa0] sm:$0xff]
        %v307 = vld [vmem:[%s243 + $0xa8] sm:$0xff]
        %v308 = vld [vmem:[%s243 + $0xb0] sm:$0xff]
        %v309 = vld [vmem:[%s243 + $0xb8] sm:$0xff]
        %v310 = vld [vmem:[%s243 + $0xc0] sm:$0xff]
        %v311 = vld [vmem:[%s243 + $0xc8] sm:$0xff]
        %v312 = vld [vmem:[%s243 + $0xd0] sm:$0xff]
        %v313 = vld [vmem:[%s243 + $0xd8] sm:$0xff]
        %v314 = vld [vmem:[%s243 + $0xe0] sm:$0xff]
        %v315 = vld [vmem:[%s243 + $0xe8] sm:$0xff]
        %v316 = vld [vmem:[%s243 + $0xf0] sm:$0xff]
        %v317 = vld [vmem:[%s243 + $0xf8] sm:$0xff]
        %v318 = vld [vmem:[#allocation5] sm:$0xff]
        %v319 = vld [vmem:[#allocation5 + $0x8] sm:$0xff]
        %v320 = vld [vmem:[#allocation5 + $0x10] sm:$0xff]
        %v321 = vld [vmem:[#allocation5 + $0x18] sm:$0xff]
        %v322 = vld [vmem:[#allocation5 + $0x20] sm:$0xff]
        %v323 = vld [vmem:[#allocation5 + $0x28] sm:$0xff]
        %v324 = vld [vmem:[#allocation5 + $0x30] sm:$0xff]
        %v325 = vld [vmem:[#allocation5 + $0x38] sm:$0xff]
        %v326 = vld [vmem:[#allocation5 + $0x40] sm:$0xff]
        %v327 = vld [vmem:[#allocation5 + $0x48] sm:$0xff]
        %v328 = vld [vmem:[#allocation5 + $0x50] sm:$0xff]
        %v329 = vld [vmem:[#allocation5 + $0x58] sm:$0xff]
        %v330 = vld [vmem:[#allocation5 + $0x60] sm:$0xff]
        %v331 = vld [vmem:[#allocation5 + $0x68] sm:$0xff]
        %v332 = vld [vmem:[#allocation5 + $0x70] sm:$0xff]
        %v333 = vld [vmem:[#allocation5 + $0x78] sm:$0xff]
        %v334 = vld [vmem:[#allocation7] sm:$0xff]
        %v335 = vld [vmem:[#allocation7 + $0x8] sm:$0xff]
        %v336 = vld [vmem:[#allocation7 + $0x10] sm:$0xff]
        %v337 = vld [vmem:[#allocation7 + $0x18] sm:$0xff]
        %v338 = vld [vmem:[#allocation7 + $0x20] sm:$0xff]
        %v339 = vld [vmem:[#allocation7 + $0x28] sm:$0xff]
        %v340 = vld [vmem:[#allocation7 + $0x30] sm:$0xff]
        %v341 = vld [vmem:[#allocation7 + $0x38] sm:$0xff]
        %v342 = vld [vmem:[#allocation7 + $0x40] sm:$0xff]
        %v343 = vld [vmem:[#allocation7 + $0x48] sm:$0xff]
        %v344 = vld [vmem:[#allocation7 + $0x50] sm:$0xff]
        %v345 = vld [vmem:[#allocation7 + $0x58] sm:$0xff]
        %v346 = vld [vmem:[#allocation7 + $0x60] sm:$0xff]
        %v347 = vld [vmem:[#allocation7 + $0x68] sm:$0xff]
        %v348 = vld [vmem:[#allocation7 + $0x70] sm:$0xff]
        %v349 = vld [vmem:[#allocation7 + $0x78] sm:$0xff]
        %v350 = vld [vmem:[%s3] sm:$0x1]
        %v351 = vmul.f32 %v334, -2.0
        %v352 = vmul.f32 %v335, -2.0
        %v353 = vmul.f32 %v336, -2.0
        %v354 = vmul.f32 %v337, -2.0
        %v355 = vmul.f32 %v338, -2.0
        %v356 = vmul.f32 %v339, -2.0
        %v357 = vmul.f32 %v340, -2.0
        %v358 = vmul.f32 %v341, -2.0
        %v359 = vmul.f32 %v342, -2.0
        %v360 = vmul.f32 %v343, -2.0
        %v361 = vmul.f32 %v344, -2.0
        %v362 = vmul.f32 %v345, -2.0
        %v363 = vmul.f32 %v346, -2.0
        %v364 = vmul.f32 %v347, -2.0
        %v365 = vmul.f32 %v348, -2.0
        %v366 = vmul.f32 %v349, -2.0
        %v367 = vlaneseq
        %v368 = vand.u32 %v367, 127
        %v369 = vmul.f32 %v286, %v286
        %v370 = vmul.f32 %v287, %v287
        %v371 = vmul.f32 %v288, %v288
        %v372 = vmul.f32 %v289, %v289
        %v373 = vmul.f32 %v290, %v290
        %v374 = vmul.f32 %v291, %v291
        %v375 = vmul.f32 %v292, %v292
        %v376 = vmul.f32 %v293, %v293
        %v377 = vmul.f32 %v294, %v294
        %v378 = vmul.f32 %v295, %v295
        %v379 = vmul.f32 %v296, %v296
        %v380 = vmul.f32 %v297, %v297
        %v381 = vmul.f32 %v298, %v298
        %v382 = vmul.f32 %v299, %v299
        %v383 = vmul.f32 %v300, %v300
        %v384 = vmul.f32 %v301, %v301
        %v385 = vmul.f32 %v302, %v302
        %v386 = vmul.f32 %v303, %v303
        %v387 = vmul.f32 %v304, %v304
        %v388 = vmul.f32 %v305, %v305
        %v389 = vmul.f32 %v306, %v306
        %v390 = vmul.f32 %v307, %v307
        %v391 = vmul.f32 %v308, %v308
        %v392 = vmul.f32 %v309, %v309
        %v393 = vmul.f32 %v310, %v310
        %v394 = vmul.f32 %v311, %v311
        %v395 = vmul.f32 %v312, %v312
        %v396 = vmul.f32 %v313, %v313
        %v397 = vmul.f32 %v314, %v314
        %v398 = vmul.f32 %v315, %v315
        %v399 = vmul.f32 %v316, %v316
        %v400 = vmul.f32 %v317, %v317
        %401 = vadd.xlane.f32.xlu0 %v369
        %v402 = vpop.xlane.xlu0 %401
        %403 = vadd.xlane.f32.xlu0 %v370
        %v404 = vpop.xlane.xlu0 %403
        %405 = vadd.xlane.f32.xlu0 %v371
        %v406 = vpop.xlane.xlu0 %405
        %407 = vadd.xlane.f32.xlu0 %v372
        %v408 = vpop.xlane.xlu0 %407
        %409 = vadd.xlane.f32.xlu0 %v373
        %v410 = vpop.xlane.xlu0 %409
        %411 = vadd.xlane.f32.xlu0 %v374
        %v412 = vpop.xlane.xlu0 %411
        %413 = vadd.xlane.f32.xlu0 %v375
        %v414 = vpop.xlane.xlu0 %413
        %415 = vadd.xlane.f32.xlu0 %v376
        %v416 = vpop.xlane.xlu0 %415
        %417 = vadd.xlane.f32.xlu0 %v377
        %v418 = vpop.xlane.xlu0 %417
        %419 = vadd.xlane.f32.xlu0 %v378
        %v420 = vpop.xlane.xlu0 %419
        %421 = vadd.xlane.f32.xlu0 %v379
        %v422 = vpop.xlane.xlu0 %421
        %423 = vadd.xlane.f32.xlu0 %v380
        %v424 = vpop.xlane.xlu0 %423
        %425 = vadd.xlane.f32.xlu0 %v381
        %v426 = vpop.xlane.xlu0 %425
        %427 = vadd.xlane.f32.xlu0 %v382
        %v428 = vpop.xlane.xlu0 %427
        %429 = vadd.xlane.f32.xlu0 %v383
        %v430 = vpop.xlane.xlu0 %429
        %431 = vadd.xlane.f32.xlu0 %v384
        %v432 = vpop.xlane.xlu0 %431
        %433 = vadd.xlane.f32.xlu0 %v385
        %v434 = vpop.xlane.xlu0 %433
        %435 = vadd.xlane.f32.xlu0 %v386
        %v436 = vpop.xlane.xlu0 %435
        %437 = vadd.xlane.f32.xlu0 %v387
        %v438 = vpop.xlane.xlu0 %437
        %439 = vadd.xlane.f32.xlu0 %v388
        %v440 = vpop.xlane.xlu0 %439
        %441 = vadd.xlane.f32.xlu0 %v389
        %v442 = vpop.xlane.xlu0 %441
        %443 = vadd.xlane.f32.xlu0 %v390
        %v444 = vpop.xlane.xlu0 %443
        %445 = vadd.xlane.f32.xlu0 %v391
        %v446 = vpop.xlane.xlu0 %445
        %447 = vadd.xlane.f32.xlu0 %v392
        %v448 = vpop.xlane.xlu0 %447
        %449 = vadd.xlane.f32.xlu0 %v393
        %v450 = vpop.xlane.xlu0 %449
        %451 = vadd.xlane.f32.xlu0 %v394
        %v452 = vpop.xlane.xlu0 %451
        %453 = vadd.xlane.f32.xlu0 %v395
        %v454 = vpop.xlane.xlu0 %453
        %455 = vadd.xlane.f32.xlu0 %v396
        %v456 = vpop.xlane.xlu0 %455
        %457 = vadd.xlane.f32.xlu0 %v397
        %v458 = vpop.xlane.xlu0 %457
        %459 = vadd.xlane.f32.xlu0 %v398
        %v460 = vpop.xlane.xlu0 %459
        %461 = vadd.xlane.f32.xlu0 %v399
        %v462 = vpop.xlane.xlu0 %461
        %463 = vadd.xlane.f32.xlu0 %v400
        %v464 = vpop.xlane.xlu0 %463
        %465 = vmatprep.subr.mxu0 0.0
        %466 = vmatpush1.xpose.msra.mxu0 %v366
        %467 = vmatprep.subr.mxu0 0.0
        %468 = vmatpush1.xpose.msra.mxu0 %v365
        %469 = vmatprep.subr.mxu0 0.0
        %470 = vmatpush1.xpose.msra.mxu0 %v364
        %471 = vmatprep.subr.mxu0 0.0
        %472 = vmatpush1.xpose.msra.mxu0 %v363
        %473 = vmatprep.subr.mxu0 0.0
        %474 = vmatpush1.xpose.msra.mxu0 %v362
        %475 = vmatprep.subr.mxu0 0.0
        %476 = vmatpush1.xpose.msra.mxu0 %v361
        %477 = vmatprep.subr.mxu0 0.0
        %478 = vmatpush1.xpose.msra.mxu0 %v360
        %479 = vmatprep.subr.mxu0 0.0
        %480 = vmatpush1.xpose.msra.mxu0 %v359
        %481 = vmatprep.subr.mxu0 0.0
        %482 = vmatpush1.xpose.msra.mxu0 %v358
        %483 = vmatprep.subr.mxu0 0.0
        %484 = vmatpush1.xpose.msra.mxu0 %v357
        %485 = vmatprep.subr.mxu0 0.0
        %486 = vmatpush1.xpose.msra.mxu0 %v356
        %487 = vmatprep.subr.mxu0 0.0
        %488 = vmatpush1.xpose.msra.mxu0 %v355
        %489 = vmatprep.subr.mxu0 0.0
        %490 = vmatpush1.xpose.msra.mxu0 %v354
        %491 = vmatprep.subr.mxu0 0.0
        %492 = vmatpush1.xpose.msra.mxu0 %v353
        %493 = vmatprep.subr.mxu0 0.0
        %494 = vmatpush1.xpose.msra.mxu0 %v352
        %495 = vmatprep.subr.mxu0 0.0
        %496 = vmatpush1.xpose.msra.mxu0 %v351
        %497 = vmatprep.subr.mxu0 0.0
        %498 = vmatpush2.xpose.msra.mxu0 0.0
        %499 = vmatprep.subr.mxu0 0.0
        %500 = vmatpush2.xpose.msra.mxu0 0.0
        %501 = vmatprep.subr.mxu0 0.0
        %502 = vmatpush2.xpose.msra.mxu0 0.0
        %503 = vmatprep.subr.mxu0 0.0
        %504 = vmatpush2.xpose.msra.mxu0 0.0
        %505 = vmatprep.subr.mxu0 0.0
        %506 = vmatpush2.xpose.msra.mxu0 0.0
        %507 = vmatprep.subr.mxu0 0.0
        %508 = vmatpush2.xpose.msra.mxu0 0.0
        %509 = vmatprep.subr.mxu0 0.0
        %510 = vmatpush2.xpose.msra.mxu0 0.0
        %511 = vmatprep.subr.mxu0 0.0
        %512 = vmatpush2.xpose.msra.mxu0 0.0
        %513 = vmatprep.subr.mxu0 0.0
        %514 = vmatpush2.xpose.msra.mxu0 0.0
        %515 = vmatprep.subr.mxu0 0.0
        %516 = vmatpush2.xpose.msra.mxu0 0.0
        %517 = vmatprep.subr.mxu0 0.0
        %518 = vmatpush2.xpose.msra.mxu0 0.0
        %519 = vmatprep.subr.mxu0 0.0
        %520 = vmatpush2.xpose.msra.mxu0 0.0
        %521 = vmatprep.subr.mxu0 0.0
        %522 = vmatpush2.xpose.msra.mxu0 0.0
        %523 = vmatprep.subr.mxu0 0.0
        %524 = vmatpush2.xpose.msra.mxu0 0.0
        %525 = vmatprep.subr.mxu0 0.0
        %526 = vmatpush2.xpose.msra.mxu0 0.0
        %527 = vmatprep.subr.mxu0 0.0
        %528 = vmatpush2.xpose.msra.mxu0 0.0
        %529 = vmatprep.mubr.f32.mxu0 0.0
        %530 = vmatmul.mubr.f32.gmra.mxu0 %v286
        %v531 = vpop.f32.mrf.mxu0
        %v532 = vadd.f32 0.0, %v531
        %v533 = vpop.f32.mrf.mxu0
        %534 = vmatprep.mubr.f32.mxu0 0.0
        %535 = vmatmul.mubr.f32.gmra.mxu0 %v287
        %v536 = vpop.f32.mrf.mxu0
        %v537 = vadd.f32 0.0, %v536
        %v538 = vpop.f32.mrf.mxu0
        %539 = vmatprep.mubr.f32.mxu0 0.0
        %540 = vmatmul.mubr.f32.gmra.mxu0 %v288
        %v541 = vpop.f32.mrf.mxu0
        %v542 = vadd.f32 0.0, %v541
        %v543 = vpop.f32.mrf.mxu0
        %544 = vmatprep.mubr.f32.mxu0 0.0
        %545 = vmatmul.mubr.f32.gmra.mxu0 %v289
        %v546 = vpop.f32.mrf.mxu0
        %v547 = vadd.f32 0.0, %v546
        %v548 = vpop.f32.mrf.mxu0
        %549 = vmatprep.mubr.f32.mxu0 0.0
        %550 = vmatmul.mubr.f32.gmra.mxu0 %v290
        %v551 = vpop.f32.mrf.mxu0
        %v552 = vadd.f32 0.0, %v551
        %v553 = vpop.f32.mrf.mxu0
        %554 = vmatprep.mubr.f32.mxu0 0.0
        %555 = vmatmul.mubr.f32.gmra.mxu0 %v291
        %v556 = vpop.f32.mrf.mxu0
        %v557 = vadd.f32 0.0, %v556
        %v558 = vpop.f32.mrf.mxu0
        %559 = vmatprep.mubr.f32.mxu0 0.0
        %560 = vmatmul.mubr.f32.gmra.mxu0 %v292
        %v561 = vpop.f32.mrf.mxu0
        %v562 = vadd.f32 0.0, %v561
        %v563 = vpop.f32.mrf.mxu0
        %564 = vmatprep.mubr.f32.mxu0 0.0
        %565 = vmatmul.mubr.f32.gmra.mxu0 %v293
        %v566 = vpop.f32.mrf.mxu0
        %v567 = vadd.f32 0.0, %v566
        %v568 = vpop.f32.mrf.mxu0
        %569 = vmatprep.mubr.f32.mxu0 0.0
        %570 = vmatmul.mubr.f32.gmra.mxu0 %v294
        %v571 = vpop.f32.mrf.mxu0
        %v572 = vadd.f32 0.0, %v571
        %v573 = vpop.f32.mrf.mxu0
        %574 = vmatprep.mubr.f32.mxu0 0.0
        %575 = vmatmul.mubr.f32.gmra.mxu0 %v295
        %v576 = vpop.f32.mrf.mxu0
        %v577 = vadd.f32 0.0, %v576
        %v578 = vpop.f32.mrf.mxu0
        %579 = vmatprep.mubr.f32.mxu0 0.0
        %580 = vmatmul.mubr.f32.gmra.mxu0 %v296
        %v581 = vpop.f32.mrf.mxu0
        %v582 = vadd.f32 0.0, %v581
        %v583 = vpop.f32.mrf.mxu0
        %584 = vmatprep.mubr.f32.mxu0 0.0
        %585 = vmatmul.mubr.f32.gmra.mxu0 %v297
        %v586 = vpop.f32.mrf.mxu0
        %v587 = vadd.f32 0.0, %v586
        %v588 = vpop.f32.mrf.mxu0
        %589 = vmatprep.mubr.f32.mxu0 0.0
        %590 = vmatmul.mubr.f32.gmra.mxu0 %v298
        %v591 = vpop.f32.mrf.mxu0
        %v592 = vadd.f32 0.0, %v591
        %v593 = vpop.f32.mrf.mxu0
        %594 = vmatprep.mubr.f32.mxu0 0.0
        %595 = vmatmul.mubr.f32.gmra.mxu0 %v299
        %v596 = vpop.f32.mrf.mxu0
        %v597 = vadd.f32 0.0, %v596
        %v598 = vpop.f32.mrf.mxu0
        %599 = vmatprep.mubr.f32.mxu0 0.0
        %600 = vmatmul.mubr.f32.gmra.mxu0 %v300
        %v601 = vpop.f32.mrf.mxu0
        %v602 = vadd.f32 0.0, %v601
        %v603 = vpop.f32.mrf.mxu0
        %604 = vmatprep.mubr.f32.mxu0 0.0
        %605 = vmatmul.mubr.f32.gmra.mxu0 %v301
        %v606 = vpop.f32.mrf.mxu0
        %v607 = vadd.f32 0.0, %v606
        %v608 = vpop.f32.mrf.mxu0
        %609 = vmatprep.mubr.f32.mxu0 0.0
        %610 = vmatmul.mubr.f32.gmra.mxu0 %v302
        %v611 = vpop.f32.mrf.mxu0
        %v612 = vadd.f32 0.0, %v611
        %v613 = vpop.f32.mrf.mxu0
        %614 = vmatprep.mubr.f32.mxu0 0.0
        %615 = vmatmul.mubr.f32.gmra.mxu0 %v303
        %v616 = vpop.f32.mrf.mxu0
        %v617 = vadd.f32 0.0, %v616
        %v618 = vpop.f32.mrf.mxu0
        %619 = vmatprep.mubr.f32.mxu0 0.0
        %620 = vmatmul.mubr.f32.gmra.mxu0 %v304
        %v621 = vpop.f32.mrf.mxu0
        %v622 = vadd.f32 0.0, %v621
        %v623 = vpop.f32.mrf.mxu0
        %624 = vmatprep.mubr.f32.mxu0 0.0
        %625 = vmatmul.mubr.f32.gmra.mxu0 %v305
        %v626 = vpop.f32.mrf.mxu0
        %v627 = vadd.f32 0.0, %v626
        %v628 = vpop.f32.mrf.mxu0
        %629 = vmatprep.mubr.f32.mxu0 0.0
        %630 = vmatmul.mubr.f32.gmra.mxu0 %v306
        %v631 = vpop.f32.mrf.mxu0
        %v632 = vadd.f32 0.0, %v631
        %v633 = vpop.f32.mrf.mxu0
        %634 = vmatprep.mubr.f32.mxu0 0.0
        %635 = vmatmul.mubr.f32.gmra.mxu0 %v307
        %v636 = vpop.f32.mrf.mxu0
        %v637 = vadd.f32 0.0, %v636
        %v638 = vpop.f32.mrf.mxu0
        %639 = vmatprep.mubr.f32.mxu0 0.0
        %640 = vmatmul.mubr.f32.gmra.mxu0 %v308
        %v641 = vpop.f32.mrf.mxu0
        %v642 = vadd.f32 0.0, %v641
        %v643 = vpop.f32.mrf.mxu0
        %644 = vmatprep.mubr.f32.mxu0 0.0
        %645 = vmatmul.mubr.f32.gmra.mxu0 %v309
        %v646 = vpop.f32.mrf.mxu0
        %v647 = vadd.f32 0.0, %v646
        %v648 = vpop.f32.mrf.mxu0
        %649 = vmatprep.mubr.f32.mxu0 0.0
        %650 = vmatmul.mubr.f32.gmra.mxu0 %v310
        %v651 = vpop.f32.mrf.mxu0
        %v652 = vadd.f32 0.0, %v651
        %v653 = vpop.f32.mrf.mxu0
        %654 = vmatprep.mubr.f32.mxu0 0.0
        %655 = vmatmul.mubr.f32.gmra.mxu0 %v311
        %v656 = vpop.f32.mrf.mxu0
        %v657 = vadd.f32 0.0, %v656
        %v658 = vpop.f32.mrf.mxu0
        %659 = vmatprep.mubr.f32.mxu0 0.0
        %660 = vmatmul.mubr.f32.gmra.mxu0 %v312
        %v661 = vpop.f32.mrf.mxu0
        %v662 = vadd.f32 0.0, %v661
        %v663 = vpop.f32.mrf.mxu0
        %664 = vmatprep.mubr.f32.mxu0 0.0
        %665 = vmatmul.mubr.f32.gmra.mxu0 %v313
        %v666 = vpop.f32.mrf.mxu0
        %v667 = vadd.f32 0.0, %v666
        %v668 = vpop.f32.mrf.mxu0
        %669 = vmatprep.mubr.f32.mxu0 0.0
        %670 = vmatmul.mubr.f32.gmra.mxu0 %v314
        %v671 = vpop.f32.mrf.mxu0
        %v672 = vadd.f32 0.0, %v671
        %v673 = vpop.f32.mrf.mxu0
        %674 = vmatprep.mubr.f32.mxu0 0.0
        %675 = vmatmul.mubr.f32.gmra.mxu0 %v315
        %v676 = vpop.f32.mrf.mxu0
        %v677 = vadd.f32 0.0, %v676
        %v678 = vpop.f32.mrf.mxu0
        %679 = vmatprep.mubr.f32.mxu0 0.0
        %680 = vmatmul.mubr.f32.gmra.mxu0 %v316
        %v681 = vpop.f32.mrf.mxu0
        %v682 = vadd.f32 0.0, %v681
        %v683 = vpop.f32.mrf.mxu0
        %684 = vmatprep.mubr.f32.mxu0 0.0
        %685 = vmatmul.mubr.f32.gmra.mxu0 %v317
        %v686 = vpop.f32.mrf.mxu0
        %v687 = vadd.f32 0.0, %v686
        %v688 = vpop.f32.mrf.mxu0
        %689 = vdwg.mxu0
        %v691 = vlaneseq
        %v692 = vshrl.u32 %v691, 7
        %v693 = vsub.s32 0, %v692
        %v694 = vrot.slane %v350, %v693
        %v696 = vadd.f32 %v402, %v694
        %v697 = vadd.f32 %v404, %v694
        %v698 = vadd.f32 %v406, %v694
        %v699 = vadd.f32 %v408, %v694
        %v700 = vadd.f32 %v410, %v694
        %v701 = vadd.f32 %v412, %v694
        %v702 = vadd.f32 %v414, %v694
        %v703 = vadd.f32 %v416, %v694
        %v704 = vadd.f32 %v418, %v694
        %v705 = vadd.f32 %v420, %v694
        %v706 = vadd.f32 %v422, %v694
        %v707 = vadd.f32 %v424, %v694
        %v708 = vadd.f32 %v426, %v694
        %v709 = vadd.f32 %v428, %v694
        %v710 = vadd.f32 %v430, %v694
        %v711 = vadd.f32 %v432, %v694
        %v712 = vadd.f32 %v434, %v694
        %v713 = vadd.f32 %v436, %v694
        %v714 = vadd.f32 %v438, %v694
        %v715 = vadd.f32 %v440, %v694
        %v716 = vadd.f32 %v442, %v694
        %v717 = vadd.f32 %v444, %v694
        %v718 = vadd.f32 %v446, %v694
        %v719 = vadd.f32 %v448, %v694
        %v720 = vadd.f32 %v450, %v694
        %v721 = vadd.f32 %v452, %v694
        %v722 = vadd.f32 %v454, %v694
        %v723 = vadd.f32 %v456, %v694
        %v724 = vadd.f32 %v458, %v694
        %v725 = vadd.f32 %v460, %v694
        %v726 = vadd.f32 %v462, %v694
        %v727 = vadd.f32 %v464, %v694
        %v728 = vadd.f32 %v696, %v532
        %v729 = vadd.f32 %v697, %v537
        %v730 = vadd.f32 %v698, %v542
        %v731 = vadd.f32 %v699, %v547
        %v732 = vadd.f32 %v700, %v552
        %v733 = vadd.f32 %v701, %v557
        %v734 = vadd.f32 %v702, %v562
        %v735 = vadd.f32 %v703, %v567
        %v736 = vadd.f32 %v704, %v572
        %v737 = vadd.f32 %v705, %v577
        %v738 = vadd.f32 %v706, %v582
        %v739 = vadd.f32 %v707, %v587
        %v740 = vadd.f32 %v708, %v592
        %v741 = vadd.f32 %v709, %v597
        %v742 = vadd.f32 %v710, %v602
        %v743 = vadd.f32 %v711, %v607
        %v744 = vadd.f32 %v712, %v612
        %v745 = vadd.f32 %v713, %v617
        %v746 = vadd.f32 %v714, %v622
        %v747 = vadd.f32 %v715, %v627
        %v748 = vadd.f32 %v716, %v632
        %v749 = vadd.f32 %v717, %v637
        %v750 = vadd.f32 %v718, %v642
        %v751 = vadd.f32 %v719, %v647
        %v752 = vadd.f32 %v720, %v652
        %v753 = vadd.f32 %v721, %v657
        %v754 = vadd.f32 %v722, %v662
        %v755 = vadd.f32 %v723, %v667
        %v756 = vadd.f32 %v724, %v672
        %v757 = vadd.f32 %v725, %v677
        %v758 = vadd.f32 %v726, %v682
        %v759 = vadd.f32 %v727, %v687
        %760 = vst [vmem:[%s282] sm:$0xff] %v728
        %761 = vst [vmem:[%s282 + $0x8] sm:$0xff] %v729
        %762 = vst [vmem:[%s282 + $0x10] sm:$0xff] %v730
        %763 = vst [vmem:[%s282 + $0x18] sm:$0xff] %v731
        %764 = vst [vmem:[%s282 + $0x20] sm:$0xff] %v732
        %765 = vst [vmem:[%s282 + $0x28] sm:$0xff] %v733
        %766 = vst [vmem:[%s282 + $0x30] sm:$0xff] %v734
        %767 = vst [vmem:[%s282 + $0x38] sm:$0xff] %v735
        %768 = vst [vmem:[%s282 + $0x40] sm:$0xff] %v736
        %769 = vst [vmem:[%s282 + $0x48] sm:$0xff] %v737
        %770 = vst [vmem:[%s282 + $0x50] sm:$0xff] %v738
        %771 = vst [vmem:[%s282 + $0x58] sm:$0xff] %v739
        %772 = vst [vmem:[%s282 + $0x60] sm:$0xff] %v740
        %773 = vst [vmem:[%s282 + $0x68] sm:$0xff] %v741
        %774 = vst [vmem:[%s282 + $0x70] sm:$0xff] %v742
        %775 = vst [vmem:[%s282 + $0x78] sm:$0xff] %v743
        %776 = vst [vmem:[%s282 + $0x80] sm:$0xff] %v744
        %777 = vst [vmem:[%s282 + $0x88] sm:$0xff] %v745
        %778 = vst [vmem:[%s282 + $0x90] sm:$0xff] %v746
        %779 = vst [vmem:[%s282 + $0x98] sm:$0xff] %v747
        %780 = vst [vmem:[%s282 + $0xa0] sm:$0xff] %v748
        %781 = vst [vmem:[%s282 + $0xa8] sm:$0xff] %v749
        %782 = vst [vmem:[%s282 + $0xb0] sm:$0xff] %v750
        %783 = vst [vmem:[%s282 + $0xb8] sm:$0xff] %v751
        %784 = vst [vmem:[%s282 + $0xc0] sm:$0xff] %v752
        %785 = vst [vmem:[%s282 + $0xc8] sm:$0xff] %v753
        %786 = vst [vmem:[%s282 + $0xd0] sm:$0xff] %v754
        %787 = vst [vmem:[%s282 + $0xd8] sm:$0xff] %v755
        %788 = vst [vmem:[%s282 + $0xe0] sm:$0xff] %v756
        %789 = vst [vmem:[%s282 + $0xe8] sm:$0xff] %v757
        %790 = vst [vmem:[%s282 + $0xf0] sm:$0xff] %v758
        %791 = vst [vmem:[%s282 + $0xf8] sm:$0xff] %v759
        %792 = vmin.xlane.f32.xlu0 %v728
        %v793 = vpop.xlane.xlu0 %792
        %794 = vmin.xlane.f32.xlu0 %v729
        %v795 = vpop.xlane.xlu0 %794
        %796 = vmin.xlane.f32.xlu0 %v730
        %v797 = vpop.xlane.xlu0 %796
        %798 = vmin.xlane.f32.xlu0 %v731
        %v799 = vpop.xlane.xlu0 %798
        %800 = vmin.xlane.f32.xlu0 %v732
        %v801 = vpop.xlane.xlu0 %800
        %802 = vmin.xlane.f32.xlu0 %v733
        %v803 = vpop.xlane.xlu0 %802
        %804 = vmin.xlane.f32.xlu0 %v734
        %v805 = vpop.xlane.xlu0 %804
        %806 = vmin.xlane.f32.xlu0 %v735
        %v807 = vpop.xlane.xlu0 %806
        %808 = vmin.xlane.f32.xlu0 %v736
        %v809 = vpop.xlane.xlu0 %808
        %810 = vmin.xlane.f32.xlu0 %v737
        %v811 = vpop.xlane.xlu0 %810
        %812 = vmin.xlane.f32.xlu0 %v738
        %v813 = vpop.xlane.xlu0 %812
        %814 = vmin.xlane.f32.xlu0 %v739
        %v815 = vpop.xlane.xlu0 %814
        %816 = vmin.xlane.f32.xlu0 %v740
        %v817 = vpop.xlane.xlu0 %816
        %818 = vmin.xlane.f32.xlu0 %v741
        %v819 = vpop.xlane.xlu0 %818
        %820 = vmin.xlane.f32.xlu0 %v742
        %v821 = vpop.xlane.xlu0 %820
        %822 = vmin.xlane.f32.xlu0 %v743
        %v823 = vpop.xlane.xlu0 %822
        %824 = vmin.xlane.f32.xlu0 %v744
        %v825 = vpop.xlane.xlu0 %824
        %826 = vmin.xlane.f32.xlu0 %v745
        %v827 = vpop.xlane.xlu0 %826
        %828 = vmin.xlane.f32.xlu0 %v746
        %v829 = vpop.xlane.xlu0 %828
        %830 = vmin.xlane.f32.xlu0 %v747
        %v831 = vpop.xlane.xlu0 %830
        %832 = vmin.xlane.f32.xlu0 %v748
        %v833 = vpop.xlane.xlu0 %832
        %834 = vmin.xlane.f32.xlu0 %v749
        %v835 = vpop.xlane.xlu0 %834
        %836 = vmin.xlane.f32.xlu0 %v750
        %v837 = vpop.xlane.xlu0 %836
        %838 = vmin.xlane.f32.xlu0 %v751
        %v839 = vpop.xlane.xlu0 %838
        %840 = vmin.xlane.f32.xlu0 %v752
        %v841 = vpop.xlane.xlu0 %840
        %842 = vmin.xlane.f32.xlu0 %v753
        %v843 = vpop.xlane.xlu0 %842
        %844 = vmin.xlane.f32.xlu0 %v754
        %v845 = vpop.xlane.xlu0 %844
        %846 = vmin.xlane.f32.xlu0 %v755
        %v847 = vpop.xlane.xlu0 %846
        %848 = vmin.xlane.f32.xlu0 %v756
        %v849 = vpop.xlane.xlu0 %848
        %850 = vmin.xlane.f32.xlu0 %v757
        %v851 = vpop.xlane.xlu0 %850
        %852 = vmin.xlane.f32.xlu0 %v758
        %v853 = vpop.xlane.xlu0 %852
        %854 = vmin.xlane.f32.xlu0 %v759
        %v855 = vpop.xlane.xlu0 %854
        %vm856 = vcmp.eq.f32.partialorder %v728, %v793
        %vm857 = vcmp.eq.f32.partialorder %v729, %v795
        %vm858 = vcmp.eq.f32.partialorder %v730, %v797
        %vm859 = vcmp.eq.f32.partialorder %v731, %v799
        %vm860 = vcmp.eq.f32.partialorder %v732, %v801
        %vm861 = vcmp.eq.f32.partialorder %v733, %v803
        %vm862 = vcmp.eq.f32.partialorder %v734, %v805
        %vm863 = vcmp.eq.f32.partialorder %v735, %v807
        %vm864 = vcmp.eq.f32.partialorder %v736, %v809
        %vm865 = vcmp.eq.f32.partialorder %v737, %v811
        %vm866 = vcmp.eq.f32.partialorder %v738, %v813
        %vm867 = vcmp.eq.f32.partialorder %v739, %v815
        %vm868 = vcmp.eq.f32.partialorder %v740, %v817
        %vm869 = vcmp.eq.f32.partialorder %v741, %v819
        %vm870 = vcmp.eq.f32.partialorder %v742, %v821
        %vm871 = vcmp.eq.f32.partialorder %v743, %v823
        %vm872 = vcmp.eq.f32.partialorder %v744, %v825
        %vm873 = vcmp.eq.f32.partialorder %v745, %v827
        %vm874 = vcmp.eq.f32.partialorder %v746, %v829
        %vm875 = vcmp.eq.f32.partialorder %v747, %v831
        %vm876 = vcmp.eq.f32.partialorder %v748, %v833
        %vm877 = vcmp.eq.f32.partialorder %v749, %v835
        %vm878 = vcmp.eq.f32.partialorder %v750, %v837
        %vm879 = vcmp.eq.f32.partialorder %v751, %v839
        %vm880 = vcmp.eq.f32.partialorder %v752, %v841
        %vm881 = vcmp.eq.f32.partialorder %v753, %v843
        %vm882 = vcmp.eq.f32.partialorder %v754, %v845
        %vm883 = vcmp.eq.f32.partialorder %v755, %v847
        %vm884 = vcmp.eq.f32.partialorder %v756, %v849
        %vm885 = vcmp.eq.f32.partialorder %v757, %v851
        %vm886 = vcmp.eq.f32.partialorder %v758, %v853
        %vm887 = vcmp.eq.f32.partialorder %v759, %v855
        %v888 = vsel %vm856, %v368, 128
        %v889 = vsel %vm857, %v368, 128
        %v890 = vsel %vm858, %v368, 128
        %v891 = vsel %vm859, %v368, 128
        %v892 = vsel %vm860, %v368, 128
        %v893 = vsel %vm861, %v368, 128
        %v894 = vsel %vm862, %v368, 128
        %v895 = vsel %vm863, %v368, 128
        %v896 = vsel %vm864, %v368, 128
        %v897 = vsel %vm865, %v368, 128
        %v898 = vsel %vm866, %v368, 128
        %v899 = vsel %vm867, %v368, 128
        %v900 = vsel %vm868, %v368, 128
        %v901 = vsel %vm869, %v368, 128
        %v902 = vsel %vm870, %v368, 128
        %v903 = vsel %vm871, %v368, 128
        %v904 = vsel %vm872, %v368, 128
        %v905 = vsel %vm873, %v368, 128
        %v906 = vsel %vm874, %v368, 128
        %v907 = vsel %vm875, %v368, 128
        %v908 = vsel %vm876, %v368, 128
        %v909 = vsel %vm877, %v368, 128
        %v910 = vsel %vm878, %v368, 128
        %v911 = vsel %vm879, %v368, 128
        %v912 = vsel %vm880, %v368, 128
        %v913 = vsel %vm881, %v368, 128
        %v914 = vsel %vm882, %v368, 128
        %v915 = vsel %vm883, %v368, 128
        %v916 = vsel %vm884, %v368, 128
        %v917 = vsel %vm885, %v368, 128
        %v918 = vsel %vm886, %v368, 128
        %v919 = vsel %vm887, %v368, 128
        %v920 = vand.u32 %v888, 65535
        %v921 = vshra.s32 %v888, 16
        %v922 = vcvt.s32.f32 %v920
        %v923 = vcvt.s32.f32 %v921
        %924 = vmin.xlane.f32.xlu0 %v923
        %v925 = vpop.xlane.xlu0 %924
        %vm926 = vcmp.eq.f32.partialorder %v923, %v925
        %v927 = vsel %vm926, %v922, inf
        %928 = vmin.xlane.f32.xlu0 %v927
        %v929 = vpop.xlane.xlu0 %928
        %v930 = vcvt.f32.s32 %v929
        %v931 = vcvt.f32.s32 %v925
        %v932 = vshll.u32 %v931, 16
        %v933 = vadd.s32 %v932, %v930
        %v934 = vand.u32 %v889, 65535
        %v935 = vshra.s32 %v889, 16
        %v936 = vcvt.s32.f32 %v934
        %v937 = vcvt.s32.f32 %v935
        %938 = vmin.xlane.f32.xlu0 %v937
        %v939 = vpop.xlane.xlu0 %938
        %vm940 = vcmp.eq.f32.partialorder %v937, %v939
        %v941 = vsel %vm940, %v936, inf
        %942 = vmin.xlane.f32.xlu0 %v941
        %v943 = vpop.xlane.xlu0 %942
        %v944 = vcvt.f32.s32 %v943
        %v945 = vcvt.f32.s32 %v939
        %v946 = vshll.u32 %v945, 16
        %v947 = vadd.s32 %v946, %v944
        %v948 = vand.u32 %v890, 65535
        %v949 = vshra.s32 %v890, 16
        %v950 = vcvt.s32.f32 %v948
        %v951 = vcvt.s32.f32 %v949
        %952 = vmin.xlane.f32.xlu0 %v951
        %v953 = vpop.xlane.xlu0 %952
        %vm954 = vcmp.eq.f32.partialorder %v951, %v953
        %v955 = vsel %vm954, %v950, inf
        %956 = vmin.xlane.f32.xlu0 %v955
        %v957 = vpop.xlane.xlu0 %956
        %v958 = vcvt.f32.s32 %v957
        %v959 = vcvt.f32.s32 %v953
        %v960 = vshll.u32 %v959, 16
        %v961 = vadd.s32 %v960, %v958
        %v962 = vand.u32 %v891, 65535
        %v963 = vshra.s32 %v891, 16
        %v964 = vcvt.s32.f32 %v962
        %v965 = vcvt.s32.f32 %v963
        %966 = vmin.xlane.f32.xlu0 %v965
        %v967 = vpop.xlane.xlu0 %966
        %vm968 = vcmp.eq.f32.partialorder %v965, %v967
        %v969 = vsel %vm968, %v964, inf
        %970 = vmin.xlane.f32.xlu0 %v969
        %v971 = vpop.xlane.xlu0 %970
        %v972 = vcvt.f32.s32 %v971
        %v973 = vcvt.f32.s32 %v967
        %v974 = vshll.u32 %v973, 16
        %v975 = vadd.s32 %v974, %v972
        %v976 = vand.u32 %v892, 65535
        %v977 = vshra.s32 %v892, 16
        %v978 = vcvt.s32.f32 %v976
        %v979 = vcvt.s32.f32 %v977
        %980 = vmin.xlane.f32.xlu0 %v979
        %v981 = vpop.xlane.xlu0 %980
        %vm982 = vcmp.eq.f32.partialorder %v979, %v981
        %v983 = vsel %vm982, %v978, inf
        %984 = vmin.xlane.f32.xlu0 %v983
        %v985 = vpop.xlane.xlu0 %984
        %v986 = vcvt.f32.s32 %v985
        %v987 = vcvt.f32.s32 %v981
        %v988 = vshll.u32 %v987, 16
        %v989 = vadd.s32 %v988, %v986
        %v990 = vand.u32 %v893, 65535
        %v991 = vshra.s32 %v893, 16
        %v992 = vcvt.s32.f32 %v990
        %v993 = vcvt.s32.f32 %v991
        %994 = vmin.xlane.f32.xlu0 %v993
        %v995 = vpop.xlane.xlu0 %994
        %vm996 = vcmp.eq.f32.partialorder %v993, %v995
        %v997 = vsel %vm996, %v992, inf
        %998 = vmin.xlane.f32.xlu0 %v997
        %v999 = vpop.xlane.xlu0 %998
        %v1000 = vcvt.f32.s32 %v999
        %v1001 = vcvt.f32.s32 %v995
        %v1002 = vshll.u32 %v1001, 16
        %v1003 = vadd.s32 %v1002, %v1000
        %v1004 = vand.u32 %v894, 65535
        %v1005 = vshra.s32 %v894, 16
        %v1006 = vcvt.s32.f32 %v1004
        %v1007 = vcvt.s32.f32 %v1005
        %1008 = vmin.xlane.f32.xlu0 %v1007
        %v1009 = vpop.xlane.xlu0 %1008
        %vm1010 = vcmp.eq.f32.partialorder %v1007, %v1009
        %v1011 = vsel %vm1010, %v1006, inf
        %1012 = vmin.xlane.f32.xlu0 %v1011
        %v1013 = vpop.xlane.xlu0 %1012
        %v1014 = vcvt.f32.s32 %v1013
        %v1015 = vcvt.f32.s32 %v1009
        %v1016 = vshll.u32 %v1015, 16
        %v1017 = vadd.s32 %v1016, %v1014
        %v1018 = vand.u32 %v895, 65535
        %v1019 = vshra.s32 %v895, 16
        %v1020 = vcvt.s32.f32 %v1018
        %v1021 = vcvt.s32.f32 %v1019
        %1022 = vmin.xlane.f32.xlu0 %v1021
        %v1023 = vpop.xlane.xlu0 %1022
        %vm1024 = vcmp.eq.f32.partialorder %v1021, %v1023
        %v1025 = vsel %vm1024, %v1020, inf
        %1026 = vmin.xlane.f32.xlu0 %v1025
        %v1027 = vpop.xlane.xlu0 %1026
        %v1028 = vcvt.f32.s32 %v1027
        %v1029 = vcvt.f32.s32 %v1023
        %v1030 = vshll.u32 %v1029, 16
        %v1031 = vadd.s32 %v1030, %v1028
        %v1032 = vand.u32 %v896, 65535
        %v1033 = vshra.s32 %v896, 16
        %v1034 = vcvt.s32.f32 %v1032
        %v1035 = vcvt.s32.f32 %v1033
        %1036 = vmin.xlane.f32.xlu0 %v1035
        %v1037 = vpop.xlane.xlu0 %1036
        %vm1038 = vcmp.eq.f32.partialorder %v1035, %v1037
        %v1039 = vsel %vm1038, %v1034, inf
        %1040 = vmin.xlane.f32.xlu0 %v1039
        %v1041 = vpop.xlane.xlu0 %1040
        %v1042 = vcvt.f32.s32 %v1041
        %v1043 = vcvt.f32.s32 %v1037
        %v1044 = vshll.u32 %v1043, 16
        %v1045 = vadd.s32 %v1044, %v1042
        %v1046 = vand.u32 %v897, 65535
        %v1047 = vshra.s32 %v897, 16
        %v1048 = vcvt.s32.f32 %v1046
        %v1049 = vcvt.s32.f32 %v1047
        %1050 = vmin.xlane.f32.xlu0 %v1049
        %v1051 = vpop.xlane.xlu0 %1050
        %vm1052 = vcmp.eq.f32.partialorder %v1049, %v1051
        %v1053 = vsel %vm1052, %v1048, inf
        %1054 = vmin.xlane.f32.xlu0 %v1053
        %v1055 = vpop.xlane.xlu0 %1054
        %v1056 = vcvt.f32.s32 %v1055
        %v1057 = vcvt.f32.s32 %v1051
        %v1058 = vshll.u32 %v1057, 16
        %v1059 = vadd.s32 %v1058, %v1056
        %v1060 = vand.u32 %v898, 65535
        %v1061 = vshra.s32 %v898, 16
        %v1062 = vcvt.s32.f32 %v1060
        %v1063 = vcvt.s32.f32 %v1061
        %1064 = vmin.xlane.f32.xlu0 %v1063
        %v1065 = vpop.xlane.xlu0 %1064
        %vm1066 = vcmp.eq.f32.partialorder %v1063, %v1065
        %v1067 = vsel %vm1066, %v1062, inf
        %1068 = vmin.xlane.f32.xlu0 %v1067
        %v1069 = vpop.xlane.xlu0 %1068
        %v1070 = vcvt.f32.s32 %v1069
        %v1071 = vcvt.f32.s32 %v1065
        %v1072 = vshll.u32 %v1071, 16
        %v1073 = vadd.s32 %v1072, %v1070
        %v1074 = vand.u32 %v899, 65535
        %v1075 = vshra.s32 %v899, 16
        %v1076 = vcvt.s32.f32 %v1074
        %v1077 = vcvt.s32.f32 %v1075
        %1078 = vmin.xlane.f32.xlu0 %v1077
        %v1079 = vpop.xlane.xlu0 %1078
        %vm1080 = vcmp.eq.f32.partialorder %v1077, %v1079
        %v1081 = vsel %vm1080, %v1076, inf
        %1082 = vmin.xlane.f32.xlu0 %v1081
        %v1083 = vpop.xlane.xlu0 %1082
        %v1084 = vcvt.f32.s32 %v1083
        %v1085 = vcvt.f32.s32 %v1079
        %v1086 = vshll.u32 %v1085, 16
        %v1087 = vadd.s32 %v1086, %v1084
        %v1088 = vand.u32 %v900, 65535
        %v1089 = vshra.s32 %v900, 16
        %v1090 = vcvt.s32.f32 %v1088
        %v1091 = vcvt.s32.f32 %v1089
        %1092 = vmin.xlane.f32.xlu0 %v1091
        %v1093 = vpop.xlane.xlu0 %1092
        %vm1094 = vcmp.eq.f32.partialorder %v1091, %v1093
        %v1095 = vsel %vm1094, %v1090, inf
        %1096 = vmin.xlane.f32.xlu0 %v1095
        %v1097 = vpop.xlane.xlu0 %1096
        %v1098 = vcvt.f32.s32 %v1097
        %v1099 = vcvt.f32.s32 %v1093
        %v1100 = vshll.u32 %v1099, 16
        %v1101 = vadd.s32 %v1100, %v1098
        %v1102 = vand.u32 %v901, 65535
        %v1103 = vshra.s32 %v901, 16
        %v1104 = vcvt.s32.f32 %v1102
        %v1105 = vcvt.s32.f32 %v1103
        %1106 = vmin.xlane.f32.xlu0 %v1105
        %v1107 = vpop.xlane.xlu0 %1106
        %vm1108 = vcmp.eq.f32.partialorder %v1105, %v1107
        %v1109 = vsel %vm1108, %v1104, inf
        %1110 = vmin.xlane.f32.xlu0 %v1109
        %v1111 = vpop.xlane.xlu0 %1110
        %v1112 = vcvt.f32.s32 %v1111
        %v1113 = vcvt.f32.s32 %v1107
        %v1114 = vshll.u32 %v1113, 16
        %v1115 = vadd.s32 %v1114, %v1112
        %v1116 = vand.u32 %v902, 65535
        %v1117 = vshra.s32 %v902, 16
        %v1118 = vcvt.s32.f32 %v1116
        %v1119 = vcvt.s32.f32 %v1117
        %1120 = vmin.xlane.f32.xlu0 %v1119
        %v1121 = vpop.xlane.xlu0 %1120
        %vm1122 = vcmp.eq.f32.partialorder %v1119, %v1121
        %v1123 = vsel %vm1122, %v1118, inf
        %1124 = vmin.xlane.f32.xlu0 %v1123
        %v1125 = vpop.xlane.xlu0 %1124
        %v1126 = vcvt.f32.s32 %v1125
        %v1127 = vcvt.f32.s32 %v1121
        %v1128 = vshll.u32 %v1127, 16
        %v1129 = vadd.s32 %v1128, %v1126
        %v1130 = vand.u32 %v903, 65535
        %v1131 = vshra.s32 %v903, 16
        %v1132 = vcvt.s32.f32 %v1130
        %v1133 = vcvt.s32.f32 %v1131
        %1134 = vmin.xlane.f32.xlu0 %v1133
        %v1135 = vpop.xlane.xlu0 %1134
        %vm1136 = vcmp.eq.f32.partialorder %v1133, %v1135
        %v1137 = vsel %vm1136, %v1132, inf
        %1138 = vmin.xlane.f32.xlu0 %v1137
        %v1139 = vpop.xlane.xlu0 %1138
        %v1140 = vcvt.f32.s32 %v1139
        %v1141 = vcvt.f32.s32 %v1135
        %v1142 = vshll.u32 %v1141, 16
        %v1143 = vadd.s32 %v1142, %v1140
        %v1144 = vand.u32 %v904, 65535
        %v1145 = vshra.s32 %v904, 16
        %v1146 = vcvt.s32.f32 %v1144
        %v1147 = vcvt.s32.f32 %v1145
        %1148 = vmin.xlane.f32.xlu0 %v1147
        %v1149 = vpop.xlane.xlu0 %1148
        %vm1150 = vcmp.eq.f32.partialorder %v1147, %v1149
        %v1151 = vsel %vm1150, %v1146, inf
        %1152 = vmin.xlane.f32.xlu0 %v1151
        %v1153 = vpop.xlane.xlu0 %1152
        %v1154 = vcvt.f32.s32 %v1153
        %v1155 = vcvt.f32.s32 %v1149
        %v1156 = vshll.u32 %v1155, 16
        %v1157 = vadd.s32 %v1156, %v1154
        %v1158 = vand.u32 %v905, 65535
        %v1159 = vshra.s32 %v905, 16
        %v1160 = vcvt.s32.f32 %v1158
        %v1161 = vcvt.s32.f32 %v1159
        %1162 = vmin.xlane.f32.xlu0 %v1161
        %v1163 = vpop.xlane.xlu0 %1162
        %vm1164 = vcmp.eq.f32.partialorder %v1161, %v1163
        %v1165 = vsel %vm1164, %v1160, inf
        %1166 = vmin.xlane.f32.xlu0 %v1165
        %v1167 = vpop.xlane.xlu0 %1166
        %v1168 = vcvt.f32.s32 %v1167
        %v1169 = vcvt.f32.s32 %v1163
        %v1170 = vshll.u32 %v1169, 16
        %v1171 = vadd.s32 %v1170, %v1168
        %v1172 = vand.u32 %v906, 65535
        %v1173 = vshra.s32 %v906, 16
        %v1174 = vcvt.s32.f32 %v1172
        %v1175 = vcvt.s32.f32 %v1173
        %1176 = vmin.xlane.f32.xlu0 %v1175
        %v1177 = vpop.xlane.xlu0 %1176
        %vm1178 = vcmp.eq.f32.partialorder %v1175, %v1177
        %v1179 = vsel %vm1178, %v1174, inf
        %1180 = vmin.xlane.f32.xlu0 %v1179
        %v1181 = vpop.xlane.xlu0 %1180
        %v1182 = vcvt.f32.s32 %v1181
        %v1183 = vcvt.f32.s32 %v1177
        %v1184 = vshll.u32 %v1183, 16
        %v1185 = vadd.s32 %v1184, %v1182
        %v1186 = vand.u32 %v907, 65535
        %v1187 = vshra.s32 %v907, 16
        %v1188 = vcvt.s32.f32 %v1186
        %v1189 = vcvt.s32.f32 %v1187
        %1190 = vmin.xlane.f32.xlu0 %v1189
        %v1191 = vpop.xlane.xlu0 %1190
        %vm1192 = vcmp.eq.f32.partialorder %v1189, %v1191
        %v1193 = vsel %vm1192, %v1188, inf
        %1194 = vmin.xlane.f32.xlu0 %v1193
        %v1195 = vpop.xlane.xlu0 %1194
        %v1196 = vcvt.f32.s32 %v1195
        %v1197 = vcvt.f32.s32 %v1191
        %v1198 = vshll.u32 %v1197, 16
        %v1199 = vadd.s32 %v1198, %v1196
        %v1200 = vand.u32 %v908, 65535
        %v1201 = vshra.s32 %v908, 16
        %v1202 = vcvt.s32.f32 %v1200
        %v1203 = vcvt.s32.f32 %v1201
        %1204 = vmin.xlane.f32.xlu0 %v1203
        %v1205 = vpop.xlane.xlu0 %1204
        %vm1206 = vcmp.eq.f32.partialorder %v1203, %v1205
        %v1207 = vsel %vm1206, %v1202, inf
        %1208 = vmin.xlane.f32.xlu0 %v1207
        %v1209 = vpop.xlane.xlu0 %1208
        %v1210 = vcvt.f32.s32 %v1209
        %v1211 = vcvt.f32.s32 %v1205
        %v1212 = vshll.u32 %v1211, 16
        %v1213 = vadd.s32 %v1212, %v1210
        %v1214 = vand.u32 %v909, 65535
        %v1215 = vshra.s32 %v909, 16
        %v1216 = vcvt.s32.f32 %v1214
        %v1217 = vcvt.s32.f32 %v1215
        %1218 = vmin.xlane.f32.xlu0 %v1217
        %v1219 = vpop.xlane.xlu0 %1218
        %vm1220 = vcmp.eq.f32.partialorder %v1217, %v1219
        %v1221 = vsel %vm1220, %v1216, inf
        %1222 = vmin.xlane.f32.xlu0 %v1221
        %v1223 = vpop.xlane.xlu0 %1222
        %v1224 = vcvt.f32.s32 %v1223
        %v1225 = vcvt.f32.s32 %v1219
        %v1226 = vshll.u32 %v1225, 16
        %v1227 = vadd.s32 %v1226, %v1224
        %v1228 = vand.u32 %v910, 65535
        %v1229 = vshra.s32 %v910, 16
        %v1230 = vcvt.s32.f32 %v1228
        %v1231 = vcvt.s32.f32 %v1229
        %1232 = vmin.xlane.f32.xlu0 %v1231
        %v1233 = vpop.xlane.xlu0 %1232
        %vm1234 = vcmp.eq.f32.partialorder %v1231, %v1233
        %v1235 = vsel %vm1234, %v1230, inf
        %1236 = vmin.xlane.f32.xlu0 %v1235
        %v1237 = vpop.xlane.xlu0 %1236
        %v1238 = vcvt.f32.s32 %v1237
        %v1239 = vcvt.f32.s32 %v1233
        %v1240 = vshll.u32 %v1239, 16
        %v1241 = vadd.s32 %v1240, %v1238
        %v1242 = vand.u32 %v911, 65535
        %v1243 = vshra.s32 %v911, 16
        %v1244 = vcvt.s32.f32 %v1242
        %v1245 = vcvt.s32.f32 %v1243
        %1246 = vmin.xlane.f32.xlu0 %v1245
        %v1247 = vpop.xlane.xlu0 %1246
        %vm1248 = vcmp.eq.f32.partialorder %v1245, %v1247
        %v1249 = vsel %vm1248, %v1244, inf
        %1250 = vmin.xlane.f32.xlu0 %v1249
        %v1251 = vpop.xlane.xlu0 %1250
        %v1252 = vcvt.f32.s32 %v1251
        %v1253 = vcvt.f32.s32 %v1247
        %v1254 = vshll.u32 %v1253, 16
        %v1255 = vadd.s32 %v1254, %v1252
        %v1256 = vand.u32 %v912, 65535
        %v1257 = vshra.s32 %v912, 16
        %v1258 = vcvt.s32.f32 %v1256
        %v1259 = vcvt.s32.f32 %v1257
        %1260 = vmin.xlane.f32.xlu0 %v1259
        %v1261 = vpop.xlane.xlu0 %1260
        %vm1262 = vcmp.eq.f32.partialorder %v1259, %v1261
        %v1263 = vsel %vm1262, %v1258, inf
        %1264 = vmin.xlane.f32.xlu0 %v1263
        %v1265 = vpop.xlane.xlu0 %1264
        %v1266 = vcvt.f32.s32 %v1265
        %v1267 = vcvt.f32.s32 %v1261
        %v1268 = vshll.u32 %v1267, 16
        %v1269 = vadd.s32 %v1268, %v1266
        %v1270 = vand.u32 %v913, 65535
        %v1271 = vshra.s32 %v913, 16
        %v1272 = vcvt.s32.f32 %v1270
        %v1273 = vcvt.s32.f32 %v1271
        %1274 = vmin.xlane.f32.xlu0 %v1273
        %v1275 = vpop.xlane.xlu0 %1274
        %vm1276 = vcmp.eq.f32.partialorder %v1273, %v1275
        %v1277 = vsel %vm1276, %v1272, inf
        %1278 = vmin.xlane.f32.xlu0 %v1277
        %v1279 = vpop.xlane.xlu0 %1278
        %v1280 = vcvt.f32.s32 %v1279
        %v1281 = vcvt.f32.s32 %v1275
        %v1282 = vshll.u32 %v1281, 16
        %v1283 = vadd.s32 %v1282, %v1280
        %v1284 = vand.u32 %v914, 65535
        %v1285 = vshra.s32 %v914, 16
        %v1286 = vcvt.s32.f32 %v1284
        %v1287 = vcvt.s32.f32 %v1285
        %1288 = vmin.xlane.f32.xlu0 %v1287
        %v1289 = vpop.xlane.xlu0 %1288
        %vm1290 = vcmp.eq.f32.partialorder %v1287, %v1289
        %v1291 = vsel %vm1290, %v1286, inf
        %1292 = vmin.xlane.f32.xlu0 %v1291
        %v1293 = vpop.xlane.xlu0 %1292
        %v1294 = vcvt.f32.s32 %v1293
        %v1295 = vcvt.f32.s32 %v1289
        %v1296 = vshll.u32 %v1295, 16
        %v1297 = vadd.s32 %v1296, %v1294
        %v1298 = vand.u32 %v915, 65535
        %v1299 = vshra.s32 %v915, 16
        %v1300 = vcvt.s32.f32 %v1298
        %v1301 = vcvt.s32.f32 %v1299
        %1302 = vmin.xlane.f32.xlu0 %v1301
        %v1303 = vpop.xlane.xlu0 %1302
        %vm1304 = vcmp.eq.f32.partialorder %v1301, %v1303
        %v1305 = vsel %vm1304, %v1300, inf
        %1306 = vmin.xlane.f32.xlu0 %v1305
        %v1307 = vpop.xlane.xlu0 %1306
        %v1308 = vcvt.f32.s32 %v1307
        %v1309 = vcvt.f32.s32 %v1303
        %v1310 = vshll.u32 %v1309, 16
        %v1311 = vadd.s32 %v1310, %v1308
        %v1312 = vand.u32 %v916, 65535
        %v1313 = vshra.s32 %v916, 16
        %v1314 = vcvt.s32.f32 %v1312
        %v1315 = vcvt.s32.f32 %v1313
        %1316 = vmin.xlane.f32.xlu0 %v1315
        %v1317 = vpop.xlane.xlu0 %1316
        %vm1318 = vcmp.eq.f32.partialorder %v1315, %v1317
        %v1319 = vsel %vm1318, %v1314, inf
        %1320 = vmin.xlane.f32.xlu0 %v1319
        %v1321 = vpop.xlane.xlu0 %1320
        %v1322 = vcvt.f32.s32 %v1321
        %v1323 = vcvt.f32.s32 %v1317
        %v1324 = vshll.u32 %v1323, 16
        %v1325 = vadd.s32 %v1324, %v1322
        %v1326 = vand.u32 %v917, 65535
        %v1327 = vshra.s32 %v917, 16
        %v1328 = vcvt.s32.f32 %v1326
        %v1329 = vcvt.s32.f32 %v1327
        %1330 = vmin.xlane.f32.xlu0 %v1329
        %v1331 = vpop.xlane.xlu0 %1330
        %vm1332 = vcmp.eq.f32.partialorder %v1329, %v1331
        %v1333 = vsel %vm1332, %v1328, inf
        %1334 = vmin.xlane.f32.xlu0 %v1333
        %v1335 = vpop.xlane.xlu0 %1334
        %v1336 = vcvt.f32.s32 %v1335
        %v1337 = vcvt.f32.s32 %v1331
        %v1338 = vshll.u32 %v1337, 16
        %v1339 = vadd.s32 %v1338, %v1336
        %v1340 = vand.u32 %v918, 65535
        %v1341 = vshra.s32 %v918, 16
        %v1342 = vcvt.s32.f32 %v1340
        %v1343 = vcvt.s32.f32 %v1341
        %1344 = vmin.xlane.f32.xlu0 %v1343
        %v1345 = vpop.xlane.xlu0 %1344
        %vm1346 = vcmp.eq.f32.partialorder %v1343, %v1345
        %v1347 = vsel %vm1346, %v1342, inf
        %1348 = vmin.xlane.f32.xlu0 %v1347
        %v1349 = vpop.xlane.xlu0 %1348
        %v1350 = vcvt.f32.s32 %v1349
        %v1351 = vcvt.f32.s32 %v1345
        %v1352 = vshll.u32 %v1351, 16
        %v1353 = vadd.s32 %v1352, %v1350
        %v1354 = vand.u32 %v919, 65535
        %v1355 = vshra.s32 %v919, 16
        %v1356 = vcvt.s32.f32 %v1354
        %v1357 = vcvt.s32.f32 %v1355
        %1358 = vmin.xlane.f32.xlu0 %v1357
        %v1359 = vpop.xlane.xlu0 %1358
        %vm1360 = vcmp.eq.f32.partialorder %v1357, %v1359
        %v1361 = vsel %vm1360, %v1356, inf
        %1362 = vmin.xlane.f32.xlu0 %v1361
        %v1363 = vpop.xlane.xlu0 %1362
        %v1364 = vcvt.f32.s32 %v1363
        %v1365 = vcvt.f32.s32 %v1359
        %v1366 = vshll.u32 %v1365, 16
        %v1367 = vadd.s32 %v1366, %v1364
        %vm1368 = vcmp.eq.s32.totalorder %v368, %v933
        %vm1369 = vcmp.eq.s32.totalorder %v368, %v947
        %vm1370 = vcmp.eq.s32.totalorder %v368, %v961
        %vm1371 = vcmp.eq.s32.totalorder %v368, %v975
        %vm1372 = vcmp.eq.s32.totalorder %v368, %v989
        %vm1373 = vcmp.eq.s32.totalorder %v368, %v1003
        %vm1374 = vcmp.eq.s32.totalorder %v368, %v1017
        %vm1375 = vcmp.eq.s32.totalorder %v368, %v1031
        %vm1376 = vcmp.eq.s32.totalorder %v368, %v1045
        %vm1377 = vcmp.eq.s32.totalorder %v368, %v1059
        %vm1378 = vcmp.eq.s32.totalorder %v368, %v1073
        %vm1379 = vcmp.eq.s32.totalorder %v368, %v1087
        %vm1380 = vcmp.eq.s32.totalorder %v368, %v1101
        %vm1381 = vcmp.eq.s32.totalorder %v368, %v1115
        %vm1382 = vcmp.eq.s32.totalorder %v368, %v1129
        %vm1383 = vcmp.eq.s32.totalorder %v368, %v1143
        %vm1384 = vcmp.eq.s32.totalorder %v368, %v1157
        %vm1385 = vcmp.eq.s32.totalorder %v368, %v1171
        %vm1386 = vcmp.eq.s32.totalorder %v368, %v1185
        %vm1387 = vcmp.eq.s32.totalorder %v368, %v1199
        %vm1388 = vcmp.eq.s32.totalorder %v368, %v1213
        %vm1389 = vcmp.eq.s32.totalorder %v368, %v1227
        %vm1390 = vcmp.eq.s32.totalorder %v368, %v1241
        %vm1391 = vcmp.eq.s32.totalorder %v368, %v1255
        %vm1392 = vcmp.eq.s32.totalorder %v368, %v1269
        %vm1393 = vcmp.eq.s32.totalorder %v368, %v1283
        %vm1394 = vcmp.eq.s32.totalorder %v368, %v1297
        %vm1395 = vcmp.eq.s32.totalorder %v368, %v1311
        %vm1396 = vcmp.eq.s32.totalorder %v368, %v1325
        %vm1397 = vcmp.eq.s32.totalorder %v368, %v1339
        %vm1398 = vcmp.eq.s32.totalorder %v368, %v1353
        %vm1399 = vcmp.eq.s32.totalorder %v368, %v1367
        %v1400 = vsel %vm1368, 1, 0
        %v1401 = vsel %vm1369, 1, 0
        %v1402 = vsel %vm1370, 1, 0
        %v1403 = vsel %vm1371, 1, 0
        %v1404 = vsel %vm1372, 1, 0
        %v1405 = vsel %vm1373, 1, 0
        %v1406 = vsel %vm1374, 1, 0
        %v1407 = vsel %vm1375, 1, 0
        %v1408 = vsel %vm1376, 1, 0
        %v1409 = vsel %vm1377, 1, 0
        %v1410 = vsel %vm1378, 1, 0
        %v1411 = vsel %vm1379, 1, 0
        %v1412 = vsel %vm1380, 1, 0
        %v1413 = vsel %vm1381, 1, 0
        %v1414 = vsel %vm1382, 1, 0
        %v1415 = vsel %vm1383, 1, 0
        %v1416 = vsel %vm1384, 1, 0
        %v1417 = vsel %vm1385, 1, 0
        %v1418 = vsel %vm1386, 1, 0
        %v1419 = vsel %vm1387, 1, 0
        %v1420 = vsel %vm1388, 1, 0
        %v1421 = vsel %vm1389, 1, 0
        %v1422 = vsel %vm1390, 1, 0
        %v1423 = vsel %vm1391, 1, 0
        %v1424 = vsel %vm1392, 1, 0
        %v1425 = vsel %vm1393, 1, 0
        %v1426 = vsel %vm1394, 1, 0
        %v1427 = vsel %vm1395, 1, 0
        %v1428 = vsel %vm1396, 1, 0
        %v1429 = vsel %vm1397, 1, 0
        %v1430 = vsel %vm1398, 1, 0
        %v1431 = vsel %vm1399, 1, 0
        %v1432 = vcvt.s32.f32 %v1400
        %v1433 = vcvt.s32.f32 %v1401
        %v1434 = vcvt.s32.f32 %v1402
        %v1435 = vcvt.s32.f32 %v1403
        %v1436 = vcvt.s32.f32 %v1404
        %v1437 = vcvt.s32.f32 %v1405
        %v1438 = vcvt.s32.f32 %v1406
        %v1439 = vcvt.s32.f32 %v1407
        %v1440 = vcvt.s32.f32 %v1408
        %v1441 = vcvt.s32.f32 %v1409
        %v1442 = vcvt.s32.f32 %v1410
        %v1443 = vcvt.s32.f32 %v1411
        %v1444 = vcvt.s32.f32 %v1412
        %v1445 = vcvt.s32.f32 %v1413
        %v1446 = vcvt.s32.f32 %v1414
        %v1447 = vcvt.s32.f32 %v1415
        %v1448 = vcvt.s32.f32 %v1416
        %v1449 = vcvt.s32.f32 %v1417
        %v1450 = vcvt.s32.f32 %v1418
        %v1451 = vcvt.s32.f32 %v1419
        %v1452 = vcvt.s32.f32 %v1420
        %v1453 = vcvt.s32.f32 %v1421
        %v1454 = vcvt.s32.f32 %v1422
        %v1455 = vcvt.s32.f32 %v1423
        %v1456 = vcvt.s32.f32 %v1424
        %v1457 = vcvt.s32.f32 %v1425
        %v1458 = vcvt.s32.f32 %v1426
        %v1459 = vcvt.s32.f32 %v1427
        %v1460 = vcvt.s32.f32 %v1428
        %v1461 = vcvt.s32.f32 %v1429
        %v1462 = vcvt.s32.f32 %v1430
        %v1463 = vcvt.s32.f32 %v1431
        %1464 = vmatprep.subr.mxu0 0.0
        %1465 = vmatpush1.msra.mxu0 %v333
        %1466 = vmatprep.subr.mxu0 0.0
        %1467 = vmatpush1.msra.mxu0 %v332
        %1468 = vmatprep.subr.mxu0 0.0
        %1469 = vmatpush1.msra.mxu0 %v331
        %1470 = vmatprep.subr.mxu0 0.0
        %1471 = vmatpush1.msra.mxu0 %v330
        %1472 = vmatprep.subr.mxu0 0.0
        %1473 = vmatpush1.msra.mxu0 %v329
        %1474 = vmatprep.subr.mxu0 0.0
        %1475 = vmatpush1.msra.mxu0 %v328
        %1476 = vmatprep.subr.mxu0 0.0
        %1477 = vmatpush1.msra.mxu0 %v327
        %1478 = vmatprep.subr.mxu0 0.0
        %1479 = vmatpush1.msra.mxu0 %v326
        %1480 = vmatprep.subr.mxu0 0.0
        %1481 = vmatpush1.msra.mxu0 %v325
        %1482 = vmatprep.subr.mxu0 0.0
        %1483 = vmatpush1.msra.mxu0 %v324
        %1484 = vmatprep.subr.mxu0 0.0
        %1485 = vmatpush1.msra.mxu0 %v323
        %1486 = vmatprep.subr.mxu0 0.0
        %1487 = vmatpush1.msra.mxu0 %v322
        %1488 = vmatprep.subr.mxu0 0.0
        %1489 = vmatpush1.msra.mxu0 %v321
        %1490 = vmatprep.subr.mxu0 0.0
        %1491 = vmatpush1.msra.mxu0 %v320
        %1492 = vmatprep.subr.mxu0 0.0
        %1493 = vmatpush1.msra.mxu0 %v319
        %1494 = vmatprep.subr.mxu0 0.0
        %1495 = vmatpush1.msra.mxu0 %v318
        %1496 = vmatprep.subr.mxu0 0.0
        %1497 = vmatpush2.msra.mxu0 0.0
        %1498 = vmatprep.subr.mxu0 0.0
        %1499 = vmatpush2.msra.mxu0 0.0
        %1500 = vmatprep.subr.mxu0 0.0
        %1501 = vmatpush2.msra.mxu0 0.0
        %1502 = vmatprep.subr.mxu0 0.0
        %1503 = vmatpush2.msra.mxu0 0.0
        %1504 = vmatprep.subr.mxu0 0.0
        %1505 = vmatpush2.msra.mxu0 0.0
        %1506 = vmatprep.subr.mxu0 0.0
        %1507 = vmatpush2.msra.mxu0 0.0
        %1508 = vmatprep.subr.mxu0 0.0
        %1509 = vmatpush2.msra.mxu0 0.0
        %1510 = vmatprep.subr.mxu0 0.0
        %1511 = vmatpush2.msra.mxu0 0.0
        %1512 = vmatprep.subr.mxu0 0.0
        %1513 = vmatpush2.msra.mxu0 0.0
        %1514 = vmatprep.subr.mxu0 0.0
        %1515 = vmatpush2.msra.mxu0 0.0
        %1516 = vmatprep.subr.mxu0 0.0
        %1517 = vmatpush2.msra.mxu0 0.0
        %1518 = vmatprep.subr.mxu0 0.0
        %1519 = vmatpush2.msra.mxu0 0.0
        %1520 = vmatprep.subr.mxu0 0.0
        %1521 = vmatpush2.msra.mxu0 0.0
        %1522 = vmatprep.subr.mxu0 0.0
        %1523 = vmatpush2.msra.mxu0 0.0
        %1524 = vmatprep.subr.mxu0 0.0
        %1525 = vmatpush2.msra.mxu0 0.0
        %1526 = vmatprep.subr.mxu0 0.0
        %1527 = vmatpush2.msra.mxu0 0.0
        %1528 = vmatprep.mubr.f32.mxu0 0.0
        %1529 = vmatmul.mubr.f32.gmra.mxu0 %v1432
        %v1530 = vpop.f32.mrf.mxu0
        %v1531 = vadd.f32 0.0, %v1530
        %v1532 = vpop.f32.mrf.mxu0
        %1533 = vmatprep.mubr.f32.mxu0 0.0
        %1534 = vmatmul.mubr.f32.gmra.mxu0 %v1433
        %v1535 = vpop.f32.mrf.mxu0
        %v1536 = vadd.f32 0.0, %v1535
        %v1537 = vpop.f32.mrf.mxu0
        %1538 = vmatprep.mubr.f32.mxu0 0.0
        %1539 = vmatmul.mubr.f32.gmra.mxu0 %v1434
        %v1540 = vpop.f32.mrf.mxu0
        %v1541 = vadd.f32 0.0, %v1540
        %v1542 = vpop.f32.mrf.mxu0
        %1543 = vmatprep.mubr.f32.mxu0 0.0
        %1544 = vmatmul.mubr.f32.gmra.mxu0 %v1435
        %v1545 = vpop.f32.mrf.mxu0
        %v1546 = vadd.f32 0.0, %v1545
        %v1547 = vpop.f32.mrf.mxu0
        %1548 = vmatprep.mubr.f32.mxu0 0.0
        %1549 = vmatmul.mubr.f32.gmra.mxu0 %v1436
        %v1550 = vpop.f32.mrf.mxu0
        %v1551 = vadd.f32 0.0, %v1550
        %v1552 = vpop.f32.mrf.mxu0
        %1553 = vmatprep.mubr.f32.mxu0 0.0
        %1554 = vmatmul.mubr.f32.gmra.mxu0 %v1437
        %v1555 = vpop.f32.mrf.mxu0
        %v1556 = vadd.f32 0.0, %v1555
        %v1557 = vpop.f32.mrf.mxu0
        %1558 = vmatprep.mubr.f32.mxu0 0.0
        %1559 = vmatmul.mubr.f32.gmra.mxu0 %v1438
        %v1560 = vpop.f32.mrf.mxu0
        %v1561 = vadd.f32 0.0, %v1560
        %v1562 = vpop.f32.mrf.mxu0
        %1563 = vmatprep.mubr.f32.mxu0 0.0
        %1564 = vmatmul.mubr.f32.gmra.mxu0 %v1439
        %v1565 = vpop.f32.mrf.mxu0
        %v1566 = vadd.f32 0.0, %v1565
        %v1567 = vpop.f32.mrf.mxu0
        %1568 = vmatprep.mubr.f32.mxu0 0.0
        %1569 = vmatmul.mubr.f32.gmra.mxu0 %v1440
        %v1570 = vpop.f32.mrf.mxu0
        %v1571 = vadd.f32 0.0, %v1570
        %v1572 = vpop.f32.mrf.mxu0
        %1573 = vmatprep.mubr.f32.mxu0 0.0
        %1574 = vmatmul.mubr.f32.gmra.mxu0 %v1441
        %v1575 = vpop.f32.mrf.mxu0
        %v1576 = vadd.f32 0.0, %v1575
        %v1577 = vpop.f32.mrf.mxu0
        %1578 = vmatprep.mubr.f32.mxu0 0.0
        %1579 = vmatmul.mubr.f32.gmra.mxu0 %v1442
        %v1580 = vpop.f32.mrf.mxu0
        %v1581 = vadd.f32 0.0, %v1580
        %v1582 = vpop.f32.mrf.mxu0
        %1583 = vmatprep.mubr.f32.mxu0 0.0
        %1584 = vmatmul.mubr.f32.gmra.mxu0 %v1443
        %v1585 = vpop.f32.mrf.mxu0
        %v1586 = vadd.f32 0.0, %v1585
        %v1587 = vpop.f32.mrf.mxu0
        %1588 = vmatprep.mubr.f32.mxu0 0.0
        %1589 = vmatmul.mubr.f32.gmra.mxu0 %v1444
        %v1590 = vpop.f32.mrf.mxu0
        %v1591 = vadd.f32 0.0, %v1590
        %v1592 = vpop.f32.mrf.mxu0
        %1593 = vmatprep.mubr.f32.mxu0 0.0
        %1594 = vmatmul.mubr.f32.gmra.mxu0 %v1445
        %v1595 = vpop.f32.mrf.mxu0
        %v1596 = vadd.f32 0.0, %v1595
        %v1597 = vpop.f32.mrf.mxu0
        %1598 = vmatprep.mubr.f32.mxu0 0.0
        %1599 = vmatmul.mubr.f32.gmra.mxu0 %v1446
        %v1600 = vpop.f32.mrf.mxu0
        %v1601 = vadd.f32 0.0, %v1600
        %v1602 = vpop.f32.mrf.mxu0
        %1603 = vmatprep.mubr.f32.mxu0 0.0
        %1604 = vmatmul.mubr.f32.gmra.mxu0 %v1447
        %v1605 = vpop.f32.mrf.mxu0
        %v1606 = vadd.f32 0.0, %v1605
        %v1607 = vpop.f32.mrf.mxu0
        %1608 = vmatprep.mubr.f32.mxu0 0.0
        %1609 = vmatmul.mubr.f32.gmra.mxu0 %v1448
        %v1610 = vpop.f32.mrf.mxu0
        %v1611 = vadd.f32 0.0, %v1610
        %v1612 = vpop.f32.mrf.mxu0
        %1613 = vmatprep.mubr.f32.mxu0 0.0
        %1614 = vmatmul.mubr.f32.gmra.mxu0 %v1449
        %v1615 = vpop.f32.mrf.mxu0
        %v1616 = vadd.f32 0.0, %v1615
        %v1617 = vpop.f32.mrf.mxu0
        %1618 = vmatprep.mubr.f32.mxu0 0.0
        %1619 = vmatmul.mubr.f32.gmra.mxu0 %v1450
        %v1620 = vpop.f32.mrf.mxu0
        %v1621 = vadd.f32 0.0, %v1620
        %v1622 = vpop.f32.mrf.mxu0
        %1623 = vmatprep.mubr.f32.mxu0 0.0
        %1624 = vmatmul.mubr.f32.gmra.mxu0 %v1451
        %v1625 = vpop.f32.mrf.mxu0
        %v1626 = vadd.f32 0.0, %v1625
        %v1627 = vpop.f32.mrf.mxu0
        %1628 = vmatprep.mubr.f32.mxu0 0.0
        %1629 = vmatmul.mubr.f32.gmra.mxu0 %v1452
        %v1630 = vpop.f32.mrf.mxu0
        %v1631 = vadd.f32 0.0, %v1630
        %v1632 = vpop.f32.mrf.mxu0
        %1633 = vmatprep.mubr.f32.mxu0 0.0
        %1634 = vmatmul.mubr.f32.gmra.mxu0 %v1453
        %v1635 = vpop.f32.mrf.mxu0
        %v1636 = vadd.f32 0.0, %v1635
        %v1637 = vpop.f32.mrf.mxu0
        %1638 = vmatprep.mubr.f32.mxu0 0.0
        %1639 = vmatmul.mubr.f32.gmra.mxu0 %v1454
        %v1640 = vpop.f32.mrf.mxu0
        %v1641 = vadd.f32 0.0, %v1640
        %v1642 = vpop.f32.mrf.mxu0
        %1643 = vmatprep.mubr.f32.mxu0 0.0
        %1644 = vmatmul.mubr.f32.gmra.mxu0 %v1455
        %v1645 = vpop.f32.mrf.mxu0
        %v1646 = vadd.f32 0.0, %v1645
        %v1647 = vpop.f32.mrf.mxu0
        %1648 = vmatprep.mubr.f32.mxu0 0.0
        %1649 = vmatmul.mubr.f32.gmra.mxu0 %v1456
        %v1650 = vpop.f32.mrf.mxu0
        %v1651 = vadd.f32 0.0, %v1650
        %v1652 = vpop.f32.mrf.mxu0
        %1653 = vmatprep.mubr.f32.mxu0 0.0
        %1654 = vmatmul.mubr.f32.gmra.mxu0 %v1457
        %v1655 = vpop.f32.mrf.mxu0
        %v1656 = vadd.f32 0.0, %v1655
        %v1657 = vpop.f32.mrf.mxu0
        %1658 = vmatprep.mubr.f32.mxu0 0.0
        %1659 = vmatmul.mubr.f32.gmra.mxu0 %v1458
        %v1660 = vpop.f32.mrf.mxu0
        %v1661 = vadd.f32 0.0, %v1660
        %v1662 = vpop.f32.mrf.mxu0
        %1663 = vmatprep.mubr.f32.mxu0 0.0
        %1664 = vmatmul.mubr.f32.gmra.mxu0 %v1459
        %v1665 = vpop.f32.mrf.mxu0
        %v1666 = vadd.f32 0.0, %v1665
        %v1667 = vpop.f32.mrf.mxu0
        %1668 = vmatprep.mubr.f32.mxu0 0.0
        %1669 = vmatmul.mubr.f32.gmra.mxu0 %v1460
        %v1670 = vpop.f32.mrf.mxu0
        %v1671 = vadd.f32 0.0, %v1670
        %v1672 = vpop.f32.mrf.mxu0
        %1673 = vmatprep.mubr.f32.mxu0 0.0
        %1674 = vmatmul.mubr.f32.gmra.mxu0 %v1461
        %v1675 = vpop.f32.mrf.mxu0
        %v1676 = vadd.f32 0.0, %v1675
        %v1677 = vpop.f32.mrf.mxu0
        %1678 = vmatprep.mubr.f32.mxu0 0.0
        %1679 = vmatmul.mubr.f32.gmra.mxu0 %v1462
        %v1680 = vpop.f32.mrf.mxu0
        %v1681 = vadd.f32 0.0, %v1680
        %v1682 = vpop.f32.mrf.mxu0
        %1683 = vmatprep.mubr.f32.mxu0 0.0
        %1684 = vmatmul.mubr.f32.gmra.mxu0 %v1463
        %v1685 = vpop.f32.mrf.mxu0
        %v1686 = vadd.f32 0.0, %v1685
        %v1687 = vpop.f32.mrf.mxu0
        %1688 = vdwg.mxu0
        %v1689 = vsub.f32 %v286, %v1531
        %v1690 = vsub.f32 %v287, %v1536
        %v1691 = vsub.f32 %v288, %v1541
        %v1692 = vsub.f32 %v289, %v1546
        %v1693 = vsub.f32 %v290, %v1551
        %v1694 = vsub.f32 %v291, %v1556
        %v1695 = vsub.f32 %v292, %v1561
        %v1696 = vsub.f32 %v293, %v1566
        %v1697 = vsub.f32 %v294, %v1571
        %v1698 = vsub.f32 %v295, %v1576
        %v1699 = vsub.f32 %v296, %v1581
        %v1700 = vsub.f32 %v297, %v1586
        %v1701 = vsub.f32 %v298, %v1591
        %v1702 = vsub.f32 %v299, %v1596
        %v1703 = vsub.f32 %v300, %v1601
        %v1704 = vsub.f32 %v301, %v1606
        %v1705 = vsub.f32 %v302, %v1611
        %v1706 = vsub.f32 %v303, %v1616
        %v1707 = vsub.f32 %v304, %v1621
        %v1708 = vsub.f32 %v305, %v1626
        %v1709 = vsub.f32 %v306, %v1631
        %v1710 = vsub.f32 %v307, %v1636
        %v1711 = vsub.f32 %v308, %v1641
        %v1712 = vsub.f32 %v309, %v1646
        %v1713 = vsub.f32 %v310, %v1651
        %v1714 = vsub.f32 %v311, %v1656
        %v1715 = vsub.f32 %v312, %v1661
        %v1716 = vsub.f32 %v313, %v1666
        %v1717 = vsub.f32 %v314, %v1671
        %v1718 = vsub.f32 %v315, %v1676
        %v1719 = vsub.f32 %v316, %v1681
        %v1720 = vsub.f32 %v317, %v1686
        %v1721 = vmul.f32 %v1689, %v1689
        %v1722 = vmul.f32 %v1690, %v1690
        %v1723 = vmul.f32 %v1691, %v1691
        %v1724 = vmul.f32 %v1692, %v1692
        %v1725 = vmul.f32 %v1693, %v1693
        %v1726 = vmul.f32 %v1694, %v1694
        %v1727 = vmul.f32 %v1695, %v1695
        %v1728 = vmul.f32 %v1696, %v1696
        %v1729 = vmul.f32 %v1697, %v1697
        %v1730 = vmul.f32 %v1698, %v1698
        %v1731 = vmul.f32 %v1699, %v1699
        %v1732 = vmul.f32 %v1700, %v1700
        %v1733 = vmul.f32 %v1701, %v1701
        %v1734 = vmul.f32 %v1702, %v1702
        %v1735 = vmul.f32 %v1703, %v1703
        %v1736 = vmul.f32 %v1704, %v1704
        %v1737 = vmul.f32 %v1705, %v1705
        %v1738 = vmul.f32 %v1706, %v1706
        %v1739 = vmul.f32 %v1707, %v1707
        %v1740 = vmul.f32 %v1708, %v1708
        %v1741 = vmul.f32 %v1709, %v1709
        %v1742 = vmul.f32 %v1710, %v1710
        %v1743 = vmul.f32 %v1711, %v1711
        %v1744 = vmul.f32 %v1712, %v1712
        %v1745 = vmul.f32 %v1713, %v1713
        %v1746 = vmul.f32 %v1714, %v1714
        %v1747 = vmul.f32 %v1715, %v1715
        %v1748 = vmul.f32 %v1716, %v1716
        %v1749 = vmul.f32 %v1717, %v1717
        %v1750 = vmul.f32 %v1718, %v1718
        %v1751 = vmul.f32 %v1719, %v1719
        %v1752 = vmul.f32 %v1720, %v1720
        %1753 = vadd.xlane.f32.xlu0 %v1721
        %v1754 = vpop.xlane.xlu0 %1753
        %1755 = vadd.xlane.f32.xlu0 %v1722
        %v1756 = vpop.xlane.xlu0 %1755
        %1757 = vadd.xlane.f32.xlu0 %v1723
        %v1758 = vpop.xlane.xlu0 %1757
        %1759 = vadd.xlane.f32.xlu0 %v1724
        %v1760 = vpop.xlane.xlu0 %1759
        %1761 = vadd.xlane.f32.xlu0 %v1725
        %v1762 = vpop.xlane.xlu0 %1761
        %1763 = vadd.xlane.f32.xlu0 %v1726
        %v1764 = vpop.xlane.xlu0 %1763
        %1765 = vadd.xlane.f32.xlu0 %v1727
        %v1766 = vpop.xlane.xlu0 %1765
        %1767 = vadd.xlane.f32.xlu0 %v1728
        %v1768 = vpop.xlane.xlu0 %1767
        %1769 = vadd.xlane.f32.xlu0 %v1729
        %v1770 = vpop.xlane.xlu0 %1769
        %1771 = vadd.xlane.f32.xlu0 %v1730
        %v1772 = vpop.xlane.xlu0 %1771
        %1773 = vadd.xlane.f32.xlu0 %v1731
        %v1774 = vpop.xlane.xlu0 %1773
        %1775 = vadd.xlane.f32.xlu0 %v1732
        %v1776 = vpop.xlane.xlu0 %1775
        %1777 = vadd.xlane.f32.xlu0 %v1733
        %v1778 = vpop.xlane.xlu0 %1777
        %1779 = vadd.xlane.f32.xlu0 %v1734
        %v1780 = vpop.xlane.xlu0 %1779
        %1781 = vadd.xlane.f32.xlu0 %v1735
        %v1782 = vpop.xlane.xlu0 %1781
        %1783 = vadd.xlane.f32.xlu0 %v1736
        %v1784 = vpop.xlane.xlu0 %1783
        %1785 = vadd.xlane.f32.xlu0 %v1737
        %v1786 = vpop.xlane.xlu0 %1785
        %1787 = vadd.xlane.f32.xlu0 %v1738
        %v1788 = vpop.xlane.xlu0 %1787
        %1789 = vadd.xlane.f32.xlu0 %v1739
        %v1790 = vpop.xlane.xlu0 %1789
        %1791 = vadd.xlane.f32.xlu0 %v1740
        %v1792 = vpop.xlane.xlu0 %1791
        %1793 = vadd.xlane.f32.xlu0 %v1741
        %v1794 = vpop.xlane.xlu0 %1793
        %1795 = vadd.xlane.f32.xlu0 %v1742
        %v1796 = vpop.xlane.xlu0 %1795
        %1797 = vadd.xlane.f32.xlu0 %v1743
        %v1798 = vpop.xlane.xlu0 %1797
        %1799 = vadd.xlane.f32.xlu0 %v1744
        %v1800 = vpop.xlane.xlu0 %1799
        %1801 = vadd.xlane.f32.xlu0 %v1745
        %v1802 = vpop.xlane.xlu0 %1801
        %1803 = vadd.xlane.f32.xlu0 %v1746
        %v1804 = vpop.xlane.xlu0 %1803
        %1805 = vadd.xlane.f32.xlu0 %v1747
        %v1806 = vpop.xlane.xlu0 %1805
        %1807 = vadd.xlane.f32.xlu0 %v1748
        %v1808 = vpop.xlane.xlu0 %1807
        %1809 = vadd.xlane.f32.xlu0 %v1749
        %v1810 = vpop.xlane.xlu0 %1809
        %1811 = vadd.xlane.f32.xlu0 %v1750
        %v1812 = vpop.xlane.xlu0 %1811
        %1813 = vadd.xlane.f32.xlu0 %v1751
        %v1814 = vpop.xlane.xlu0 %1813
        %1815 = vadd.xlane.f32.xlu0 %v1752
        %v1816 = vpop.xlane.xlu0 %1815
        %1817 = vmatprep.subr.mxu0 0.0
        %1818 = vmatpush1.xpose.msra.mxu0 %v366
        %1819 = vmatprep.subr.mxu0 0.0
        %1820 = vmatpush1.xpose.msra.mxu0 %v365
        %1821 = vmatprep.subr.mxu0 0.0
        %1822 = vmatpush1.xpose.msra.mxu0 %v364
        %1823 = vmatprep.subr.mxu0 0.0
        %1824 = vmatpush1.xpose.msra.mxu0 %v363
        %1825 = vmatprep.subr.mxu0 0.0
        %1826 = vmatpush1.xpose.msra.mxu0 %v362
        %1827 = vmatprep.subr.mxu0 0.0
        %1828 = vmatpush1.xpose.msra.mxu0 %v361
        %1829 = vmatprep.subr.mxu0 0.0
        %1830 = vmatpush1.xpose.msra.mxu0 %v360
        %1831 = vmatprep.subr.mxu0 0.0
        %1832 = vmatpush1.xpose.msra.mxu0 %v359
        %1833 = vmatprep.subr.mxu0 0.0
        %1834 = vmatpush1.xpose.msra.mxu0 %v358
        %1835 = vmatprep.subr.mxu0 0.0
        %1836 = vmatpush1.xpose.msra.mxu0 %v357
        %1837 = vmatprep.subr.mxu0 0.0
        %1838 = vmatpush1.xpose.msra.mxu0 %v356
        %1839 = vmatprep.subr.mxu0 0.0
        %1840 = vmatpush1.xpose.msra.mxu0 %v355
        %1841 = vmatprep.subr.mxu0 0.0
        %1842 = vmatpush1.xpose.msra.mxu0 %v354
        %1843 = vmatprep.subr.mxu0 0.0
        %1844 = vmatpush1.xpose.msra.mxu0 %v353
        %1845 = vmatprep.subr.mxu0 0.0
        %1846 = vmatpush1.xpose.msra.mxu0 %v352
        %1847 = vmatprep.subr.mxu0 0.0
        %1848 = vmatpush1.xpose.msra.mxu0 %v351
        %1849 = vmatprep.subr.mxu0 0.0
        %1850 = vmatpush2.xpose.msra.mxu0 0.0
        %1851 = vmatprep.subr.mxu0 0.0
        %1852 = vmatpush2.xpose.msra.mxu0 0.0
        %1853 = vmatprep.subr.mxu0 0.0
        %1854 = vmatpush2.xpose.msra.mxu0 0.0
        %1855 = vmatprep.subr.mxu0 0.0
        %1856 = vmatpush2.xpose.msra.mxu0 0.0
        %1857 = vmatprep.subr.mxu0 0.0
        %1858 = vmatpush2.xpose.msra.mxu0 0.0
        %1859 = vmatprep.subr.mxu0 0.0
        %1860 = vmatpush2.xpose.msra.mxu0 0.0
        %1861 = vmatprep.subr.mxu0 0.0
        %1862 = vmatpush2.xpose.msra.mxu0 0.0
        %1863 = vmatprep.subr.mxu0 0.0
        %1864 = vmatpush2.xpose.msra.mxu0 0.0
        %1865 = vmatprep.subr.mxu0 0.0
        %1866 = vmatpush2.xpose.msra.mxu0 0.0
        %1867 = vmatprep.subr.mxu0 0.0
        %1868 = vmatpush2.xpose.msra.mxu0 0.0
        %1869 = vmatprep.subr.mxu0 0.0
        %1870 = vmatpush2.xpose.msra.mxu0 0.0
        %1871 = vmatprep.subr.mxu0 0.0
        %1872 = vmatpush2.xpose.msra.mxu0 0.0
        %1873 = vmatprep.subr.mxu0 0.0
        %1874 = vmatpush2.xpose.msra.mxu0 0.0
        %1875 = vmatprep.subr.mxu0 0.0
        %1876 = vmatpush2.xpose.msra.mxu0 0.0
        %1877 = vmatprep.subr.mxu0 0.0
        %1878 = vmatpush2.xpose.msra.mxu0 0.0
        %1879 = vmatprep.subr.mxu0 0.0
        %1880 = vmatpush2.xpose.msra.mxu0 0.0
        %1881 = vmatprep.mubr.f32.mxu0 0.0
        %1882 = vmatmul.mubr.f32.gmra.mxu0 %v1689
        %v1883 = vpop.f32.mrf.mxu0
        %v1884 = vadd.f32 0.0, %v1883
        %v1885 = vpop.f32.mrf.mxu0
        %1886 = vmatprep.mubr.f32.mxu0 0.0
        %1887 = vmatmul.mubr.f32.gmra.mxu0 %v1690
        %v1888 = vpop.f32.mrf.mxu0
        %v1889 = vadd.f32 0.0, %v1888
        %v1890 = vpop.f32.mrf.mxu0
        %1891 = vmatprep.mubr.f32.mxu0 0.0
        %1892 = vmatmul.mubr.f32.gmra.mxu0 %v1691
        %v1893 = vpop.f32.mrf.mxu0
        %v1894 = vadd.f32 0.0, %v1893
        %v1895 = vpop.f32.mrf.mxu0
        %1896 = vmatprep.mubr.f32.mxu0 0.0
        %1897 = vmatmul.mubr.f32.gmra.mxu0 %v1692
        %v1898 = vpop.f32.mrf.mxu0
        %v1899 = vadd.f32 0.0, %v1898
        %v1900 = vpop.f32.mrf.mxu0
        %1901 = vmatprep.mubr.f32.mxu0 0.0
        %1902 = vmatmul.mubr.f32.gmra.mxu0 %v1693
        %v1903 = vpop.f32.mrf.mxu0
        %v1904 = vadd.f32 0.0, %v1903
        %v1905 = vpop.f32.mrf.mxu0
        %1906 = vmatprep.mubr.f32.mxu0 0.0
        %1907 = vmatmul.mubr.f32.gmra.mxu0 %v1694
        %v1908 = vpop.f32.mrf.mxu0
        %v1909 = vadd.f32 0.0, %v1908
        %v1910 = vpop.f32.mrf.mxu0
        %1911 = vmatprep.mubr.f32.mxu0 0.0
        %1912 = vmatmul.mubr.f32.gmra.mxu0 %v1695
        %v1913 = vpop.f32.mrf.mxu0
        %v1914 = vadd.f32 0.0, %v1913
        %v1915 = vpop.f32.mrf.mxu0
        %1916 = vmatprep.mubr.f32.mxu0 0.0
        %1917 = vmatmul.mubr.f32.gmra.mxu0 %v1696
        %v1918 = vpop.f32.mrf.mxu0
        %v1919 = vadd.f32 0.0, %v1918
        %v1920 = vpop.f32.mrf.mxu0
        %1921 = vmatprep.mubr.f32.mxu0 0.0
        %1922 = vmatmul.mubr.f32.gmra.mxu0 %v1697
        %v1923 = vpop.f32.mrf.mxu0
        %v1924 = vadd.f32 0.0, %v1923
        %v1925 = vpop.f32.mrf.mxu0
        %1926 = vmatprep.mubr.f32.mxu0 0.0
        %1927 = vmatmul.mubr.f32.gmra.mxu0 %v1698
        %v1928 = vpop.f32.mrf.mxu0
        %v1929 = vadd.f32 0.0, %v1928
        %v1930 = vpop.f32.mrf.mxu0
        %1931 = vmatprep.mubr.f32.mxu0 0.0
        %1932 = vmatmul.mubr.f32.gmra.mxu0 %v1699
        %v1933 = vpop.f32.mrf.mxu0
        %v1934 = vadd.f32 0.0, %v1933
        %v1935 = vpop.f32.mrf.mxu0
        %1936 = vmatprep.mubr.f32.mxu0 0.0
        %1937 = vmatmul.mubr.f32.gmra.mxu0 %v1700
        %v1938 = vpop.f32.mrf.mxu0
        %v1939 = vadd.f32 0.0, %v1938
        %v1940 = vpop.f32.mrf.mxu0
        %1941 = vmatprep.mubr.f32.mxu0 0.0
        %1942 = vmatmul.mubr.f32.gmra.mxu0 %v1701
        %v1943 = vpop.f32.mrf.mxu0
        %v1944 = vadd.f32 0.0, %v1943
        %v1945 = vpop.f32.mrf.mxu0
        %1946 = vmatprep.mubr.f32.mxu0 0.0
        %1947 = vmatmul.mubr.f32.gmra.mxu0 %v1702
        %v1948 = vpop.f32.mrf.mxu0
        %v1949 = vadd.f32 0.0, %v1948
        %v1950 = vpop.f32.mrf.mxu0
        %1951 = vmatprep.mubr.f32.mxu0 0.0
        %1952 = vmatmul.mubr.f32.gmra.mxu0 %v1703
        %v1953 = vpop.f32.mrf.mxu0
        %v1954 = vadd.f32 0.0, %v1953
        %v1955 = vpop.f32.mrf.mxu0
        %1956 = vmatprep.mubr.f32.mxu0 0.0
        %1957 = vmatmul.mubr.f32.gmra.mxu0 %v1704
        %v1958 = vpop.f32.mrf.mxu0
        %v1959 = vadd.f32 0.0, %v1958
        %v1960 = vpop.f32.mrf.mxu0
        %1961 = vmatprep.mubr.f32.mxu0 0.0
        %1962 = vmatmul.mubr.f32.gmra.mxu0 %v1705
        %v1963 = vpop.f32.mrf.mxu0
        %v1964 = vadd.f32 0.0, %v1963
        %v1965 = vpop.f32.mrf.mxu0
        %1966 = vmatprep.mubr.f32.mxu0 0.0
        %1967 = vmatmul.mubr.f32.gmra.mxu0 %v1706
        %v1968 = vpop.f32.mrf.mxu0
        %v1969 = vadd.f32 0.0, %v1968
        %v1970 = vpop.f32.mrf.mxu0
        %1971 = vmatprep.mubr.f32.mxu0 0.0
        %1972 = vmatmul.mubr.f32.gmra.mxu0 %v1707
        %v1973 = vpop.f32.mrf.mxu0
        %v1974 = vadd.f32 0.0, %v1973
        %v1975 = vpop.f32.mrf.mxu0
        %1976 = vmatprep.mubr.f32.mxu0 0.0
        %1977 = vmatmul.mubr.f32.gmra.mxu0 %v1708
        %v1978 = vpop.f32.mrf.mxu0
        %v1979 = vadd.f32 0.0, %v1978
        %v1980 = vpop.f32.mrf.mxu0
        %1981 = vmatprep.mubr.f32.mxu0 0.0
        %1982 = vmatmul.mubr.f32.gmra.mxu0 %v1709
        %v1983 = vpop.f32.mrf.mxu0
        %v1984 = vadd.f32 0.0, %v1983
        %v1985 = vpop.f32.mrf.mxu0
        %1986 = vmatprep.mubr.f32.mxu0 0.0
        %1987 = vmatmul.mubr.f32.gmra.mxu0 %v1710
        %v1988 = vpop.f32.mrf.mxu0
        %v1989 = vadd.f32 0.0, %v1988
        %v1990 = vpop.f32.mrf.mxu0
        %1991 = vmatprep.mubr.f32.mxu0 0.0
        %1992 = vmatmul.mubr.f32.gmra.mxu0 %v1711
        %v1993 = vpop.f32.mrf.mxu0
        %v1994 = vadd.f32 0.0, %v1993
        %v1995 = vpop.f32.mrf.mxu0
        %1996 = vmatprep.mubr.f32.mxu0 0.0
        %1997 = vmatmul.mubr.f32.gmra.mxu0 %v1712
        %v1998 = vpop.f32.mrf.mxu0
        %v1999 = vadd.f32 0.0, %v1998
        %v2000 = vpop.f32.mrf.mxu0
        %2001 = vmatprep.mubr.f32.mxu0 0.0
        %2002 = vmatmul.mubr.f32.gmra.mxu0 %v1713
        %v2003 = vpop.f32.mrf.mxu0
        %v2004 = vadd.f32 0.0, %v2003
        %v2005 = vpop.f32.mrf.mxu0
        %2006 = vmatprep.mubr.f32.mxu0 0.0
        %2007 = vmatmul.mubr.f32.gmra.mxu0 %v1714
        %v2008 = vpop.f32.mrf.mxu0
        %v2009 = vadd.f32 0.0, %v2008
        %v2010 = vpop.f32.mrf.mxu0
        %2011 = vmatprep.mubr.f32.mxu0 0.0
        %2012 = vmatmul.mubr.f32.gmra.mxu0 %v1715
        %v2013 = vpop.f32.mrf.mxu0
        %v2014 = vadd.f32 0.0, %v2013
        %v2015 = vpop.f32.mrf.mxu0
        %2016 = vmatprep.mubr.f32.mxu0 0.0
        %2017 = vmatmul.mubr.f32.gmra.mxu0 %v1716
        %v2018 = vpop.f32.mrf.mxu0
        %v2019 = vadd.f32 0.0, %v2018
        %v2020 = vpop.f32.mrf.mxu0
        %2021 = vmatprep.mubr.f32.mxu0 0.0
        %2022 = vmatmul.mubr.f32.gmra.mxu0 %v1717
        %v2023 = vpop.f32.mrf.mxu0
        %v2024 = vadd.f32 0.0, %v2023
        %v2025 = vpop.f32.mrf.mxu0
        %2026 = vmatprep.mubr.f32.mxu0 0.0
        %2027 = vmatmul.mubr.f32.gmra.mxu0 %v1718
        %v2028 = vpop.f32.mrf.mxu0
        %v2029 = vadd.f32 0.0, %v2028
        %v2030 = vpop.f32.mrf.mxu0
        %2031 = vmatprep.mubr.f32.mxu0 0.0
        %2032 = vmatmul.mubr.f32.gmra.mxu0 %v1719
        %v2033 = vpop.f32.mrf.mxu0
        %v2034 = vadd.f32 0.0, %v2033
        %v2035 = vpop.f32.mrf.mxu0
        %2036 = vmatprep.mubr.f32.mxu0 0.0
        %2037 = vmatmul.mubr.f32.gmra.mxu0 %v1720
        %v2038 = vpop.f32.mrf.mxu0
        %v2039 = vadd.f32 0.0, %v2038
        %v2040 = vpop.f32.mrf.mxu0
        %2041 = vdwg.mxu0
        %v2042 = vadd.f32 %v1754, %v694
        %v2043 = vadd.f32 %v1756, %v694
        %v2044 = vadd.f32 %v1758, %v694
        %v2045 = vadd.f32 %v1760, %v694
        %v2046 = vadd.f32 %v1762, %v694
        %v2047 = vadd.f32 %v1764, %v694
        %v2048 = vadd.f32 %v1766, %v694
        %v2049 = vadd.f32 %v1768, %v694
        %v2050 = vadd.f32 %v1770, %v694
        %v2051 = vadd.f32 %v1772, %v694
        %v2052 = vadd.f32 %v1774, %v694
        %v2053 = vadd.f32 %v1776, %v694
        %v2054 = vadd.f32 %v1778, %v694
        %v2055 = vadd.f32 %v1780, %v694
        %v2056 = vadd.f32 %v1782, %v694
        %v2057 = vadd.f32 %v1784, %v694
        %v2058 = vadd.f32 %v1786, %v694
        %v2059 = vadd.f32 %v1788, %v694
        %v2060 = vadd.f32 %v1790, %v694
        %v2061 = vadd.f32 %v1792, %v694
        %v2062 = vadd.f32 %v1794, %v694
        %v2063 = vadd.f32 %v1796, %v694
        %v2064 = vadd.f32 %v1798, %v694
        %v2065 = vadd.f32 %v1800, %v694
        %v2066 = vadd.f32 %v1802, %v694
        %v2067 = vadd.f32 %v1804, %v694
        %v2068 = vadd.f32 %v1806, %v694
        %v2069 = vadd.f32 %v1808, %v694
        %v2070 = vadd.f32 %v1810, %v694
        %v2071 = vadd.f32 %v1812, %v694
        %v2072 = vadd.f32 %v1814, %v694
        %v2073 = vadd.f32 %v1816, %v694
        %v2074 = vadd.f32 %v2042, %v1884
        %v2075 = vadd.f32 %v2043, %v1889
        %v2076 = vadd.f32 %v2044, %v1894
        %v2077 = vadd.f32 %v2045, %v1899
        %v2078 = vadd.f32 %v2046, %v1904
        %v2079 = vadd.f32 %v2047, %v1909
        %v2080 = vadd.f32 %v2048, %v1914
        %v2081 = vadd.f32 %v2049, %v1919
        %v2082 = vadd.f32 %v2050, %v1924
        %v2083 = vadd.f32 %v2051, %v1929
        %v2084 = vadd.f32 %v2052, %v1934
        %v2085 = vadd.f32 %v2053, %v1939
        %v2086 = vadd.f32 %v2054, %v1944
        %v2087 = vadd.f32 %v2055, %v1949
        %v2088 = vadd.f32 %v2056, %v1954
        %v2089 = vadd.f32 %v2057, %v1959
        %v2090 = vadd.f32 %v2058, %v1964
        %v2091 = vadd.f32 %v2059, %v1969
        %v2092 = vadd.f32 %v2060, %v1974
        %v2093 = vadd.f32 %v2061, %v1979
        %v2094 = vadd.f32 %v2062, %v1984
        %v2095 = vadd.f32 %v2063, %v1989
        %v2096 = vadd.f32 %v2064, %v1994
        %v2097 = vadd.f32 %v2065, %v1999
        %v2098 = vadd.f32 %v2066, %v2004
        %v2099 = vadd.f32 %v2067, %v2009
        %v2100 = vadd.f32 %v2068, %v2014
        %v2101 = vadd.f32 %v2069, %v2019
        %v2102 = vadd.f32 %v2070, %v2024
        %v2103 = vadd.f32 %v2071, %v2029
        %v2104 = vadd.f32 %v2072, %v2034
        %v2105 = vadd.f32 %v2073, %v2039
        %s2106 = scalar_lea.vmem %s282, 256 [#allocation9]
        %2107 = vst [vmem:[%s2106] sm:$0xff] %v2074
        %2108 = vst [vmem:[%s2106 + $0x8] sm:$0xff] %v2075
        %2109 = vst [vmem:[%s2106 + $0x10] sm:$0xff] %v2076
        %2110 = vst [vmem:[%s2106 + $0x18] sm:$0xff] %v2077
        %2111 = vst [vmem:[%s2106 + $0x20] sm:$0xff] %v2078
        %2112 = vst [vmem:[%s2106 + $0x28] sm:$0xff] %v2079
        %2113 = vst [vmem:[%s2106 + $0x30] sm:$0xff] %v2080
        %2114 = vst [vmem:[%s2106 + $0x38] sm:$0xff] %v2081
        %2115 = vst [vmem:[%s2106 + $0x40] sm:$0xff] %v2082
        %2116 = vst [vmem:[%s2106 + $0x48] sm:$0xff] %v2083
        %2117 = vst [vmem:[%s2106 + $0x50] sm:$0xff] %v2084
        %2118 = vst [vmem:[%s2106 + $0x58] sm:$0xff] %v2085
        %2119 = vst [vmem:[%s2106 + $0x60] sm:$0xff] %v2086
        %2120 = vst [vmem:[%s2106 + $0x68] sm:$0xff] %v2087
        %2121 = vst [vmem:[%s2106 + $0x70] sm:$0xff] %v2088
        %2122 = vst [vmem:[%s2106 + $0x78] sm:$0xff] %v2089
        %2123 = vst [vmem:[%s2106 + $0x80] sm:$0xff] %v2090
        %2124 = vst [vmem:[%s2106 + $0x88] sm:$0xff] %v2091
        %2125 = vst [vmem:[%s2106 + $0x90] sm:$0xff] %v2092
        %2126 = vst [vmem:[%s2106 + $0x98] sm:$0xff] %v2093
        %2127 = vst [vmem:[%s2106 + $0xa0] sm:$0xff] %v2094
        %2128 = vst [vmem:[%s2106 + $0xa8] sm:$0xff] %v2095
        %2129 = vst [vmem:[%s2106 + $0xb0] sm:$0xff] %v2096
        %2130 = vst [vmem:[%s2106 + $0xb8] sm:$0xff] %v2097
        %2131 = vst [vmem:[%s2106 + $0xc0] sm:$0xff] %v2098
        %2132 = vst [vmem:[%s2106 + $0xc8] sm:$0xff] %v2099
        %2133 = vst [vmem:[%s2106 + $0xd0] sm:$0xff] %v2100
        %2134 = vst [vmem:[%s2106 + $0xd8] sm:$0xff] %v2101
        %2135 = vst [vmem:[%s2106 + $0xe0] sm:$0xff] %v2102
        %2136 = vst [vmem:[%s2106 + $0xe8] sm:$0xff] %v2103
        %2137 = vst [vmem:[%s2106 + $0xf0] sm:$0xff] %v2104
        %2138 = vst [vmem:[%s2106 + $0xf8] sm:$0xff] %v2105
        %2139 = vmin.xlane.f32.xlu0 %v2074
        %v2140 = vpop.xlane.xlu0 %2139
        %2141 = vmin.xlane.f32.xlu0 %v2075
        %v2142 = vpop.xlane.xlu0 %2141
        %2143 = vmin.xlane.f32.xlu0 %v2076
        %v2144 = vpop.xlane.xlu0 %2143
        %2145 = vmin.xlane.f32.xlu0 %v2077
        %v2146 = vpop.xlane.xlu0 %2145
        %2147 = vmin.xlane.f32.xlu0 %v2078
        %v2148 = vpop.xlane.xlu0 %2147
        %2149 = vmin.xlane.f32.xlu0 %v2079
        %v2150 = vpop.xlane.xlu0 %2149
        %2151 = vmin.xlane.f32.xlu0 %v2080
        %v2152 = vpop.xlane.xlu0 %2151
        %2153 = vmin.xlane.f32.xlu0 %v2081
        %v2154 = vpop.xlane.xlu0 %2153
        %2155 = vmin.xlane.f32.xlu0 %v2082
        %v2156 = vpop.xlane.xlu0 %2155
        %2157 = vmin.xlane.f32.xlu0 %v2083
        %v2158 = vpop.xlane.xlu0 %2157
        %2159 = vmin.xlane.f32.xlu0 %v2084
        %v2160 = vpop.xlane.xlu0 %2159
        %2161 = vmin.xlane.f32.xlu0 %v2085
        %v2162 = vpop.xlane.xlu0 %2161
        %2163 = vmin.xlane.f32.xlu0 %v2086
        %v2164 = vpop.xlane.xlu0 %2163
        %2165 = vmin.xlane.f32.xlu0 %v2087
        %v2166 = vpop.xlane.xlu0 %2165
        %2167 = vmin.xlane.f32.xlu0 %v2088
        %v2168 = vpop.xlane.xlu0 %2167
        %2169 = vmin.xlane.f32.xlu0 %v2089
        %v2170 = vpop.xlane.xlu0 %2169
        %2171 = vmin.xlane.f32.xlu0 %v2090
        %v2172 = vpop.xlane.xlu0 %2171
        %2173 = vmin.xlane.f32.xlu0 %v2091
        %v2174 = vpop.xlane.xlu0 %2173
        %2175 = vmin.xlane.f32.xlu0 %v2092
        %v2176 = vpop.xlane.xlu0 %2175
        %2177 = vmin.xlane.f32.xlu0 %v2093
        %v2178 = vpop.xlane.xlu0 %2177
        %2179 = vmin.xlane.f32.xlu0 %v2094
        %v2180 = vpop.xlane.xlu0 %2179
        %2181 = vmin.xlane.f32.xlu0 %v2095
        %v2182 = vpop.xlane.xlu0 %2181
        %2183 = vmin.xlane.f32.xlu0 %v2096
        %v2184 = vpop.xlane.xlu0 %2183
        %2185 = vmin.xlane.f32.xlu0 %v2097
        %v2186 = vpop.xlane.xlu0 %2185
        %2187 = vmin.xlane.f32.xlu0 %v2098
        %v2188 = vpop.xlane.xlu0 %2187
        %2189 = vmin.xlane.f32.xlu0 %v2099
        %v2190 = vpop.xlane.xlu0 %2189
        %2191 = vmin.xlane.f32.xlu0 %v2100
        %v2192 = vpop.xlane.xlu0 %2191
        %2193 = vmin.xlane.f32.xlu0 %v2101
        %v2194 = vpop.xlane.xlu0 %2193
        %2195 = vmin.xlane.f32.xlu0 %v2102
        %v2196 = vpop.xlane.xlu0 %2195
        %2197 = vmin.xlane.f32.xlu0 %v2103
        %v2198 = vpop.xlane.xlu0 %2197
        %2199 = vmin.xlane.f32.xlu0 %v2104
        %v2200 = vpop.xlane.xlu0 %2199
        %2201 = vmin.xlane.f32.xlu0 %v2105
        %v2202 = vpop.xlane.xlu0 %2201
        %vm2203 = vcmp.eq.f32.partialorder %v2074, %v2140
        %vm2204 = vcmp.eq.f32.partialorder %v2075, %v2142
        %vm2205 = vcmp.eq.f32.partialorder %v2076, %v2144
        %vm2206 = vcmp.eq.f32.partialorder %v2077, %v2146
        %vm2207 = vcmp.eq.f32.partialorder %v2078, %v2148
        %vm2208 = vcmp.eq.f32.partialorder %v2079, %v2150
        %vm2209 = vcmp.eq.f32.partialorder %v2080, %v2152
        %vm2210 = vcmp.eq.f32.partialorder %v2081, %v2154
        %vm2211 = vcmp.eq.f32.partialorder %v2082, %v2156
        %vm2212 = vcmp.eq.f32.partialorder %v2083, %v2158
        %vm2213 = vcmp.eq.f32.partialorder %v2084, %v2160
        %vm2214 = vcmp.eq.f32.partialorder %v2085, %v2162
        %vm2215 = vcmp.eq.f32.partialorder %v2086, %v2164
        %vm2216 = vcmp.eq.f32.partialorder %v2087, %v2166
        %vm2217 = vcmp.eq.f32.partialorder %v2088, %v2168
        %vm2218 = vcmp.eq.f32.partialorder %v2089, %v2170
        %vm2219 = vcmp.eq.f32.partialorder %v2090, %v2172
        %vm2220 = vcmp.eq.f32.partialorder %v2091, %v2174
        %vm2221 = vcmp.eq.f32.partialorder %v2092, %v2176
        %vm2222 = vcmp.eq.f32.partialorder %v2093, %v2178
        %vm2223 = vcmp.eq.f32.partialorder %v2094, %v2180
        %vm2224 = vcmp.eq.f32.partialorder %v2095, %v2182
        %vm2225 = vcmp.eq.f32.partialorder %v2096, %v2184
        %vm2226 = vcmp.eq.f32.partialorder %v2097, %v2186
        %vm2227 = vcmp.eq.f32.partialorder %v2098, %v2188
        %vm2228 = vcmp.eq.f32.partialorder %v2099, %v2190
        %vm2229 = vcmp.eq.f32.partialorder %v2100, %v2192
        %vm2230 = vcmp.eq.f32.partialorder %v2101, %v2194
        %vm2231 = vcmp.eq.f32.partialorder %v2102, %v2196
        %vm2232 = vcmp.eq.f32.partialorder %v2103, %v2198
        %vm2233 = vcmp.eq.f32.partialorder %v2104, %v2200
        %vm2234 = vcmp.eq.f32.partialorder %v2105, %v2202
        %v2235 = vsel %vm2203, %v368, 128
        %v2236 = vsel %vm2204, %v368, 128
        %v2237 = vsel %vm2205, %v368, 128
        %v2238 = vsel %vm2206, %v368, 128
        %v2239 = vsel %vm2207, %v368, 128
        %v2240 = vsel %vm2208, %v368, 128
        %v2241 = vsel %vm2209, %v368, 128
        %v2242 = vsel %vm2210, %v368, 128
        %v2243 = vsel %vm2211, %v368, 128
        %v2244 = vsel %vm2212, %v368, 128
        %v2245 = vsel %vm2213, %v368, 128
        %v2246 = vsel %vm2214, %v368, 128
        %v2247 = vsel %vm2215, %v368, 128
        %v2248 = vsel %vm2216, %v368, 128
        %v2249 = vsel %vm2217, %v368, 128
        %v2250 = vsel %vm2218, %v368, 128
        %v2251 = vsel %vm2219, %v368, 128
        %v2252 = vsel %vm2220, %v368, 128
        %v2253 = vsel %vm2221, %v368, 128
        %v2254 = vsel %vm2222, %v368, 128
        %v2255 = vsel %vm2223, %v368, 128
        %v2256 = vsel %vm2224, %v368, 128
        %v2257 = vsel %vm2225, %v368, 128
        %v2258 = vsel %vm2226, %v368, 128
        %v2259 = vsel %vm2227, %v368, 128
        %v2260 = vsel %vm2228, %v368, 128
        %v2261 = vsel %vm2229, %v368, 128
        %v2262 = vsel %vm2230, %v368, 128
        %v2263 = vsel %vm2231, %v368, 128
        %v2264 = vsel %vm2232, %v368, 128
        %v2265 = vsel %vm2233, %v368, 128
        %v2266 = vsel %vm2234, %v368, 128
        %v2267 = vand.u32 %v2235, 65535
        %v2268 = vshra.s32 %v2235, 16
        %v2269 = vcvt.s32.f32 %v2267
        %v2270 = vcvt.s32.f32 %v2268
        %2271 = vmin.xlane.f32.xlu0 %v2270
        %v2272 = vpop.xlane.xlu0 %2271
        %vm2273 = vcmp.eq.f32.partialorder %v2270, %v2272
        %v2274 = vsel %vm2273, %v2269, inf
        %2275 = vmin.xlane.f32.xlu0 %v2274
        %v2276 = vpop.xlane.xlu0 %2275
        %v2277 = vcvt.f32.s32 %v2276
        %v2278 = vcvt.f32.s32 %v2272
        %v2279 = vshll.u32 %v2278, 16
        %v2280 = vadd.s32 %v2279, %v2277
        %v2281 = vand.u32 %v2236, 65535
        %v2282 = vshra.s32 %v2236, 16
        %v2283 = vcvt.s32.f32 %v2281
        %v2284 = vcvt.s32.f32 %v2282
        %2285 = vmin.xlane.f32.xlu0 %v2284
        %v2286 = vpop.xlane.xlu0 %2285
        %vm2287 = vcmp.eq.f32.partialorder %v2284, %v2286
        %v2288 = vsel %vm2287, %v2283, inf
        %2289 = vmin.xlane.f32.xlu0 %v2288
        %v2290 = vpop.xlane.xlu0 %2289
        %v2291 = vcvt.f32.s32 %v2290
        %v2292 = vcvt.f32.s32 %v2286
        %v2293 = vshll.u32 %v2292, 16
        %v2294 = vadd.s32 %v2293, %v2291
        %v2295 = vand.u32 %v2237, 65535
        %v2296 = vshra.s32 %v2237, 16
        %v2297 = vcvt.s32.f32 %v2295
        %v2298 = vcvt.s32.f32 %v2296
        %2299 = vmin.xlane.f32.xlu0 %v2298
        %v2300 = vpop.xlane.xlu0 %2299
        %vm2301 = vcmp.eq.f32.partialorder %v2298, %v2300
        %v2302 = vsel %vm2301, %v2297, inf
        %2303 = vmin.xlane.f32.xlu0 %v2302
        %v2304 = vpop.xlane.xlu0 %2303
        %v2305 = vcvt.f32.s32 %v2304
        %v2306 = vcvt.f32.s32 %v2300
        %v2307 = vshll.u32 %v2306, 16
        %v2308 = vadd.s32 %v2307, %v2305
        %v2309 = vand.u32 %v2238, 65535
        %v2310 = vshra.s32 %v2238, 16
        %v2311 = vcvt.s32.f32 %v2309
        %v2312 = vcvt.s32.f32 %v2310
        %2313 = vmin.xlane.f32.xlu0 %v2312
        %v2314 = vpop.xlane.xlu0 %2313
        %vm2315 = vcmp.eq.f32.partialorder %v2312, %v2314
        %v2316 = vsel %vm2315, %v2311, inf
        %2317 = vmin.xlane.f32.xlu0 %v2316
        %v2318 = vpop.xlane.xlu0 %2317
        %v2319 = vcvt.f32.s32 %v2318
        %v2320 = vcvt.f32.s32 %v2314
        %v2321 = vshll.u32 %v2320, 16
        %v2322 = vadd.s32 %v2321, %v2319
        %v2323 = vand.u32 %v2239, 65535
        %v2324 = vshra.s32 %v2239, 16
        %v2325 = vcvt.s32.f32 %v2323
        %v2326 = vcvt.s32.f32 %v2324
        %2327 = vmin.xlane.f32.xlu0 %v2326
        %v2328 = vpop.xlane.xlu0 %2327
        %vm2329 = vcmp.eq.f32.partialorder %v2326, %v2328
        %v2330 = vsel %vm2329, %v2325, inf
        %2331 = vmin.xlane.f32.xlu0 %v2330
        %v2332 = vpop.xlane.xlu0 %2331
        %v2333 = vcvt.f32.s32 %v2332
        %v2334 = vcvt.f32.s32 %v2328
        %v2335 = vshll.u32 %v2334, 16
        %v2336 = vadd.s32 %v2335, %v2333
        %v2337 = vand.u32 %v2240, 65535
        %v2338 = vshra.s32 %v2240, 16
        %v2339 = vcvt.s32.f32 %v2337
        %v2340 = vcvt.s32.f32 %v2338
        %2341 = vmin.xlane.f32.xlu0 %v2340
        %v2342 = vpop.xlane.xlu0 %2341
        %vm2343 = vcmp.eq.f32.partialorder %v2340, %v2342
        %v2344 = vsel %vm2343, %v2339, inf
        %2345 = vmin.xlane.f32.xlu0 %v2344
        %v2346 = vpop.xlane.xlu0 %2345
        %v2347 = vcvt.f32.s32 %v2346
        %v2348 = vcvt.f32.s32 %v2342
        %v2349 = vshll.u32 %v2348, 16
        %v2350 = vadd.s32 %v2349, %v2347
        %v2351 = vand.u32 %v2241, 65535
        %v2352 = vshra.s32 %v2241, 16
        %v2353 = vcvt.s32.f32 %v2351
        %v2354 = vcvt.s32.f32 %v2352
        %2355 = vmin.xlane.f32.xlu0 %v2354
        %v2356 = vpop.xlane.xlu0 %2355
        %vm2357 = vcmp.eq.f32.partialorder %v2354, %v2356
        %v2358 = vsel %vm2357, %v2353, inf
        %2359 = vmin.xlane.f32.xlu0 %v2358
        %v2360 = vpop.xlane.xlu0 %2359
        %v2361 = vcvt.f32.s32 %v2360
        %v2362 = vcvt.f32.s32 %v2356
        %v2363 = vshll.u32 %v2362, 16
        %v2364 = vadd.s32 %v2363, %v2361
        %v2365 = vand.u32 %v2242, 65535
        %v2366 = vshra.s32 %v2242, 16
        %v2367 = vcvt.s32.f32 %v2365
        %v2368 = vcvt.s32.f32 %v2366
        %2369 = vmin.xlane.f32.xlu0 %v2368
        %v2370 = vpop.xlane.xlu0 %2369
        %vm2371 = vcmp.eq.f32.partialorder %v2368, %v2370
        %v2372 = vsel %vm2371, %v2367, inf
        %2373 = vmin.xlane.f32.xlu0 %v2372
        %v2374 = vpop.xlane.xlu0 %2373
        %v2375 = vcvt.f32.s32 %v2374
        %v2376 = vcvt.f32.s32 %v2370
        %v2377 = vshll.u32 %v2376, 16
        %v2378 = vadd.s32 %v2377, %v2375
        %v2379 = vand.u32 %v2243, 65535
        %v2380 = vshra.s32 %v2243, 16
        %v2381 = vcvt.s32.f32 %v2379
        %v2382 = vcvt.s32.f32 %v2380
        %2383 = vmin.xlane.f32.xlu0 %v2382
        %v2384 = vpop.xlane.xlu0 %2383
        %vm2385 = vcmp.eq.f32.partialorder %v2382, %v2384
        %v2386 = vsel %vm2385, %v2381, inf
        %2387 = vmin.xlane.f32.xlu0 %v2386
        %v2388 = vpop.xlane.xlu0 %2387
        %v2389 = vcvt.f32.s32 %v2388
        %v2390 = vcvt.f32.s32 %v2384
        %v2391 = vshll.u32 %v2390, 16
        %v2392 = vadd.s32 %v2391, %v2389
        %v2393 = vand.u32 %v2244, 65535
        %v2394 = vshra.s32 %v2244, 16
        %v2395 = vcvt.s32.f32 %v2393
        %v2396 = vcvt.s32.f32 %v2394
        %2397 = vmin.xlane.f32.xlu0 %v2396
        %v2398 = vpop.xlane.xlu0 %2397
        %vm2399 = vcmp.eq.f32.partialorder %v2396, %v2398
        %v2400 = vsel %vm2399, %v2395, inf
        %2401 = vmin.xlane.f32.xlu0 %v2400
        %v2402 = vpop.xlane.xlu0 %2401
        %v2403 = vcvt.f32.s32 %v2402
        %v2404 = vcvt.f32.s32 %v2398
        %v2405 = vshll.u32 %v2404, 16
        %v2406 = vadd.s32 %v2405, %v2403
        %v2407 = vand.u32 %v2245, 65535
        %v2408 = vshra.s32 %v2245, 16
        %v2409 = vcvt.s32.f32 %v2407
        %v2410 = vcvt.s32.f32 %v2408
        %2411 = vmin.xlane.f32.xlu0 %v2410
        %v2412 = vpop.xlane.xlu0 %2411
        %vm2413 = vcmp.eq.f32.partialorder %v2410, %v2412
        %v2414 = vsel %vm2413, %v2409, inf
        %2415 = vmin.xlane.f32.xlu0 %v2414
        %v2416 = vpop.xlane.xlu0 %2415
        %v2417 = vcvt.f32.s32 %v2416
        %v2418 = vcvt.f32.s32 %v2412
        %v2419 = vshll.u32 %v2418, 16
        %v2420 = vadd.s32 %v2419, %v2417
        %v2421 = vand.u32 %v2246, 65535
        %v2422 = vshra.s32 %v2246, 16
        %v2423 = vcvt.s32.f32 %v2421
        %v2424 = vcvt.s32.f32 %v2422
        %2425 = vmin.xlane.f32.xlu0 %v2424
        %v2426 = vpop.xlane.xlu0 %2425
        %vm2427 = vcmp.eq.f32.partialorder %v2424, %v2426
        %v2428 = vsel %vm2427, %v2423, inf
        %2429 = vmin.xlane.f32.xlu0 %v2428
        %v2430 = vpop.xlane.xlu0 %2429
        %v2431 = vcvt.f32.s32 %v2430
        %v2432 = vcvt.f32.s32 %v2426
        %v2433 = vshll.u32 %v2432, 16
        %v2434 = vadd.s32 %v2433, %v2431
        %v2435 = vand.u32 %v2247, 65535
        %v2436 = vshra.s32 %v2247, 16
        %v2437 = vcvt.s32.f32 %v2435
        %v2438 = vcvt.s32.f32 %v2436
        %2439 = vmin.xlane.f32.xlu0 %v2438
        %v2440 = vpop.xlane.xlu0 %2439
        %vm2441 = vcmp.eq.f32.partialorder %v2438, %v2440
        %v2442 = vsel %vm2441, %v2437, inf
        %2443 = vmin.xlane.f32.xlu0 %v2442
        %v2444 = vpop.xlane.xlu0 %2443
        %v2445 = vcvt.f32.s32 %v2444
        %v2446 = vcvt.f32.s32 %v2440
        %v2447 = vshll.u32 %v2446, 16
        %v2448 = vadd.s32 %v2447, %v2445
        %v2449 = vand.u32 %v2248, 65535
        %v2450 = vshra.s32 %v2248, 16
        %v2451 = vcvt.s32.f32 %v2449
        %v2452 = vcvt.s32.f32 %v2450
        %2453 = vmin.xlane.f32.xlu0 %v2452
        %v2454 = vpop.xlane.xlu0 %2453
        %vm2455 = vcmp.eq.f32.partialorder %v2452, %v2454
        %v2456 = vsel %vm2455, %v2451, inf
        %2457 = vmin.xlane.f32.xlu0 %v2456
        %v2458 = vpop.xlane.xlu0 %2457
        %v2459 = vcvt.f32.s32 %v2458
        %v2460 = vcvt.f32.s32 %v2454
        %v2461 = vshll.u32 %v2460, 16
        %v2462 = vadd.s32 %v2461, %v2459
        %v2463 = vand.u32 %v2249, 65535
        %v2464 = vshra.s32 %v2249, 16
        %v2465 = vcvt.s32.f32 %v2463
        %v2466 = vcvt.s32.f32 %v2464
        %2467 = vmin.xlane.f32.xlu0 %v2466
        %v2468 = vpop.xlane.xlu0 %2467
        %vm2469 = vcmp.eq.f32.partialorder %v2466, %v2468
        %v2470 = vsel %vm2469, %v2465, inf
        %2471 = vmin.xlane.f32.xlu0 %v2470
        %v2472 = vpop.xlane.xlu0 %2471
        %v2473 = vcvt.f32.s32 %v2472
        %v2474 = vcvt.f32.s32 %v2468
        %v2475 = vshll.u32 %v2474, 16
        %v2476 = vadd.s32 %v2475, %v2473
        %v2477 = vand.u32 %v2250, 65535
        %v2478 = vshra.s32 %v2250, 16
        %v2479 = vcvt.s32.f32 %v2477
        %v2480 = vcvt.s32.f32 %v2478
        %2481 = vmin.xlane.f32.xlu0 %v2480
        %v2482 = vpop.xlane.xlu0 %2481
        %vm2483 = vcmp.eq.f32.partialorder %v2480, %v2482
        %v2484 = vsel %vm2483, %v2479, inf
        %2485 = vmin.xlane.f32.xlu0 %v2484
        %v2486 = vpop.xlane.xlu0 %2485
        %v2487 = vcvt.f32.s32 %v2486
        %v2488 = vcvt.f32.s32 %v2482
        %v2489 = vshll.u32 %v2488, 16
        %v2490 = vadd.s32 %v2489, %v2487
        %v2491 = vand.u32 %v2251, 65535
        %v2492 = vshra.s32 %v2251, 16
        %v2493 = vcvt.s32.f32 %v2491
        %v2494 = vcvt.s32.f32 %v2492
        %2495 = vmin.xlane.f32.xlu0 %v2494
        %v2496 = vpop.xlane.xlu0 %2495
        %vm2497 = vcmp.eq.f32.partialorder %v2494, %v2496
        %v2498 = vsel %vm2497, %v2493, inf
        %2499 = vmin.xlane.f32.xlu0 %v2498
        %v2500 = vpop.xlane.xlu0 %2499
        %v2501 = vcvt.f32.s32 %v2500
        %v2502 = vcvt.f32.s32 %v2496
        %v2503 = vshll.u32 %v2502, 16
        %v2504 = vadd.s32 %v2503, %v2501
        %v2505 = vand.u32 %v2252, 65535
        %v2506 = vshra.s32 %v2252, 16
        %v2507 = vcvt.s32.f32 %v2505
        %v2508 = vcvt.s32.f32 %v2506
        %2509 = vmin.xlane.f32.xlu0 %v2508
        %v2510 = vpop.xlane.xlu0 %2509
        %vm2511 = vcmp.eq.f32.partialorder %v2508, %v2510
        %v2512 = vsel %vm2511, %v2507, inf
        %2513 = vmin.xlane.f32.xlu0 %v2512
        %v2514 = vpop.xlane.xlu0 %2513
        %v2515 = vcvt.f32.s32 %v2514
        %v2516 = vcvt.f32.s32 %v2510
        %v2517 = vshll.u32 %v2516, 16
        %v2518 = vadd.s32 %v2517, %v2515
        %v2519 = vand.u32 %v2253, 65535
        %v2520 = vshra.s32 %v2253, 16
        %v2521 = vcvt.s32.f32 %v2519
        %v2522 = vcvt.s32.f32 %v2520
        %2523 = vmin.xlane.f32.xlu0 %v2522
        %v2524 = vpop.xlane.xlu0 %2523
        %vm2525 = vcmp.eq.f32.partialorder %v2522, %v2524
        %v2526 = vsel %vm2525, %v2521, inf
        %2527 = vmin.xlane.f32.xlu0 %v2526
        %v2528 = vpop.xlane.xlu0 %2527
        %v2529 = vcvt.f32.s32 %v2528
        %v2530 = vcvt.f32.s32 %v2524
        %v2531 = vshll.u32 %v2530, 16
        %v2532 = vadd.s32 %v2531, %v2529
        %v2533 = vand.u32 %v2254, 65535
        %v2534 = vshra.s32 %v2254, 16
        %v2535 = vcvt.s32.f32 %v2533
        %v2536 = vcvt.s32.f32 %v2534
        %2537 = vmin.xlane.f32.xlu0 %v2536
        %v2538 = vpop.xlane.xlu0 %2537
        %vm2539 = vcmp.eq.f32.partialorder %v2536, %v2538
        %v2540 = vsel %vm2539, %v2535, inf
        %2541 = vmin.xlane.f32.xlu0 %v2540
        %v2542 = vpop.xlane.xlu0 %2541
        %v2543 = vcvt.f32.s32 %v2542
        %v2544 = vcvt.f32.s32 %v2538
        %v2545 = vshll.u32 %v2544, 16
        %v2546 = vadd.s32 %v2545, %v2543
        %v2547 = vand.u32 %v2255, 65535
        %v2548 = vshra.s32 %v2255, 16
        %v2549 = vcvt.s32.f32 %v2547
        %v2550 = vcvt.s32.f32 %v2548
        %2551 = vmin.xlane.f32.xlu0 %v2550
        %v2552 = vpop.xlane.xlu0 %2551
        %vm2553 = vcmp.eq.f32.partialorder %v2550, %v2552
        %v2554 = vsel %vm2553, %v2549, inf
        %2555 = vmin.xlane.f32.xlu0 %v2554
        %v2556 = vpop.xlane.xlu0 %2555
        %v2557 = vcvt.f32.s32 %v2556
        %v2558 = vcvt.f32.s32 %v2552
        %v2559 = vshll.u32 %v2558, 16
        %v2560 = vadd.s32 %v2559, %v2557
        %v2561 = vand.u32 %v2256, 65535
        %v2562 = vshra.s32 %v2256, 16
        %v2563 = vcvt.s32.f32 %v2561
        %v2564 = vcvt.s32.f32 %v2562
        %2565 = vmin.xlane.f32.xlu0 %v2564
        %v2566 = vpop.xlane.xlu0 %2565
        %vm2567 = vcmp.eq.f32.partialorder %v2564, %v2566
        %v2568 = vsel %vm2567, %v2563, inf
        %2569 = vmin.xlane.f32.xlu0 %v2568
        %v2570 = vpop.xlane.xlu0 %2569
        %v2571 = vcvt.f32.s32 %v2570
        %v2572 = vcvt.f32.s32 %v2566
        %v2573 = vshll.u32 %v2572, 16
        %v2574 = vadd.s32 %v2573, %v2571
        %v2575 = vand.u32 %v2257, 65535
        %v2576 = vshra.s32 %v2257, 16
        %v2577 = vcvt.s32.f32 %v2575
        %v2578 = vcvt.s32.f32 %v2576
        %2579 = vmin.xlane.f32.xlu0 %v2578
        %v2580 = vpop.xlane.xlu0 %2579
        %vm2581 = vcmp.eq.f32.partialorder %v2578, %v2580
        %v2582 = vsel %vm2581, %v2577, inf
        %2583 = vmin.xlane.f32.xlu0 %v2582
        %v2584 = vpop.xlane.xlu0 %2583
        %v2585 = vcvt.f32.s32 %v2584
        %v2586 = vcvt.f32.s32 %v2580
        %v2587 = vshll.u32 %v2586, 16
        %v2588 = vadd.s32 %v2587, %v2585
        %v2589 = vand.u32 %v2258, 65535
        %v2590 = vshra.s32 %v2258, 16
        %v2591 = vcvt.s32.f32 %v2589
        %v2592 = vcvt.s32.f32 %v2590
        %2593 = vmin.xlane.f32.xlu0 %v2592
        %v2594 = vpop.xlane.xlu0 %2593
        %vm2595 = vcmp.eq.f32.partialorder %v2592, %v2594
        %v2596 = vsel %vm2595, %v2591, inf
        %2597 = vmin.xlane.f32.xlu0 %v2596
        %v2598 = vpop.xlane.xlu0 %2597
        %v2599 = vcvt.f32.s32 %v2598
        %v2600 = vcvt.f32.s32 %v2594
        %v2601 = vshll.u32 %v2600, 16
        %v2602 = vadd.s32 %v2601, %v2599
        %v2603 = vand.u32 %v2259, 65535
        %v2604 = vshra.s32 %v2259, 16
        %v2605 = vcvt.s32.f32 %v2603
        %v2606 = vcvt.s32.f32 %v2604
        %2607 = vmin.xlane.f32.xlu0 %v2606
        %v2608 = vpop.xlane.xlu0 %2607
        %vm2609 = vcmp.eq.f32.partialorder %v2606, %v2608
        %v2610 = vsel %vm2609, %v2605, inf
        %2611 = vmin.xlane.f32.xlu0 %v2610
        %v2612 = vpop.xlane.xlu0 %2611
        %v2613 = vcvt.f32.s32 %v2612
        %v2614 = vcvt.f32.s32 %v2608
        %v2615 = vshll.u32 %v2614, 16
        %v2616 = vadd.s32 %v2615, %v2613
        %v2617 = vand.u32 %v2260, 65535
        %v2618 = vshra.s32 %v2260, 16
        %v2619 = vcvt.s32.f32 %v2617
        %v2620 = vcvt.s32.f32 %v2618
        %2621 = vmin.xlane.f32.xlu0 %v2620
        %v2622 = vpop.xlane.xlu0 %2621
        %vm2623 = vcmp.eq.f32.partialorder %v2620, %v2622
        %v2624 = vsel %vm2623, %v2619, inf
        %2625 = vmin.xlane.f32.xlu0 %v2624
        %v2626 = vpop.xlane.xlu0 %2625
        %v2627 = vcvt.f32.s32 %v2626
        %v2628 = vcvt.f32.s32 %v2622
        %v2629 = vshll.u32 %v2628, 16
        %v2630 = vadd.s32 %v2629, %v2627
        %v2631 = vand.u32 %v2261, 65535
        %v2632 = vshra.s32 %v2261, 16
        %v2633 = vcvt.s32.f32 %v2631
        %v2634 = vcvt.s32.f32 %v2632
        %2635 = vmin.xlane.f32.xlu0 %v2634
        %v2636 = vpop.xlane.xlu0 %2635
        %vm2637 = vcmp.eq.f32.partialorder %v2634, %v2636
        %v2638 = vsel %vm2637, %v2633, inf
        %2639 = vmin.xlane.f32.xlu0 %v2638
        %v2640 = vpop.xlane.xlu0 %2639
        %v2641 = vcvt.f32.s32 %v2640
        %v2642 = vcvt.f32.s32 %v2636
        %v2643 = vshll.u32 %v2642, 16
        %v2644 = vadd.s32 %v2643, %v2641
        %v2645 = vand.u32 %v2262, 65535
        %v2646 = vshra.s32 %v2262, 16
        %v2647 = vcvt.s32.f32 %v2645
        %v2648 = vcvt.s32.f32 %v2646
        %2649 = vmin.xlane.f32.xlu0 %v2648
        %v2650 = vpop.xlane.xlu0 %2649
        %vm2651 = vcmp.eq.f32.partialorder %v2648, %v2650
        %v2652 = vsel %vm2651, %v2647, inf
        %2653 = vmin.xlane.f32.xlu0 %v2652
        %v2654 = vpop.xlane.xlu0 %2653
        %v2655 = vcvt.f32.s32 %v2654
        %v2656 = vcvt.f32.s32 %v2650
        %v2657 = vshll.u32 %v2656, 16
        %v2658 = vadd.s32 %v2657, %v2655
        %v2659 = vand.u32 %v2263, 65535
        %v2660 = vshra.s32 %v2263, 16
        %v2661 = vcvt.s32.f32 %v2659
        %v2662 = vcvt.s32.f32 %v2660
        %2663 = vmin.xlane.f32.xlu0 %v2662
        %v2664 = vpop.xlane.xlu0 %2663
        %vm2665 = vcmp.eq.f32.partialorder %v2662, %v2664
        %v2666 = vsel %vm2665, %v2661, inf
        %2667 = vmin.xlane.f32.xlu0 %v2666
        %v2668 = vpop.xlane.xlu0 %2667
        %v2669 = vcvt.f32.s32 %v2668
        %v2670 = vcvt.f32.s32 %v2664
        %v2671 = vshll.u32 %v2670, 16
        %v2672 = vadd.s32 %v2671, %v2669
        %v2673 = vand.u32 %v2264, 65535
        %v2674 = vshra.s32 %v2264, 16
        %v2675 = vcvt.s32.f32 %v2673
        %v2676 = vcvt.s32.f32 %v2674
        %2677 = vmin.xlane.f32.xlu0 %v2676
        %v2678 = vpop.xlane.xlu0 %2677
        %vm2679 = vcmp.eq.f32.partialorder %v2676, %v2678
        %v2680 = vsel %vm2679, %v2675, inf
        %2681 = vmin.xlane.f32.xlu0 %v2680
        %v2682 = vpop.xlane.xlu0 %2681
        %v2683 = vcvt.f32.s32 %v2682
        %v2684 = vcvt.f32.s32 %v2678
        %v2685 = vshll.u32 %v2684, 16
        %v2686 = vadd.s32 %v2685, %v2683
        %v2687 = vand.u32 %v2265, 65535
        %v2688 = vshra.s32 %v2265, 16
        %v2689 = vcvt.s32.f32 %v2687
        %v2690 = vcvt.s32.f32 %v2688
        %2691 = vmin.xlane.f32.xlu0 %v2690
        %v2692 = vpop.xlane.xlu0 %2691
        %vm2693 = vcmp.eq.f32.partialorder %v2690, %v2692
        %v2694 = vsel %vm2693, %v2689, inf
        %2695 = vmin.xlane.f32.xlu0 %v2694
        %v2696 = vpop.xlane.xlu0 %2695
        %v2697 = vcvt.f32.s32 %v2696
        %v2698 = vcvt.f32.s32 %v2692
        %v2699 = vshll.u32 %v2698, 16
        %v2700 = vadd.s32 %v2699, %v2697
        %v2701 = vand.u32 %v2266, 65535
        %v2702 = vshra.s32 %v2266, 16
        %v2703 = vcvt.s32.f32 %v2701
        %v2704 = vcvt.s32.f32 %v2702
        %2705 = vmin.xlane.f32.xlu0 %v2704
        %v2706 = vpop.xlane.xlu0 %2705
        %vm2707 = vcmp.eq.f32.partialorder %v2704, %v2706
        %v2708 = vsel %vm2707, %v2703, inf
        %2709 = vmin.xlane.f32.xlu0 %v2708
        %v2710 = vpop.xlane.xlu0 %2709
        %v2711 = vcvt.f32.s32 %v2710
        %v2712 = vcvt.f32.s32 %v2706
        %v2713 = vshll.u32 %v2712, 16
        %v2714 = vadd.s32 %v2713, %v2711
        %vm2715 = vcmp.eq.s32.totalorder %v368, %v2280
        %vm2716 = vcmp.eq.s32.totalorder %v368, %v2294
        %vm2717 = vcmp.eq.s32.totalorder %v368, %v2308
        %vm2718 = vcmp.eq.s32.totalorder %v368, %v2322
        %vm2719 = vcmp.eq.s32.totalorder %v368, %v2336
        %vm2720 = vcmp.eq.s32.totalorder %v368, %v2350
        %vm2721 = vcmp.eq.s32.totalorder %v368, %v2364
        %vm2722 = vcmp.eq.s32.totalorder %v368, %v2378
        %vm2723 = vcmp.eq.s32.totalorder %v368, %v2392
        %vm2724 = vcmp.eq.s32.totalorder %v368, %v2406
        %vm2725 = vcmp.eq.s32.totalorder %v368, %v2420
        %vm2726 = vcmp.eq.s32.totalorder %v368, %v2434
        %vm2727 = vcmp.eq.s32.totalorder %v368, %v2448
        %vm2728 = vcmp.eq.s32.totalorder %v368, %v2462
        %vm2729 = vcmp.eq.s32.totalorder %v368, %v2476
        %vm2730 = vcmp.eq.s32.totalorder %v368, %v2490
        %vm2731 = vcmp.eq.s32.totalorder %v368, %v2504
        %vm2732 = vcmp.eq.s32.totalorder %v368, %v2518
        %vm2733 = vcmp.eq.s32.totalorder %v368, %v2532
        %vm2734 = vcmp.eq.s32.totalorder %v368, %v2546
        %vm2735 = vcmp.eq.s32.totalorder %v368, %v2560
        %vm2736 = vcmp.eq.s32.totalorder %v368, %v2574
        %vm2737 = vcmp.eq.s32.totalorder %v368, %v2588
        %vm2738 = vcmp.eq.s32.totalorder %v368, %v2602
        %vm2739 = vcmp.eq.s32.totalorder %v368, %v2616
        %vm2740 = vcmp.eq.s32.totalorder %v368, %v2630
        %vm2741 = vcmp.eq.s32.totalorder %v368, %v2644
        %vm2742 = vcmp.eq.s32.totalorder %v368, %v2658
        %vm2743 = vcmp.eq.s32.totalorder %v368, %v2672
        %vm2744 = vcmp.eq.s32.totalorder %v368, %v2686
        %vm2745 = vcmp.eq.s32.totalorder %v368, %v2700
        %vm2746 = vcmp.eq.s32.totalorder %v368, %v2714
        %v2747 = vsel %vm2715, 1, 0
        %v2748 = vsel %vm2716, 1, 0
        %v2749 = vsel %vm2717, 1, 0
        %v2750 = vsel %vm2718, 1, 0
        %v2751 = vsel %vm2719, 1, 0
        %v2752 = vsel %vm2720, 1, 0
        %v2753 = vsel %vm2721, 1, 0
        %v2754 = vsel %vm2722, 1, 0
        %v2755 = vsel %vm2723, 1, 0
        %v2756 = vsel %vm2724, 1, 0
        %v2757 = vsel %vm2725, 1, 0
        %v2758 = vsel %vm2726, 1, 0
        %v2759 = vsel %vm2727, 1, 0
        %v2760 = vsel %vm2728, 1, 0
        %v2761 = vsel %vm2729, 1, 0
        %v2762 = vsel %vm2730, 1, 0
        %v2763 = vsel %vm2731, 1, 0
        %v2764 = vsel %vm2732, 1, 0
        %v2765 = vsel %vm2733, 1, 0
        %v2766 = vsel %vm2734, 1, 0
        %v2767 = vsel %vm2735, 1, 0
        %v2768 = vsel %vm2736, 1, 0
        %v2769 = vsel %vm2737, 1, 0
        %v2770 = vsel %vm2738, 1, 0
        %v2771 = vsel %vm2739, 1, 0
        %v2772 = vsel %vm2740, 1, 0
        %v2773 = vsel %vm2741, 1, 0
        %v2774 = vsel %vm2742, 1, 0
        %v2775 = vsel %vm2743, 1, 0
        %v2776 = vsel %vm2744, 1, 0
        %v2777 = vsel %vm2745, 1, 0
        %v2778 = vsel %vm2746, 1, 0
        %v2779 = vcvt.s32.f32 %v2747
        %v2780 = vcvt.s32.f32 %v2748
        %v2781 = vcvt.s32.f32 %v2749
        %v2782 = vcvt.s32.f32 %v2750
        %v2783 = vcvt.s32.f32 %v2751
        %v2784 = vcvt.s32.f32 %v2752
        %v2785 = vcvt.s32.f32 %v2753
        %v2786 = vcvt.s32.f32 %v2754
        %v2787 = vcvt.s32.f32 %v2755
        %v2788 = vcvt.s32.f32 %v2756
        %v2789 = vcvt.s32.f32 %v2757
        %v2790 = vcvt.s32.f32 %v2758
        %v2791 = vcvt.s32.f32 %v2759
        %v2792 = vcvt.s32.f32 %v2760
        %v2793 = vcvt.s32.f32 %v2761
        %v2794 = vcvt.s32.f32 %v2762
        %v2795 = vcvt.s32.f32 %v2763
        %v2796 = vcvt.s32.f32 %v2764
        %v2797 = vcvt.s32.f32 %v2765
        %v2798 = vcvt.s32.f32 %v2766
        %v2799 = vcvt.s32.f32 %v2767
        %v2800 = vcvt.s32.f32 %v2768
        %v2801 = vcvt.s32.f32 %v2769
        %v2802 = vcvt.s32.f32 %v2770
        %v2803 = vcvt.s32.f32 %v2771
        %v2804 = vcvt.s32.f32 %v2772
        %v2805 = vcvt.s32.f32 %v2773
        %v2806 = vcvt.s32.f32 %v2774
        %v2807 = vcvt.s32.f32 %v2775
        %v2808 = vcvt.s32.f32 %v2776
        %v2809 = vcvt.s32.f32 %v2777
        %v2810 = vcvt.s32.f32 %v2778
        %2811 = vmatprep.subr.mxu0 0.0
        %2812 = vmatpush1.msra.mxu0 %v333
        %2813 = vmatprep.subr.mxu0 0.0
        %2814 = vmatpush1.msra.mxu0 %v332
        %2815 = vmatprep.subr.mxu0 0.0
        %2816 = vmatpush1.msra.mxu0 %v331
        %2817 = vmatprep.subr.mxu0 0.0
        %2818 = vmatpush1.msra.mxu0 %v330
        %2819 = vmatprep.subr.mxu0 0.0
        %2820 = vmatpush1.msra.mxu0 %v329
        %2821 = vmatprep.subr.mxu0 0.0
        %2822 = vmatpush1.msra.mxu0 %v328
        %2823 = vmatprep.subr.mxu0 0.0
        %2824 = vmatpush1.msra.mxu0 %v327
        %2825 = vmatprep.subr.mxu0 0.0
        %2826 = vmatpush1.msra.mxu0 %v326
        %2827 = vmatprep.subr.mxu0 0.0
        %2828 = vmatpush1.msra.mxu0 %v325
        %2829 = vmatprep.subr.mxu0 0.0
        %2830 = vmatpush1.msra.mxu0 %v324
        %2831 = vmatprep.subr.mxu0 0.0
        %2832 = vmatpush1.msra.mxu0 %v323
        %2833 = vmatprep.subr.mxu0 0.0
        %2834 = vmatpush1.msra.mxu0 %v322
        %2835 = vmatprep.subr.mxu0 0.0
        %2836 = vmatpush1.msra.mxu0 %v321
        %2837 = vmatprep.subr.mxu0 0.0
        %2838 = vmatpush1.msra.mxu0 %v320
        %2839 = vmatprep.subr.mxu0 0.0
        %2840 = vmatpush1.msra.mxu0 %v319
        %2841 = vmatprep.subr.mxu0 0.0
        %2842 = vmatpush1.msra.mxu0 %v318
        %2843 = vmatprep.subr.mxu0 0.0
        %2844 = vmatpush2.msra.mxu0 0.0
        %2845 = vmatprep.subr.mxu0 0.0
        %2846 = vmatpush2.msra.mxu0 0.0
        %2847 = vmatprep.subr.mxu0 0.0
        %2848 = vmatpush2.msra.mxu0 0.0
        %2849 = vmatprep.subr.mxu0 0.0
        %2850 = vmatpush2.msra.mxu0 0.0
        %2851 = vmatprep.subr.mxu0 0.0
        %2852 = vmatpush2.msra.mxu0 0.0
        %2853 = vmatprep.subr.mxu0 0.0
        %2854 = vmatpush2.msra.mxu0 0.0
        %2855 = vmatprep.subr.mxu0 0.0
        %2856 = vmatpush2.msra.mxu0 0.0
        %2857 = vmatprep.subr.mxu0 0.0
        %2858 = vmatpush2.msra.mxu0 0.0
        %2859 = vmatprep.subr.mxu0 0.0
        %2860 = vmatpush2.msra.mxu0 0.0
        %2861 = vmatprep.subr.mxu0 0.0
        %2862 = vmatpush2.msra.mxu0 0.0
        %2863 = vmatprep.subr.mxu0 0.0
        %2864 = vmatpush2.msra.mxu0 0.0
        %2865 = vmatprep.subr.mxu0 0.0
        %2866 = vmatpush2.msra.mxu0 0.0
        %2867 = vmatprep.subr.mxu0 0.0
        %2868 = vmatpush2.msra.mxu0 0.0
        %2869 = vmatprep.subr.mxu0 0.0
        %2870 = vmatpush2.msra.mxu0 0.0
        %2871 = vmatprep.subr.mxu0 0.0
        %2872 = vmatpush2.msra.mxu0 0.0
        %2873 = vmatprep.subr.mxu0 0.0
        %2874 = vmatpush2.msra.mxu0 0.0
        %2875 = vmatprep.mubr.f32.mxu0 0.0
        %2876 = vmatmul.mubr.f32.gmra.mxu0 %v2779
        %v2877 = vpop.f32.mrf.mxu0
        %v2878 = vadd.f32 0.0, %v2877
        %v2879 = vpop.f32.mrf.mxu0
        %2880 = vmatprep.mubr.f32.mxu0 0.0
        %2881 = vmatmul.mubr.f32.gmra.mxu0 %v2780
        %v2882 = vpop.f32.mrf.mxu0
        %v2883 = vadd.f32 0.0, %v2882
        %v2884 = vpop.f32.mrf.mxu0
        %2885 = vmatprep.mubr.f32.mxu0 0.0
        %2886 = vmatmul.mubr.f32.gmra.mxu0 %v2781
        %v2887 = vpop.f32.mrf.mxu0
        %v2888 = vadd.f32 0.0, %v2887
        %v2889 = vpop.f32.mrf.mxu0
        %2890 = vmatprep.mubr.f32.mxu0 0.0
        %2891 = vmatmul.mubr.f32.gmra.mxu0 %v2782
        %v2892 = vpop.f32.mrf.mxu0
        %v2893 = vadd.f32 0.0, %v2892
        %v2894 = vpop.f32.mrf.mxu0
        %2895 = vmatprep.mubr.f32.mxu0 0.0
        %2896 = vmatmul.mubr.f32.gmra.mxu0 %v2783
        %v2897 = vpop.f32.mrf.mxu0
        %v2898 = vadd.f32 0.0, %v2897
        %v2899 = vpop.f32.mrf.mxu0
        %2900 = vmatprep.mubr.f32.mxu0 0.0
        %2901 = vmatmul.mubr.f32.gmra.mxu0 %v2784
        %v2902 = vpop.f32.mrf.mxu0
        %v2903 = vadd.f32 0.0, %v2902
        %v2904 = vpop.f32.mrf.mxu0
        %2905 = vmatprep.mubr.f32.mxu0 0.0
        %2906 = vmatmul.mubr.f32.gmra.mxu0 %v2785
        %v2907 = vpop.f32.mrf.mxu0
        %v2908 = vadd.f32 0.0, %v2907
        %v2909 = vpop.f32.mrf.mxu0
        %2910 = vmatprep.mubr.f32.mxu0 0.0
        %2911 = vmatmul.mubr.f32.gmra.mxu0 %v2786
        %v2912 = vpop.f32.mrf.mxu0
        %v2913 = vadd.f32 0.0, %v2912
        %v2914 = vpop.f32.mrf.mxu0
        %2915 = vmatprep.mubr.f32.mxu0 0.0
        %2916 = vmatmul.mubr.f32.gmra.mxu0 %v2787
        %v2917 = vpop.f32.mrf.mxu0
        %v2918 = vadd.f32 0.0, %v2917
        %v2919 = vpop.f32.mrf.mxu0
        %2920 = vmatprep.mubr.f32.mxu0 0.0
        %2921 = vmatmul.mubr.f32.gmra.mxu0 %v2788
        %v2922 = vpop.f32.mrf.mxu0
        %v2923 = vadd.f32 0.0, %v2922
        %v2924 = vpop.f32.mrf.mxu0
        %2925 = vmatprep.mubr.f32.mxu0 0.0
        %2926 = vmatmul.mubr.f32.gmra.mxu0 %v2789
        %v2927 = vpop.f32.mrf.mxu0
        %v2928 = vadd.f32 0.0, %v2927
        %v2929 = vpop.f32.mrf.mxu0
        %2930 = vmatprep.mubr.f32.mxu0 0.0
        %2931 = vmatmul.mubr.f32.gmra.mxu0 %v2790
        %v2932 = vpop.f32.mrf.mxu0
        %v2933 = vadd.f32 0.0, %v2932
        %v2934 = vpop.f32.mrf.mxu0
        %2935 = vmatprep.mubr.f32.mxu0 0.0
        %2936 = vmatmul.mubr.f32.gmra.mxu0 %v2791
        %v2937 = vpop.f32.mrf.mxu0
        %v2938 = vadd.f32 0.0, %v2937
        %v2939 = vpop.f32.mrf.mxu0
        %2940 = vmatprep.mubr.f32.mxu0 0.0
        %2941 = vmatmul.mubr.f32.gmra.mxu0 %v2792
        %v2942 = vpop.f32.mrf.mxu0
        %v2943 = vadd.f32 0.0, %v2942
        %v2944 = vpop.f32.mrf.mxu0
        %2945 = vmatprep.mubr.f32.mxu0 0.0
        %2946 = vmatmul.mubr.f32.gmra.mxu0 %v2793
        %v2947 = vpop.f32.mrf.mxu0
        %v2948 = vadd.f32 0.0, %v2947
        %v2949 = vpop.f32.mrf.mxu0
        %2950 = vmatprep.mubr.f32.mxu0 0.0
        %2951 = vmatmul.mubr.f32.gmra.mxu0 %v2794
        %v2952 = vpop.f32.mrf.mxu0
        %v2953 = vadd.f32 0.0, %v2952
        %v2954 = vpop.f32.mrf.mxu0
        %2955 = vmatprep.mubr.f32.mxu0 0.0
        %2956 = vmatmul.mubr.f32.gmra.mxu0 %v2795
        %v2957 = vpop.f32.mrf.mxu0
        %v2958 = vadd.f32 0.0, %v2957
        %v2959 = vpop.f32.mrf.mxu0
        %2960 = vmatprep.mubr.f32.mxu0 0.0
        %2961 = vmatmul.mubr.f32.gmra.mxu0 %v2796
        %v2962 = vpop.f32.mrf.mxu0
        %v2963 = vadd.f32 0.0, %v2962
        %v2964 = vpop.f32.mrf.mxu0
        %2965 = vmatprep.mubr.f32.mxu0 0.0
        %2966 = vmatmul.mubr.f32.gmra.mxu0 %v2797
        %v2967 = vpop.f32.mrf.mxu0
        %v2968 = vadd.f32 0.0, %v2967
        %v2969 = vpop.f32.mrf.mxu0
        %2970 = vmatprep.mubr.f32.mxu0 0.0
        %2971 = vmatmul.mubr.f32.gmra.mxu0 %v2798
        %v2972 = vpop.f32.mrf.mxu0
        %v2973 = vadd.f32 0.0, %v2972
        %v2974 = vpop.f32.mrf.mxu0
        %2975 = vmatprep.mubr.f32.mxu0 0.0
        %2976 = vmatmul.mubr.f32.gmra.mxu0 %v2799
        %v2977 = vpop.f32.mrf.mxu0
        %v2978 = vadd.f32 0.0, %v2977
        %v2979 = vpop.f32.mrf.mxu0
        %2980 = vmatprep.mubr.f32.mxu0 0.0
        %2981 = vmatmul.mubr.f32.gmra.mxu0 %v2800
        %v2982 = vpop.f32.mrf.mxu0
        %v2983 = vadd.f32 0.0, %v2982
        %v2984 = vpop.f32.mrf.mxu0
        %2985 = vmatprep.mubr.f32.mxu0 0.0
        %2986 = vmatmul.mubr.f32.gmra.mxu0 %v2801
        %v2987 = vpop.f32.mrf.mxu0
        %v2988 = vadd.f32 0.0, %v2987
        %v2989 = vpop.f32.mrf.mxu0
        %2990 = vmatprep.mubr.f32.mxu0 0.0
        %2991 = vmatmul.mubr.f32.gmra.mxu0 %v2802
        %v2992 = vpop.f32.mrf.mxu0
        %v2993 = vadd.f32 0.0, %v2992
        %v2994 = vpop.f32.mrf.mxu0
        %2995 = vmatprep.mubr.f32.mxu0 0.0
        %2996 = vmatmul.mubr.f32.gmra.mxu0 %v2803
        %v2997 = vpop.f32.mrf.mxu0
        %v2998 = vadd.f32 0.0, %v2997
        %v2999 = vpop.f32.mrf.mxu0
        %3000 = vmatprep.mubr.f32.mxu0 0.0
        %3001 = vmatmul.mubr.f32.gmra.mxu0 %v2804
        %v3002 = vpop.f32.mrf.mxu0
        %v3003 = vadd.f32 0.0, %v3002
        %v3004 = vpop.f32.mrf.mxu0
        %3005 = vmatprep.mubr.f32.mxu0 0.0
        %3006 = vmatmul.mubr.f32.gmra.mxu0 %v2805
        %v3007 = vpop.f32.mrf.mxu0
        %v3008 = vadd.f32 0.0, %v3007
        %v3009 = vpop.f32.mrf.mxu0
        %3010 = vmatprep.mubr.f32.mxu0 0.0
        %3011 = vmatmul.mubr.f32.gmra.mxu0 %v2806
        %v3012 = vpop.f32.mrf.mxu0
        %v3013 = vadd.f32 0.0, %v3012
        %v3014 = vpop.f32.mrf.mxu0
        %3015 = vmatprep.mubr.f32.mxu0 0.0
        %3016 = vmatmul.mubr.f32.gmra.mxu0 %v2807
        %v3017 = vpop.f32.mrf.mxu0
        %v3018 = vadd.f32 0.0, %v3017
        %v3019 = vpop.f32.mrf.mxu0
        %3020 = vmatprep.mubr.f32.mxu0 0.0
        %3021 = vmatmul.mubr.f32.gmra.mxu0 %v2808
        %v3022 = vpop.f32.mrf.mxu0
        %v3023 = vadd.f32 0.0, %v3022
        %v3024 = vpop.f32.mrf.mxu0
        %3025 = vmatprep.mubr.f32.mxu0 0.0
        %3026 = vmatmul.mubr.f32.gmra.mxu0 %v2809
        %v3027 = vpop.f32.mrf.mxu0
        %v3028 = vadd.f32 0.0, %v3027
        %v3029 = vpop.f32.mrf.mxu0
        %3030 = vmatprep.mubr.f32.mxu0 0.0
        %3031 = vmatmul.mubr.f32.gmra.mxu0 %v2810
        %v3032 = vpop.f32.mrf.mxu0
        %v3033 = vadd.f32 0.0, %v3032
        %v3034 = vpop.f32.mrf.mxu0
        %3035 = vdwg.mxu0
        %v3036 = vsub.f32 %v1689, %v2878
        %v3037 = vsub.f32 %v1690, %v2883
        %v3038 = vsub.f32 %v1691, %v2888
        %v3039 = vsub.f32 %v1692, %v2893
        %v3040 = vsub.f32 %v1693, %v2898
        %v3041 = vsub.f32 %v1694, %v2903
        %v3042 = vsub.f32 %v1695, %v2908
        %v3043 = vsub.f32 %v1696, %v2913
        %v3044 = vsub.f32 %v1697, %v2918
        %v3045 = vsub.f32 %v1698, %v2923
        %v3046 = vsub.f32 %v1699, %v2928
        %v3047 = vsub.f32 %v1700, %v2933
        %v3048 = vsub.f32 %v1701, %v2938
        %v3049 = vsub.f32 %v1702, %v2943
        %v3050 = vsub.f32 %v1703, %v2948
        %v3051 = vsub.f32 %v1704, %v2953
        %v3052 = vsub.f32 %v1705, %v2958
        %v3053 = vsub.f32 %v1706, %v2963
        %v3054 = vsub.f32 %v1707, %v2968
        %v3055 = vsub.f32 %v1708, %v2973
        %v3056 = vsub.f32 %v1709, %v2978
        %v3057 = vsub.f32 %v1710, %v2983
        %v3058 = vsub.f32 %v1711, %v2988
        %v3059 = vsub.f32 %v1712, %v2993
        %v3060 = vsub.f32 %v1713, %v2998
        %v3061 = vsub.f32 %v1714, %v3003
        %v3062 = vsub.f32 %v1715, %v3008
        %v3063 = vsub.f32 %v1716, %v3013
        %v3064 = vsub.f32 %v1717, %v3018
        %v3065 = vsub.f32 %v1718, %v3023
        %v3066 = vsub.f32 %v1719, %v3028
        %v3067 = vsub.f32 %v1720, %v3033
        %v3068 = vmul.f32 %v3036, %v3036
        %v3069 = vmul.f32 %v3037, %v3037
        %v3070 = vmul.f32 %v3038, %v3038
        %v3071 = vmul.f32 %v3039, %v3039
        %v3072 = vmul.f32 %v3040, %v3040
        %v3073 = vmul.f32 %v3041, %v3041
        %v3074 = vmul.f32 %v3042, %v3042
        %v3075 = vmul.f32 %v3043, %v3043
        %v3076 = vmul.f32 %v3044, %v3044
        %v3077 = vmul.f32 %v3045, %v3045
        %v3078 = vmul.f32 %v3046, %v3046
        %v3079 = vmul.f32 %v3047, %v3047
        %v3080 = vmul.f32 %v3048, %v3048
        %v3081 = vmul.f32 %v3049, %v3049
        %v3082 = vmul.f32 %v3050, %v3050
        %v3083 = vmul.f32 %v3051, %v3051
        %v3084 = vmul.f32 %v3052, %v3052
        %v3085 = vmul.f32 %v3053, %v3053
        %v3086 = vmul.f32 %v3054, %v3054
        %v3087 = vmul.f32 %v3055, %v3055
        %v3088 = vmul.f32 %v3056, %v3056
        %v3089 = vmul.f32 %v3057, %v3057
        %v3090 = vmul.f32 %v3058, %v3058
        %v3091 = vmul.f32 %v3059, %v3059
        %v3092 = vmul.f32 %v3060, %v3060
        %v3093 = vmul.f32 %v3061, %v3061
        %v3094 = vmul.f32 %v3062, %v3062
        %v3095 = vmul.f32 %v3063, %v3063
        %v3096 = vmul.f32 %v3064, %v3064
        %v3097 = vmul.f32 %v3065, %v3065
        %v3098 = vmul.f32 %v3066, %v3066
        %v3099 = vmul.f32 %v3067, %v3067
        %3100 = vadd.xlane.f32.xlu0 %v3068
        %v3101 = vpop.xlane.xlu0 %3100
        %3102 = vadd.xlane.f32.xlu0 %v3069
        %v3103 = vpop.xlane.xlu0 %3102
        %3104 = vadd.xlane.f32.xlu0 %v3070
        %v3105 = vpop.xlane.xlu0 %3104
        %3106 = vadd.xlane.f32.xlu0 %v3071
        %v3107 = vpop.xlane.xlu0 %3106
        %3108 = vadd.xlane.f32.xlu0 %v3072
        %v3109 = vpop.xlane.xlu0 %3108
        %3110 = vadd.xlane.f32.xlu0 %v3073
        %v3111 = vpop.xlane.xlu0 %3110
        %3112 = vadd.xlane.f32.xlu0 %v3074
        %v3113 = vpop.xlane.xlu0 %3112
        %3114 = vadd.xlane.f32.xlu0 %v3075
        %v3115 = vpop.xlane.xlu0 %3114
        %3116 = vadd.xlane.f32.xlu0 %v3076
        %v3117 = vpop.xlane.xlu0 %3116
        %3118 = vadd.xlane.f32.xlu0 %v3077
        %v3119 = vpop.xlane.xlu0 %3118
        %3120 = vadd.xlane.f32.xlu0 %v3078
        %v3121 = vpop.xlane.xlu0 %3120
        %3122 = vadd.xlane.f32.xlu0 %v3079
        %v3123 = vpop.xlane.xlu0 %3122
        %3124 = vadd.xlane.f32.xlu0 %v3080
        %v3125 = vpop.xlane.xlu0 %3124
        %3126 = vadd.xlane.f32.xlu0 %v3081
        %v3127 = vpop.xlane.xlu0 %3126
        %3128 = vadd.xlane.f32.xlu0 %v3082
        %v3129 = vpop.xlane.xlu0 %3128
        %3130 = vadd.xlane.f32.xlu0 %v3083
        %v3131 = vpop.xlane.xlu0 %3130
        %3132 = vadd.xlane.f32.xlu0 %v3084
        %v3133 = vpop.xlane.xlu0 %3132
        %3134 = vadd.xlane.f32.xlu0 %v3085
        %v3135 = vpop.xlane.xlu0 %3134
        %3136 = vadd.xlane.f32.xlu0 %v3086
        %v3137 = vpop.xlane.xlu0 %3136
        %3138 = vadd.xlane.f32.xlu0 %v3087
        %v3139 = vpop.xlane.xlu0 %3138
        %3140 = vadd.xlane.f32.xlu0 %v3088
        %v3141 = vpop.xlane.xlu0 %3140
        %3142 = vadd.xlane.f32.xlu0 %v3089
        %v3143 = vpop.xlane.xlu0 %3142
        %3144 = vadd.xlane.f32.xlu0 %v3090
        %v3145 = vpop.xlane.xlu0 %3144
        %3146 = vadd.xlane.f32.xlu0 %v3091
        %v3147 = vpop.xlane.xlu0 %3146
        %3148 = vadd.xlane.f32.xlu0 %v3092
        %v3149 = vpop.xlane.xlu0 %3148
        %3150 = vadd.xlane.f32.xlu0 %v3093
        %v3151 = vpop.xlane.xlu0 %3150
        %3152 = vadd.xlane.f32.xlu0 %v3094
        %v3153 = vpop.xlane.xlu0 %3152
        %3154 = vadd.xlane.f32.xlu0 %v3095
        %v3155 = vpop.xlane.xlu0 %3154
        %3156 = vadd.xlane.f32.xlu0 %v3096
        %v3157 = vpop.xlane.xlu0 %3156
        %3158 = vadd.xlane.f32.xlu0 %v3097
        %v3159 = vpop.xlane.xlu0 %3158
        %3160 = vadd.xlane.f32.xlu0 %v3098
        %v3161 = vpop.xlane.xlu0 %3160
        %3162 = vadd.xlane.f32.xlu0 %v3099
        %v3163 = vpop.xlane.xlu0 %3162
        %3164 = vmatprep.subr.mxu0 0.0
        %3165 = vmatpush1.xpose.msra.mxu0 %v366
        %3166 = vmatprep.subr.mxu0 0.0
        %3167 = vmatpush1.xpose.msra.mxu0 %v365
        %3168 = vmatprep.subr.mxu0 0.0
        %3169 = vmatpush1.xpose.msra.mxu0 %v364
        %3170 = vmatprep.subr.mxu0 0.0
        %3171 = vmatpush1.xpose.msra.mxu0 %v363
        %3172 = vmatprep.subr.mxu0 0.0
        %3173 = vmatpush1.xpose.msra.mxu0 %v362
        %3174 = vmatprep.subr.mxu0 0.0
        %3175 = vmatpush1.xpose.msra.mxu0 %v361
        %3176 = vmatprep.subr.mxu0 0.0
        %3177 = vmatpush1.xpose.msra.mxu0 %v360
        %3178 = vmatprep.subr.mxu0 0.0
        %3179 = vmatpush1.xpose.msra.mxu0 %v359
        %3180 = vmatprep.subr.mxu0 0.0
        %3181 = vmatpush1.xpose.msra.mxu0 %v358
        %3182 = vmatprep.subr.mxu0 0.0
        %3183 = vmatpush1.xpose.msra.mxu0 %v357
        %3184 = vmatprep.subr.mxu0 0.0
        %3185 = vmatpush1.xpose.msra.mxu0 %v356
        %3186 = vmatprep.subr.mxu0 0.0
        %3187 = vmatpush1.xpose.msra.mxu0 %v355
        %3188 = vmatprep.subr.mxu0 0.0
        %3189 = vmatpush1.xpose.msra.mxu0 %v354
        %3190 = vmatprep.subr.mxu0 0.0
        %3191 = vmatpush1.xpose.msra.mxu0 %v353
        %3192 = vmatprep.subr.mxu0 0.0
        %3193 = vmatpush1.xpose.msra.mxu0 %v352
        %3194 = vmatprep.subr.mxu0 0.0
        %3195 = vmatpush1.xpose.msra.mxu0 %v351
        %3196 = vmatprep.subr.mxu0 0.0
        %3197 = vmatpush2.xpose.msra.mxu0 0.0
        %3198 = vmatprep.subr.mxu0 0.0
        %3199 = vmatpush2.xpose.msra.mxu0 0.0
        %3200 = vmatprep.subr.mxu0 0.0
        %3201 = vmatpush2.xpose.msra.mxu0 0.0
        %3202 = vmatprep.subr.mxu0 0.0
        %3203 = vmatpush2.xpose.msra.mxu0 0.0
        %3204 = vmatprep.subr.mxu0 0.0
        %3205 = vmatpush2.xpose.msra.mxu0 0.0
        %3206 = vmatprep.subr.mxu0 0.0
        %3207 = vmatpush2.xpose.msra.mxu0 0.0
        %3208 = vmatprep.subr.mxu0 0.0
        %3209 = vmatpush2.xpose.msra.mxu0 0.0
        %3210 = vmatprep.subr.mxu0 0.0
        %3211 = vmatpush2.xpose.msra.mxu0 0.0
        %3212 = vmatprep.subr.mxu0 0.0
        %3213 = vmatpush2.xpose.msra.mxu0 0.0
        %3214 = vmatprep.subr.mxu0 0.0
        %3215 = vmatpush2.xpose.msra.mxu0 0.0
        %3216 = vmatprep.subr.mxu0 0.0
        %3217 = vmatpush2.xpose.msra.mxu0 0.0
        %3218 = vmatprep.subr.mxu0 0.0
        %3219 = vmatpush2.xpose.msra.mxu0 0.0
        %3220 = vmatprep.subr.mxu0 0.0
        %3221 = vmatpush2.xpose.msra.mxu0 0.0
        %3222 = vmatprep.subr.mxu0 0.0
        %3223 = vmatpush2.xpose.msra.mxu0 0.0
        %3224 = vmatprep.subr.mxu0 0.0
        %3225 = vmatpush2.xpose.msra.mxu0 0.0
        %3226 = vmatprep.subr.mxu0 0.0
        %3227 = vmatpush2.xpose.msra.mxu0 0.0
        %3228 = vmatprep.mubr.f32.mxu0 0.0
        %3229 = vmatmul.mubr.f32.gmra.mxu0 %v3036
        %v3230 = vpop.f32.mrf.mxu0
        %v3231 = vadd.f32 0.0, %v3230
        %v3232 = vpop.f32.mrf.mxu0
        %3233 = vmatprep.mubr.f32.mxu0 0.0
        %3234 = vmatmul.mubr.f32.gmra.mxu0 %v3037
        %v3235 = vpop.f32.mrf.mxu0
        %v3236 = vadd.f32 0.0, %v3235
        %v3237 = vpop.f32.mrf.mxu0
        %3238 = vmatprep.mubr.f32.mxu0 0.0
        %3239 = vmatmul.mubr.f32.gmra.mxu0 %v3038
        %v3240 = vpop.f32.mrf.mxu0
        %v3241 = vadd.f32 0.0, %v3240
        %v3242 = vpop.f32.mrf.mxu0
        %3243 = vmatprep.mubr.f32.mxu0 0.0
        %3244 = vmatmul.mubr.f32.gmra.mxu0 %v3039
        %v3245 = vpop.f32.mrf.mxu0
        %v3246 = vadd.f32 0.0, %v3245
        %v3247 = vpop.f32.mrf.mxu0
        %3248 = vmatprep.mubr.f32.mxu0 0.0
        %3249 = vmatmul.mubr.f32.gmra.mxu0 %v3040
        %v3250 = vpop.f32.mrf.mxu0
        %v3251 = vadd.f32 0.0, %v3250
        %v3252 = vpop.f32.mrf.mxu0
        %3253 = vmatprep.mubr.f32.mxu0 0.0
        %3254 = vmatmul.mubr.f32.gmra.mxu0 %v3041
        %v3255 = vpop.f32.mrf.mxu0
        %v3256 = vadd.f32 0.0, %v3255
        %v3257 = vpop.f32.mrf.mxu0
        %3258 = vmatprep.mubr.f32.mxu0 0.0
        %3259 = vmatmul.mubr.f32.gmra.mxu0 %v3042
        %v3260 = vpop.f32.mrf.mxu0
        %v3261 = vadd.f32 0.0, %v3260
        %v3262 = vpop.f32.mrf.mxu0
        %3263 = vmatprep.mubr.f32.mxu0 0.0
        %3264 = vmatmul.mubr.f32.gmra.mxu0 %v3043
        %v3265 = vpop.f32.mrf.mxu0
        %v3266 = vadd.f32 0.0, %v3265
        %v3267 = vpop.f32.mrf.mxu0
        %3268 = vmatprep.mubr.f32.mxu0 0.0
        %3269 = vmatmul.mubr.f32.gmra.mxu0 %v3044
        %v3270 = vpop.f32.mrf.mxu0
        %v3271 = vadd.f32 0.0, %v3270
        %v3272 = vpop.f32.mrf.mxu0
        %3273 = vmatprep.mubr.f32.mxu0 0.0
        %3274 = vmatmul.mubr.f32.gmra.mxu0 %v3045
        %v3275 = vpop.f32.mrf.mxu0
        %v3276 = vadd.f32 0.0, %v3275
        %v3277 = vpop.f32.mrf.mxu0
        %3278 = vmatprep.mubr.f32.mxu0 0.0
        %3279 = vmatmul.mubr.f32.gmra.mxu0 %v3046
        %v3280 = vpop.f32.mrf.mxu0
        %v3281 = vadd.f32 0.0, %v3280
        %v3282 = vpop.f32.mrf.mxu0
        %3283 = vmatprep.mubr.f32.mxu0 0.0
        %3284 = vmatmul.mubr.f32.gmra.mxu0 %v3047
        %v3285 = vpop.f32.mrf.mxu0
        %v3286 = vadd.f32 0.0, %v3285
        %v3287 = vpop.f32.mrf.mxu0
        %3288 = vmatprep.mubr.f32.mxu0 0.0
        %3289 = vmatmul.mubr.f32.gmra.mxu0 %v3048
        %v3290 = vpop.f32.mrf.mxu0
        %v3291 = vadd.f32 0.0, %v3290
        %v3292 = vpop.f32.mrf.mxu0
        %3293 = vmatprep.mubr.f32.mxu0 0.0
        %3294 = vmatmul.mubr.f32.gmra.mxu0 %v3049
        %v3295 = vpop.f32.mrf.mxu0
        %v3296 = vadd.f32 0.0, %v3295
        %v3297 = vpop.f32.mrf.mxu0
        %3298 = vmatprep.mubr.f32.mxu0 0.0
        %3299 = vmatmul.mubr.f32.gmra.mxu0 %v3050
        %v3300 = vpop.f32.mrf.mxu0
        %v3301 = vadd.f32 0.0, %v3300
        %v3302 = vpop.f32.mrf.mxu0
        %3303 = vmatprep.mubr.f32.mxu0 0.0
        %3304 = vmatmul.mubr.f32.gmra.mxu0 %v3051
        %v3305 = vpop.f32.mrf.mxu0
        %v3306 = vadd.f32 0.0, %v3305
        %v3307 = vpop.f32.mrf.mxu0
        %3308 = vmatprep.mubr.f32.mxu0 0.0
        %3309 = vmatmul.mubr.f32.gmra.mxu0 %v3052
        %v3310 = vpop.f32.mrf.mxu0
        %v3311 = vadd.f32 0.0, %v3310
        %v3312 = vpop.f32.mrf.mxu0
        %3313 = vmatprep.mubr.f32.mxu0 0.0
        %3314 = vmatmul.mubr.f32.gmra.mxu0 %v3053
        %v3315 = vpop.f32.mrf.mxu0
        %v3316 = vadd.f32 0.0, %v3315
        %v3317 = vpop.f32.mrf.mxu0
        %3318 = vmatprep.mubr.f32.mxu0 0.0
        %3319 = vmatmul.mubr.f32.gmra.mxu0 %v3054
        %v3320 = vpop.f32.mrf.mxu0
        %v3321 = vadd.f32 0.0, %v3320
        %v3322 = vpop.f32.mrf.mxu0
        %3323 = vmatprep.mubr.f32.mxu0 0.0
        %3324 = vmatmul.mubr.f32.gmra.mxu0 %v3055
        %v3325 = vpop.f32.mrf.mxu0
        %v3326 = vadd.f32 0.0, %v3325
        %v3327 = vpop.f32.mrf.mxu0
        %3328 = vmatprep.mubr.f32.mxu0 0.0
        %3329 = vmatmul.mubr.f32.gmra.mxu0 %v3056
        %v3330 = vpop.f32.mrf.mxu0
        %v3331 = vadd.f32 0.0, %v3330
        %v3332 = vpop.f32.mrf.mxu0
        %3333 = vmatprep.mubr.f32.mxu0 0.0
        %3334 = vmatmul.mubr.f32.gmra.mxu0 %v3057
        %v3335 = vpop.f32.mrf.mxu0
        %v3336 = vadd.f32 0.0, %v3335
        %v3337 = vpop.f32.mrf.mxu0
        %3338 = vmatprep.mubr.f32.mxu0 0.0
        %3339 = vmatmul.mubr.f32.gmra.mxu0 %v3058
        %v3340 = vpop.f32.mrf.mxu0
        %v3341 = vadd.f32 0.0, %v3340
        %v3342 = vpop.f32.mrf.mxu0
        %3343 = vmatprep.mubr.f32.mxu0 0.0
        %3344 = vmatmul.mubr.f32.gmra.mxu0 %v3059
        %v3345 = vpop.f32.mrf.mxu0
        %v3346 = vadd.f32 0.0, %v3345
        %v3347 = vpop.f32.mrf.mxu0
        %3348 = vmatprep.mubr.f32.mxu0 0.0
        %3349 = vmatmul.mubr.f32.gmra.mxu0 %v3060
        %v3350 = vpop.f32.mrf.mxu0
        %v3351 = vadd.f32 0.0, %v3350
        %v3352 = vpop.f32.mrf.mxu0
        %3353 = vmatprep.mubr.f32.mxu0 0.0
        %3354 = vmatmul.mubr.f32.gmra.mxu0 %v3061
        %v3355 = vpop.f32.mrf.mxu0
        %v3356 = vadd.f32 0.0, %v3355
        %v3357 = vpop.f32.mrf.mxu0
        %3358 = vmatprep.mubr.f32.mxu0 0.0
        %3359 = vmatmul.mubr.f32.gmra.mxu0 %v3062
        %v3360 = vpop.f32.mrf.mxu0
        %v3361 = vadd.f32 0.0, %v3360
        %v3362 = vpop.f32.mrf.mxu0
        %3363 = vmatprep.mubr.f32.mxu0 0.0
        %3364 = vmatmul.mubr.f32.gmra.mxu0 %v3063
        %v3365 = vpop.f32.mrf.mxu0
        %v3366 = vadd.f32 0.0, %v3365
        %v3367 = vpop.f32.mrf.mxu0
        %3368 = vmatprep.mubr.f32.mxu0 0.0
        %3369 = vmatmul.mubr.f32.gmra.mxu0 %v3064
        %v3370 = vpop.f32.mrf.mxu0
        %v3371 = vadd.f32 0.0, %v3370
        %v3372 = vpop.f32.mrf.mxu0
        %3373 = vmatprep.mubr.f32.mxu0 0.0
        %3374 = vmatmul.mubr.f32.gmra.mxu0 %v3065
        %v3375 = vpop.f32.mrf.mxu0
        %v3376 = vadd.f32 0.0, %v3375
        %v3377 = vpop.f32.mrf.mxu0
        %3378 = vmatprep.mubr.f32.mxu0 0.0
        %3379 = vmatmul.mubr.f32.gmra.mxu0 %v3066
        %v3380 = vpop.f32.mrf.mxu0
        %v3381 = vadd.f32 0.0, %v3380
        %v3382 = vpop.f32.mrf.mxu0
        %3383 = vmatprep.mubr.f32.mxu0 0.0
        %3384 = vmatmul.mubr.f32.gmra.mxu0 %v3067
        %v3385 = vpop.f32.mrf.mxu0
        %v3386 = vadd.f32 0.0, %v3385
        %v3387 = vpop.f32.mrf.mxu0
        %3388 = vdwg.mxu0
        %v3389 = vadd.f32 %v3101, %v694
        %v3390 = vadd.f32 %v3103, %v694
        %v3391 = vadd.f32 %v3105, %v694
        %v3392 = vadd.f32 %v3107, %v694
        %v3393 = vadd.f32 %v3109, %v694
        %v3394 = vadd.f32 %v3111, %v694
        %v3395 = vadd.f32 %v3113, %v694
        %v3396 = vadd.f32 %v3115, %v694
        %v3397 = vadd.f32 %v3117, %v694
        %v3398 = vadd.f32 %v3119, %v694
        %v3399 = vadd.f32 %v3121, %v694
        %v3400 = vadd.f32 %v3123, %v694
        %v3401 = vadd.f32 %v3125, %v694
        %v3402 = vadd.f32 %v3127, %v694
        %v3403 = vadd.f32 %v3129, %v694
        %v3404 = vadd.f32 %v3131, %v694
        %v3405 = vadd.f32 %v3133, %v694
        %v3406 = vadd.f32 %v3135, %v694
        %v3407 = vadd.f32 %v3137, %v694
        %v3408 = vadd.f32 %v3139, %v694
        %v3409 = vadd.f32 %v3141, %v694
        %v3410 = vadd.f32 %v3143, %v694
        %v3411 = vadd.f32 %v3145, %v694
        %v3412 = vadd.f32 %v3147, %v694
        %v3413 = vadd.f32 %v3149, %v694
        %v3414 = vadd.f32 %v3151, %v694
        %v3415 = vadd.f32 %v3153, %v694
        %v3416 = vadd.f32 %v3155, %v694
        %v3417 = vadd.f32 %v3157, %v694
        %v3418 = vadd.f32 %v3159, %v694
        %v3419 = vadd.f32 %v3161, %v694
        %v3420 = vadd.f32 %v3163, %v694
        %v3421 = vadd.f32 %v3389, %v3231
        %v3422 = vadd.f32 %v3390, %v3236
        %v3423 = vadd.f32 %v3391, %v3241
        %v3424 = vadd.f32 %v3392, %v3246
        %v3425 = vadd.f32 %v3393, %v3251
        %v3426 = vadd.f32 %v3394, %v3256
        %v3427 = vadd.f32 %v3395, %v3261
        %v3428 = vadd.f32 %v3396, %v3266
        %v3429 = vadd.f32 %v3397, %v3271
        %v3430 = vadd.f32 %v3398, %v3276
        %v3431 = vadd.f32 %v3399, %v3281
        %v3432 = vadd.f32 %v3400, %v3286
        %v3433 = vadd.f32 %v3401, %v3291
        %v3434 = vadd.f32 %v3402, %v3296
        %v3435 = vadd.f32 %v3403, %v3301
        %v3436 = vadd.f32 %v3404, %v3306
        %v3437 = vadd.f32 %v3405, %v3311
        %v3438 = vadd.f32 %v3406, %v3316
        %v3439 = vadd.f32 %v3407, %v3321
        %v3440 = vadd.f32 %v3408, %v3326
        %v3441 = vadd.f32 %v3409, %v3331
        %v3442 = vadd.f32 %v3410, %v3336
        %v3443 = vadd.f32 %v3411, %v3341
        %v3444 = vadd.f32 %v3412, %v3346
        %v3445 = vadd.f32 %v3413, %v3351
        %v3446 = vadd.f32 %v3414, %v3356
        %v3447 = vadd.f32 %v3415, %v3361
        %v3448 = vadd.f32 %v3416, %v3366
        %v3449 = vadd.f32 %v3417, %v3371
        %v3450 = vadd.f32 %v3418, %v3376
        %v3451 = vadd.f32 %v3419, %v3381
        %v3452 = vadd.f32 %v3420, %v3386
        %s3453 = scalar_lea.vmem %s282, 512 [#allocation9]
        %3454 = vst [vmem:[%s3453] sm:$0xff] %v3421
        %3455 = vst [vmem:[%s3453 + $0x8] sm:$0xff] %v3422
        %3456 = vst [vmem:[%s3453 + $0x10] sm:$0xff] %v3423
        %3457 = vst [vmem:[%s3453 + $0x18] sm:$0xff] %v3424
        %3458 = vst [vmem:[%s3453 + $0x20] sm:$0xff] %v3425
        %3459 = vst [vmem:[%s3453 + $0x28] sm:$0xff] %v3426
        %3460 = vst [vmem:[%s3453 + $0x30] sm:$0xff] %v3427
        %3461 = vst [vmem:[%s3453 + $0x38] sm:$0xff] %v3428
        %3462 = vst [vmem:[%s3453 + $0x40] sm:$0xff] %v3429
        %3463 = vst [vmem:[%s3453 + $0x48] sm:$0xff] %v3430
        %3464 = vst [vmem:[%s3453 + $0x50] sm:$0xff] %v3431
        %3465 = vst [vmem:[%s3453 + $0x58] sm:$0xff] %v3432
        %3466 = vst [vmem:[%s3453 + $0x60] sm:$0xff] %v3433
        %3467 = vst [vmem:[%s3453 + $0x68] sm:$0xff] %v3434
        %3468 = vst [vmem:[%s3453 + $0x70] sm:$0xff] %v3435
        %3469 = vst [vmem:[%s3453 + $0x78] sm:$0xff] %v3436
        %3470 = vst [vmem:[%s3453 + $0x80] sm:$0xff] %v3437
        %3471 = vst [vmem:[%s3453 + $0x88] sm:$0xff] %v3438
        %3472 = vst [vmem:[%s3453 + $0x90] sm:$0xff] %v3439
        %3473 = vst [vmem:[%s3453 + $0x98] sm:$0xff] %v3440
        %3474 = vst [vmem:[%s3453 + $0xa0] sm:$0xff] %v3441
        %3475 = vst [vmem:[%s3453 + $0xa8] sm:$0xff] %v3442
        %3476 = vst [vmem:[%s3453 + $0xb0] sm:$0xff] %v3443
        %3477 = vst [vmem:[%s3453 + $0xb8] sm:$0xff] %v3444
        %3478 = vst [vmem:[%s3453 + $0xc0] sm:$0xff] %v3445
        %3479 = vst [vmem:[%s3453 + $0xc8] sm:$0xff] %v3446
        %3480 = vst [vmem:[%s3453 + $0xd0] sm:$0xff] %v3447
        %3481 = vst [vmem:[%s3453 + $0xd8] sm:$0xff] %v3448
        %3482 = vst [vmem:[%s3453 + $0xe0] sm:$0xff] %v3449
        %3483 = vst [vmem:[%s3453 + $0xe8] sm:$0xff] %v3450
        %3484 = vst [vmem:[%s3453 + $0xf0] sm:$0xff] %v3451
        %3485 = vst [vmem:[%s3453 + $0xf8] sm:$0xff] %v3452
        %3486 = vmin.xlane.f32.xlu0 %v3421
        %v3487 = vpop.xlane.xlu0 %3486
        %3488 = vmin.xlane.f32.xlu0 %v3422
        %v3489 = vpop.xlane.xlu0 %3488
        %3490 = vmin.xlane.f32.xlu0 %v3423
        %v3491 = vpop.xlane.xlu0 %3490
        %3492 = vmin.xlane.f32.xlu0 %v3424
        %v3493 = vpop.xlane.xlu0 %3492
        %3494 = vmin.xlane.f32.xlu0 %v3425
        %v3495 = vpop.xlane.xlu0 %3494
        %3496 = vmin.xlane.f32.xlu0 %v3426
        %v3497 = vpop.xlane.xlu0 %3496
        %3498 = vmin.xlane.f32.xlu0 %v3427
        %v3499 = vpop.xlane.xlu0 %3498
        %3500 = vmin.xlane.f32.xlu0 %v3428
        %v3501 = vpop.xlane.xlu0 %3500
        %3502 = vmin.xlane.f32.xlu0 %v3429
        %v3503 = vpop.xlane.xlu0 %3502
        %3504 = vmin.xlane.f32.xlu0 %v3430
        %v3505 = vpop.xlane.xlu0 %3504
        %3506 = vmin.xlane.f32.xlu0 %v3431
        %v3507 = vpop.xlane.xlu0 %3506
        %3508 = vmin.xlane.f32.xlu0 %v3432
        %v3509 = vpop.xlane.xlu0 %3508
        %3510 = vmin.xlane.f32.xlu0 %v3433
        %v3511 = vpop.xlane.xlu0 %3510
        %3512 = vmin.xlane.f32.xlu0 %v3434
        %v3513 = vpop.xlane.xlu0 %3512
        %3514 = vmin.xlane.f32.xlu0 %v3435
        %v3515 = vpop.xlane.xlu0 %3514
        %3516 = vmin.xlane.f32.xlu0 %v3436
        %v3517 = vpop.xlane.xlu0 %3516
        %3518 = vmin.xlane.f32.xlu0 %v3437
        %v3519 = vpop.xlane.xlu0 %3518
        %3520 = vmin.xlane.f32.xlu0 %v3438
        %v3521 = vpop.xlane.xlu0 %3520
        %3522 = vmin.xlane.f32.xlu0 %v3439
        %v3523 = vpop.xlane.xlu0 %3522
        %3524 = vmin.xlane.f32.xlu0 %v3440
        %v3525 = vpop.xlane.xlu0 %3524
        %3526 = vmin.xlane.f32.xlu0 %v3441
        %v3527 = vpop.xlane.xlu0 %3526
        %3528 = vmin.xlane.f32.xlu0 %v3442
        %v3529 = vpop.xlane.xlu0 %3528
        %3530 = vmin.xlane.f32.xlu0 %v3443
        %v3531 = vpop.xlane.xlu0 %3530
        %3532 = vmin.xlane.f32.xlu0 %v3444
        %v3533 = vpop.xlane.xlu0 %3532
        %3534 = vmin.xlane.f32.xlu0 %v3445
        %v3535 = vpop.xlane.xlu0 %3534
        %3536 = vmin.xlane.f32.xlu0 %v3446
        %v3537 = vpop.xlane.xlu0 %3536
        %3538 = vmin.xlane.f32.xlu0 %v3447
        %v3539 = vpop.xlane.xlu0 %3538
        %3540 = vmin.xlane.f32.xlu0 %v3448
        %v3541 = vpop.xlane.xlu0 %3540
        %3542 = vmin.xlane.f32.xlu0 %v3449
        %v3543 = vpop.xlane.xlu0 %3542
        %3544 = vmin.xlane.f32.xlu0 %v3450
        %v3545 = vpop.xlane.xlu0 %3544
        %3546 = vmin.xlane.f32.xlu0 %v3451
        %v3547 = vpop.xlane.xlu0 %3546
        %3548 = vmin.xlane.f32.xlu0 %v3452
        %v3549 = vpop.xlane.xlu0 %3548
        %vm3550 = vcmp.eq.f32.partialorder %v3421, %v3487
        %vm3551 = vcmp.eq.f32.partialorder %v3422, %v3489
        %vm3552 = vcmp.eq.f32.partialorder %v3423, %v3491
        %vm3553 = vcmp.eq.f32.partialorder %v3424, %v3493
        %vm3554 = vcmp.eq.f32.partialorder %v3425, %v3495
        %vm3555 = vcmp.eq.f32.partialorder %v3426, %v3497
        %vm3556 = vcmp.eq.f32.partialorder %v3427, %v3499
        %vm3557 = vcmp.eq.f32.partialorder %v3428, %v3501
        %vm3558 = vcmp.eq.f32.partialorder %v3429, %v3503
        %vm3559 = vcmp.eq.f32.partialorder %v3430, %v3505
        %vm3560 = vcmp.eq.f32.partialorder %v3431, %v3507
        %vm3561 = vcmp.eq.f32.partialorder %v3432, %v3509
        %vm3562 = vcmp.eq.f32.partialorder %v3433, %v3511
        %vm3563 = vcmp.eq.f32.partialorder %v3434, %v3513
        %vm3564 = vcmp.eq.f32.partialorder %v3435, %v3515
        %vm3565 = vcmp.eq.f32.partialorder %v3436, %v3517
        %vm3566 = vcmp.eq.f32.partialorder %v3437, %v3519
        %vm3567 = vcmp.eq.f32.partialorder %v3438, %v3521
        %vm3568 = vcmp.eq.f32.partialorder %v3439, %v3523
        %vm3569 = vcmp.eq.f32.partialorder %v3440, %v3525
        %vm3570 = vcmp.eq.f32.partialorder %v3441, %v3527
        %vm3571 = vcmp.eq.f32.partialorder %v3442, %v3529
        %vm3572 = vcmp.eq.f32.partialorder %v3443, %v3531
        %vm3573 = vcmp.eq.f32.partialorder %v3444, %v3533
        %vm3574 = vcmp.eq.f32.partialorder %v3445, %v3535
        %vm3575 = vcmp.eq.f32.partialorder %v3446, %v3537
        %vm3576 = vcmp.eq.f32.partialorder %v3447, %v3539
        %vm3577 = vcmp.eq.f32.partialorder %v3448, %v3541
        %vm3578 = vcmp.eq.f32.partialorder %v3449, %v3543
        %vm3579 = vcmp.eq.f32.partialorder %v3450, %v3545
        %vm3580 = vcmp.eq.f32.partialorder %v3451, %v3547
        %vm3581 = vcmp.eq.f32.partialorder %v3452, %v3549
        %v3582 = vsel %vm3550, %v368, 128
        %v3583 = vsel %vm3551, %v368, 128
        %v3584 = vsel %vm3552, %v368, 128
        %v3585 = vsel %vm3553, %v368, 128
        %v3586 = vsel %vm3554, %v368, 128
        %v3587 = vsel %vm3555, %v368, 128
        %v3588 = vsel %vm3556, %v368, 128
        %v3589 = vsel %vm3557, %v368, 128
        %v3590 = vsel %vm3558, %v368, 128
        %v3591 = vsel %vm3559, %v368, 128
        %v3592 = vsel %vm3560, %v368, 128
        %v3593 = vsel %vm3561, %v368, 128
        %v3594 = vsel %vm3562, %v368, 128
        %v3595 = vsel %vm3563, %v368, 128
        %v3596 = vsel %vm3564, %v368, 128
        %v3597 = vsel %vm3565, %v368, 128
        %v3598 = vsel %vm3566, %v368, 128
        %v3599 = vsel %vm3567, %v368, 128
        %v3600 = vsel %vm3568, %v368, 128
        %v3601 = vsel %vm3569, %v368, 128
        %v3602 = vsel %vm3570, %v368, 128
        %v3603 = vsel %vm3571, %v368, 128
        %v3604 = vsel %vm3572, %v368, 128
        %v3605 = vsel %vm3573, %v368, 128
        %v3606 = vsel %vm3574, %v368, 128
        %v3607 = vsel %vm3575, %v368, 128
        %v3608 = vsel %vm3576, %v368, 128
        %v3609 = vsel %vm3577, %v368, 128
        %v3610 = vsel %vm3578, %v368, 128
        %v3611 = vsel %vm3579, %v368, 128
        %v3612 = vsel %vm3580, %v368, 128
        %v3613 = vsel %vm3581, %v368, 128
        %v3614 = vand.u32 %v3582, 65535
        %v3615 = vshra.s32 %v3582, 16
        %v3616 = vcvt.s32.f32 %v3614
        %v3617 = vcvt.s32.f32 %v3615
        %3618 = vmin.xlane.f32.xlu0 %v3617
        %v3619 = vpop.xlane.xlu0 %3618
        %vm3620 = vcmp.eq.f32.partialorder %v3617, %v3619
        %v3621 = vsel %vm3620, %v3616, inf
        %3622 = vmin.xlane.f32.xlu0 %v3621
        %v3623 = vpop.xlane.xlu0 %3622
        %v3624 = vcvt.f32.s32 %v3623
        %v3625 = vcvt.f32.s32 %v3619
        %v3626 = vshll.u32 %v3625, 16
        %v3627 = vadd.s32 %v3626, %v3624
        %v3628 = vand.u32 %v3583, 65535
        %v3629 = vshra.s32 %v3583, 16
        %v3630 = vcvt.s32.f32 %v3628
        %v3631 = vcvt.s32.f32 %v3629
        %3632 = vmin.xlane.f32.xlu0 %v3631
        %v3633 = vpop.xlane.xlu0 %3632
        %vm3634 = vcmp.eq.f32.partialorder %v3631, %v3633
        %v3635 = vsel %vm3634, %v3630, inf
        %3636 = vmin.xlane.f32.xlu0 %v3635
        %v3637 = vpop.xlane.xlu0 %3636
        %v3638 = vcvt.f32.s32 %v3637
        %v3639 = vcvt.f32.s32 %v3633
        %v3640 = vshll.u32 %v3639, 16
        %v3641 = vadd.s32 %v3640, %v3638
        %v3642 = vand.u32 %v3584, 65535
        %v3643 = vshra.s32 %v3584, 16
        %v3644 = vcvt.s32.f32 %v3642
        %v3645 = vcvt.s32.f32 %v3643
        %3646 = vmin.xlane.f32.xlu0 %v3645
        %v3647 = vpop.xlane.xlu0 %3646
        %vm3648 = vcmp.eq.f32.partialorder %v3645, %v3647
        %v3649 = vsel %vm3648, %v3644, inf
        %3650 = vmin.xlane.f32.xlu0 %v3649
        %v3651 = vpop.xlane.xlu0 %3650
        %v3652 = vcvt.f32.s32 %v3651
        %v3653 = vcvt.f32.s32 %v3647
        %v3654 = vshll.u32 %v3653, 16
        %v3655 = vadd.s32 %v3654, %v3652
        %v3656 = vand.u32 %v3585, 65535
        %v3657 = vshra.s32 %v3585, 16
        %v3658 = vcvt.s32.f32 %v3656
        %v3659 = vcvt.s32.f32 %v3657
        %3660 = vmin.xlane.f32.xlu0 %v3659
        %v3661 = vpop.xlane.xlu0 %3660
        %vm3662 = vcmp.eq.f32.partialorder %v3659, %v3661
        %v3663 = vsel %vm3662, %v3658, inf
        %3664 = vmin.xlane.f32.xlu0 %v3663
        %v3665 = vpop.xlane.xlu0 %3664
        %v3666 = vcvt.f32.s32 %v3665
        %v3667 = vcvt.f32.s32 %v3661
        %v3668 = vshll.u32 %v3667, 16
        %v3669 = vadd.s32 %v3668, %v3666
        %v3670 = vand.u32 %v3586, 65535
        %v3671 = vshra.s32 %v3586, 16
        %v3672 = vcvt.s32.f32 %v3670
        %v3673 = vcvt.s32.f32 %v3671
        %3674 = vmin.xlane.f32.xlu0 %v3673
        %v3675 = vpop.xlane.xlu0 %3674
        %vm3676 = vcmp.eq.f32.partialorder %v3673, %v3675
        %v3677 = vsel %vm3676, %v3672, inf
        %3678 = vmin.xlane.f32.xlu0 %v3677
        %v3679 = vpop.xlane.xlu0 %3678
        %v3680 = vcvt.f32.s32 %v3679
        %v3681 = vcvt.f32.s32 %v3675
        %v3682 = vshll.u32 %v3681, 16
        %v3683 = vadd.s32 %v3682, %v3680
        %v3684 = vand.u32 %v3587, 65535
        %v3685 = vshra.s32 %v3587, 16
        %v3686 = vcvt.s32.f32 %v3684
        %v3687 = vcvt.s32.f32 %v3685
        %3688 = vmin.xlane.f32.xlu0 %v3687
        %v3689 = vpop.xlane.xlu0 %3688
        %vm3690 = vcmp.eq.f32.partialorder %v3687, %v3689
        %v3691 = vsel %vm3690, %v3686, inf
        %3692 = vmin.xlane.f32.xlu0 %v3691
        %v3693 = vpop.xlane.xlu0 %3692
        %v3694 = vcvt.f32.s32 %v3693
        %v3695 = vcvt.f32.s32 %v3689
        %v3696 = vshll.u32 %v3695, 16
        %v3697 = vadd.s32 %v3696, %v3694
        %v3698 = vand.u32 %v3588, 65535
        %v3699 = vshra.s32 %v3588, 16
        %v3700 = vcvt.s32.f32 %v3698
        %v3701 = vcvt.s32.f32 %v3699
        %3702 = vmin.xlane.f32.xlu0 %v3701
        %v3703 = vpop.xlane.xlu0 %3702
        %vm3704 = vcmp.eq.f32.partialorder %v3701, %v3703
        %v3705 = vsel %vm3704, %v3700, inf
        %3706 = vmin.xlane.f32.xlu0 %v3705
        %v3707 = vpop.xlane.xlu0 %3706
        %v3708 = vcvt.f32.s32 %v3707
        %v3709 = vcvt.f32.s32 %v3703
        %v3710 = vshll.u32 %v3709, 16
        %v3711 = vadd.s32 %v3710, %v3708
        %v3712 = vand.u32 %v3589, 65535
        %v3713 = vshra.s32 %v3589, 16
        %v3714 = vcvt.s32.f32 %v3712
        %v3715 = vcvt.s32.f32 %v3713
        %3716 = vmin.xlane.f32.xlu0 %v3715
        %v3717 = vpop.xlane.xlu0 %3716
        %vm3718 = vcmp.eq.f32.partialorder %v3715, %v3717
        %v3719 = vsel %vm3718, %v3714, inf
        %3720 = vmin.xlane.f32.xlu0 %v3719
        %v3721 = vpop.xlane.xlu0 %3720
        %v3722 = vcvt.f32.s32 %v3721
        %v3723 = vcvt.f32.s32 %v3717
        %v3724 = vshll.u32 %v3723, 16
        %v3725 = vadd.s32 %v3724, %v3722
        %v3726 = vand.u32 %v3590, 65535
        %v3727 = vshra.s32 %v3590, 16
        %v3728 = vcvt.s32.f32 %v3726
        %v3729 = vcvt.s32.f32 %v3727
        %3730 = vmin.xlane.f32.xlu0 %v3729
        %v3731 = vpop.xlane.xlu0 %3730
        %vm3732 = vcmp.eq.f32.partialorder %v3729, %v3731
        %v3733 = vsel %vm3732, %v3728, inf
        %3734 = vmin.xlane.f32.xlu0 %v3733
        %v3735 = vpop.xlane.xlu0 %3734
        %v3736 = vcvt.f32.s32 %v3735
        %v3737 = vcvt.f32.s32 %v3731
        %v3738 = vshll.u32 %v3737, 16
        %v3739 = vadd.s32 %v3738, %v3736
        %v3740 = vand.u32 %v3591, 65535
        %v3741 = vshra.s32 %v3591, 16
        %v3742 = vcvt.s32.f32 %v3740
        %v3743 = vcvt.s32.f32 %v3741
        %3744 = vmin.xlane.f32.xlu0 %v3743
        %v3745 = vpop.xlane.xlu0 %3744
        %vm3746 = vcmp.eq.f32.partialorder %v3743, %v3745
        %v3747 = vsel %vm3746, %v3742, inf
        %3748 = vmin.xlane.f32.xlu0 %v3747
        %v3749 = vpop.xlane.xlu0 %3748
        %v3750 = vcvt.f32.s32 %v3749
        %v3751 = vcvt.f32.s32 %v3745
        %v3752 = vshll.u32 %v3751, 16
        %v3753 = vadd.s32 %v3752, %v3750
        %v3754 = vand.u32 %v3592, 65535
        %v3755 = vshra.s32 %v3592, 16
        %v3756 = vcvt.s32.f32 %v3754
        %v3757 = vcvt.s32.f32 %v3755
        %3758 = vmin.xlane.f32.xlu0 %v3757
        %v3759 = vpop.xlane.xlu0 %3758
        %vm3760 = vcmp.eq.f32.partialorder %v3757, %v3759
        %v3761 = vsel %vm3760, %v3756, inf
        %3762 = vmin.xlane.f32.xlu0 %v3761
        %v3763 = vpop.xlane.xlu0 %3762
        %v3764 = vcvt.f32.s32 %v3763
        %v3765 = vcvt.f32.s32 %v3759
        %v3766 = vshll.u32 %v3765, 16
        %v3767 = vadd.s32 %v3766, %v3764
        %v3768 = vand.u32 %v3593, 65535
        %v3769 = vshra.s32 %v3593, 16
        %v3770 = vcvt.s32.f32 %v3768
        %v3771 = vcvt.s32.f32 %v3769
        %3772 = vmin.xlane.f32.xlu0 %v3771
        %v3773 = vpop.xlane.xlu0 %3772
        %vm3774 = vcmp.eq.f32.partialorder %v3771, %v3773
        %v3775 = vsel %vm3774, %v3770, inf
        %3776 = vmin.xlane.f32.xlu0 %v3775
        %v3777 = vpop.xlane.xlu0 %3776
        %v3778 = vcvt.f32.s32 %v3777
        %v3779 = vcvt.f32.s32 %v3773
        %v3780 = vshll.u32 %v3779, 16
        %v3781 = vadd.s32 %v3780, %v3778
        %v3782 = vand.u32 %v3594, 65535
        %v3783 = vshra.s32 %v3594, 16
        %v3784 = vcvt.s32.f32 %v3782
        %v3785 = vcvt.s32.f32 %v3783
        %3786 = vmin.xlane.f32.xlu0 %v3785
        %v3787 = vpop.xlane.xlu0 %3786
        %vm3788 = vcmp.eq.f32.partialorder %v3785, %v3787
        %v3789 = vsel %vm3788, %v3784, inf
        %3790 = vmin.xlane.f32.xlu0 %v3789
        %v3791 = vpop.xlane.xlu0 %3790
        %v3792 = vcvt.f32.s32 %v3791
        %v3793 = vcvt.f32.s32 %v3787
        %v3794 = vshll.u32 %v3793, 16
        %v3795 = vadd.s32 %v3794, %v3792
        %v3796 = vand.u32 %v3595, 65535
        %v3797 = vshra.s32 %v3595, 16
        %v3798 = vcvt.s32.f32 %v3796
        %v3799 = vcvt.s32.f32 %v3797
        %3800 = vmin.xlane.f32.xlu0 %v3799
        %v3801 = vpop.xlane.xlu0 %3800
        %vm3802 = vcmp.eq.f32.partialorder %v3799, %v3801
        %v3803 = vsel %vm3802, %v3798, inf
        %3804 = vmin.xlane.f32.xlu0 %v3803
        %v3805 = vpop.xlane.xlu0 %3804
        %v3806 = vcvt.f32.s32 %v3805
        %v3807 = vcvt.f32.s32 %v3801
        %v3808 = vshll.u32 %v3807, 16
        %v3809 = vadd.s32 %v3808, %v3806
        %v3810 = vand.u32 %v3596, 65535
        %v3811 = vshra.s32 %v3596, 16
        %v3812 = vcvt.s32.f32 %v3810
        %v3813 = vcvt.s32.f32 %v3811
        %3814 = vmin.xlane.f32.xlu0 %v3813
        %v3815 = vpop.xlane.xlu0 %3814
        %vm3816 = vcmp.eq.f32.partialorder %v3813, %v3815
        %v3817 = vsel %vm3816, %v3812, inf
        %3818 = vmin.xlane.f32.xlu0 %v3817
        %v3819 = vpop.xlane.xlu0 %3818
        %v3820 = vcvt.f32.s32 %v3819
        %v3821 = vcvt.f32.s32 %v3815
        %v3822 = vshll.u32 %v3821, 16
        %v3823 = vadd.s32 %v3822, %v3820
        %v3824 = vand.u32 %v3597, 65535
        %v3825 = vshra.s32 %v3597, 16
        %v3826 = vcvt.s32.f32 %v3824
        %v3827 = vcvt.s32.f32 %v3825
        %3828 = vmin.xlane.f32.xlu0 %v3827
        %v3829 = vpop.xlane.xlu0 %3828
        %vm3830 = vcmp.eq.f32.partialorder %v3827, %v3829
        %v3831 = vsel %vm3830, %v3826, inf
        %3832 = vmin.xlane.f32.xlu0 %v3831
        %v3833 = vpop.xlane.xlu0 %3832
        %v3834 = vcvt.f32.s32 %v3833
        %v3835 = vcvt.f32.s32 %v3829
        %v3836 = vshll.u32 %v3835, 16
        %v3837 = vadd.s32 %v3836, %v3834
        %v3838 = vand.u32 %v3598, 65535
        %v3839 = vshra.s32 %v3598, 16
        %v3840 = vcvt.s32.f32 %v3838
        %v3841 = vcvt.s32.f32 %v3839
        %3842 = vmin.xlane.f32.xlu0 %v3841
        %v3843 = vpop.xlane.xlu0 %3842
        %vm3844 = vcmp.eq.f32.partialorder %v3841, %v3843
        %v3845 = vsel %vm3844, %v3840, inf
        %3846 = vmin.xlane.f32.xlu0 %v3845
        %v3847 = vpop.xlane.xlu0 %3846
        %v3848 = vcvt.f32.s32 %v3847
        %v3849 = vcvt.f32.s32 %v3843
        %v3850 = vshll.u32 %v3849, 16
        %v3851 = vadd.s32 %v3850, %v3848
        %v3852 = vand.u32 %v3599, 65535
        %v3853 = vshra.s32 %v3599, 16
        %v3854 = vcvt.s32.f32 %v3852
        %v3855 = vcvt.s32.f32 %v3853
        %3856 = vmin.xlane.f32.xlu0 %v3855
        %v3857 = vpop.xlane.xlu0 %3856
        %vm3858 = vcmp.eq.f32.partialorder %v3855, %v3857
        %v3859 = vsel %vm3858, %v3854, inf
        %3860 = vmin.xlane.f32.xlu0 %v3859
        %v3861 = vpop.xlane.xlu0 %3860
        %v3862 = vcvt.f32.s32 %v3861
        %v3863 = vcvt.f32.s32 %v3857
        %v3864 = vshll.u32 %v3863, 16
        %v3865 = vadd.s32 %v3864, %v3862
        %v3866 = vand.u32 %v3600, 65535
        %v3867 = vshra.s32 %v3600, 16
        %v3868 = vcvt.s32.f32 %v3866
        %v3869 = vcvt.s32.f32 %v3867
        %3870 = vmin.xlane.f32.xlu0 %v3869
        %v3871 = vpop.xlane.xlu0 %3870
        %vm3872 = vcmp.eq.f32.partialorder %v3869, %v3871
        %v3873 = vsel %vm3872, %v3868, inf
        %3874 = vmin.xlane.f32.xlu0 %v3873
        %v3875 = vpop.xlane.xlu0 %3874
        %v3876 = vcvt.f32.s32 %v3875
        %v3877 = vcvt.f32.s32 %v3871
        %v3878 = vshll.u32 %v3877, 16
        %v3879 = vadd.s32 %v3878, %v3876
        %v3880 = vand.u32 %v3601, 65535
        %v3881 = vshra.s32 %v3601, 16
        %v3882 = vcvt.s32.f32 %v3880
        %v3883 = vcvt.s32.f32 %v3881
        %3884 = vmin.xlane.f32.xlu0 %v3883
        %v3885 = vpop.xlane.xlu0 %3884
        %vm3886 = vcmp.eq.f32.partialorder %v3883, %v3885
        %v3887 = vsel %vm3886, %v3882, inf
        %3888 = vmin.xlane.f32.xlu0 %v3887
        %v3889 = vpop.xlane.xlu0 %3888
        %v3890 = vcvt.f32.s32 %v3889
        %v3891 = vcvt.f32.s32 %v3885
        %v3892 = vshll.u32 %v3891, 16
        %v3893 = vadd.s32 %v3892, %v3890
        %v3894 = vand.u32 %v3602, 65535
        %v3895 = vshra.s32 %v3602, 16
        %v3896 = vcvt.s32.f32 %v3894
        %v3897 = vcvt.s32.f32 %v3895
        %3898 = vmin.xlane.f32.xlu0 %v3897
        %v3899 = vpop.xlane.xlu0 %3898
        %vm3900 = vcmp.eq.f32.partialorder %v3897, %v3899
        %v3901 = vsel %vm3900, %v3896, inf
        %3902 = vmin.xlane.f32.xlu0 %v3901
        %v3903 = vpop.xlane.xlu0 %3902
        %v3904 = vcvt.f32.s32 %v3903
        %v3905 = vcvt.f32.s32 %v3899
        %v3906 = vshll.u32 %v3905, 16
        %v3907 = vadd.s32 %v3906, %v3904
        %v3908 = vand.u32 %v3603, 65535
        %v3909 = vshra.s32 %v3603, 16
        %v3910 = vcvt.s32.f32 %v3908
        %v3911 = vcvt.s32.f32 %v3909
        %3912 = vmin.xlane.f32.xlu0 %v3911
        %v3913 = vpop.xlane.xlu0 %3912
        %vm3914 = vcmp.eq.f32.partialorder %v3911, %v3913
        %v3915 = vsel %vm3914, %v3910, inf
        %3916 = vmin.xlane.f32.xlu0 %v3915
        %v3917 = vpop.xlane.xlu0 %3916
        %v3918 = vcvt.f32.s32 %v3917
        %v3919 = vcvt.f32.s32 %v3913
        %v3920 = vshll.u32 %v3919, 16
        %v3921 = vadd.s32 %v3920, %v3918
        %v3922 = vand.u32 %v3604, 65535
        %v3923 = vshra.s32 %v3604, 16
        %v3924 = vcvt.s32.f32 %v3922
        %v3925 = vcvt.s32.f32 %v3923
        %3926 = vmin.xlane.f32.xlu0 %v3925
        %v3927 = vpop.xlane.xlu0 %3926
        %vm3928 = vcmp.eq.f32.partialorder %v3925, %v3927
        %v3929 = vsel %vm3928, %v3924, inf
        %3930 = vmin.xlane.f32.xlu0 %v3929
        %v3931 = vpop.xlane.xlu0 %3930
        %v3932 = vcvt.f32.s32 %v3931
        %v3933 = vcvt.f32.s32 %v3927
        %v3934 = vshll.u32 %v3933, 16
        %v3935 = vadd.s32 %v3934, %v3932
        %v3936 = vand.u32 %v3605, 65535
        %v3937 = vshra.s32 %v3605, 16
        %v3938 = vcvt.s32.f32 %v3936
        %v3939 = vcvt.s32.f32 %v3937
        %3940 = vmin.xlane.f32.xlu0 %v3939
        %v3941 = vpop.xlane.xlu0 %3940
        %vm3942 = vcmp.eq.f32.partialorder %v3939, %v3941
        %v3943 = vsel %vm3942, %v3938, inf
        %3944 = vmin.xlane.f32.xlu0 %v3943
        %v3945 = vpop.xlane.xlu0 %3944
        %v3946 = vcvt.f32.s32 %v3945
        %v3947 = vcvt.f32.s32 %v3941
        %v3948 = vshll.u32 %v3947, 16
        %v3949 = vadd.s32 %v3948, %v3946
        %v3950 = vand.u32 %v3606, 65535
        %v3951 = vshra.s32 %v3606, 16
        %v3952 = vcvt.s32.f32 %v3950
        %v3953 = vcvt.s32.f32 %v3951
        %3954 = vmin.xlane.f32.xlu0 %v3953
        %v3955 = vpop.xlane.xlu0 %3954
        %vm3956 = vcmp.eq.f32.partialorder %v3953, %v3955
        %v3957 = vsel %vm3956, %v3952, inf
        %3958 = vmin.xlane.f32.xlu0 %v3957
        %v3959 = vpop.xlane.xlu0 %3958
        %v3960 = vcvt.f32.s32 %v3959
        %v3961 = vcvt.f32.s32 %v3955
        %v3962 = vshll.u32 %v3961, 16
        %v3963 = vadd.s32 %v3962, %v3960
        %v3964 = vand.u32 %v3607, 65535
        %v3965 = vshra.s32 %v3607, 16
        %v3966 = vcvt.s32.f32 %v3964
        %v3967 = vcvt.s32.f32 %v3965
        %3968 = vmin.xlane.f32.xlu0 %v3967
        %v3969 = vpop.xlane.xlu0 %3968
        %vm3970 = vcmp.eq.f32.partialorder %v3967, %v3969
        %v3971 = vsel %vm3970, %v3966, inf
        %3972 = vmin.xlane.f32.xlu0 %v3971
        %v3973 = vpop.xlane.xlu0 %3972
        %v3974 = vcvt.f32.s32 %v3973
        %v3975 = vcvt.f32.s32 %v3969
        %v3976 = vshll.u32 %v3975, 16
        %v3977 = vadd.s32 %v3976, %v3974
        %v3978 = vand.u32 %v3608, 65535
        %v3979 = vshra.s32 %v3608, 16
        %v3980 = vcvt.s32.f32 %v3978
        %v3981 = vcvt.s32.f32 %v3979
        %3982 = vmin.xlane.f32.xlu0 %v3981
        %v3983 = vpop.xlane.xlu0 %3982
        %vm3984 = vcmp.eq.f32.partialorder %v3981, %v3983
        %v3985 = vsel %vm3984, %v3980, inf
        %3986 = vmin.xlane.f32.xlu0 %v3985
        %v3987 = vpop.xlane.xlu0 %3986
        %v3988 = vcvt.f32.s32 %v3987
        %v3989 = vcvt.f32.s32 %v3983
        %v3990 = vshll.u32 %v3989, 16
        %v3991 = vadd.s32 %v3990, %v3988
        %v3992 = vand.u32 %v3609, 65535
        %v3993 = vshra.s32 %v3609, 16
        %v3994 = vcvt.s32.f32 %v3992
        %v3995 = vcvt.s32.f32 %v3993
        %3996 = vmin.xlane.f32.xlu0 %v3995
        %v3997 = vpop.xlane.xlu0 %3996
        %vm3998 = vcmp.eq.f32.partialorder %v3995, %v3997
        %v3999 = vsel %vm3998, %v3994, inf
        %4000 = vmin.xlane.f32.xlu0 %v3999
        %v4001 = vpop.xlane.xlu0 %4000
        %v4002 = vcvt.f32.s32 %v4001
        %v4003 = vcvt.f32.s32 %v3997
        %v4004 = vshll.u32 %v4003, 16
        %v4005 = vadd.s32 %v4004, %v4002
        %v4006 = vand.u32 %v3610, 65535
        %v4007 = vshra.s32 %v3610, 16
        %v4008 = vcvt.s32.f32 %v4006
        %v4009 = vcvt.s32.f32 %v4007
        %4010 = vmin.xlane.f32.xlu0 %v4009
        %v4011 = vpop.xlane.xlu0 %4010
        %vm4012 = vcmp.eq.f32.partialorder %v4009, %v4011
        %v4013 = vsel %vm4012, %v4008, inf
        %4014 = vmin.xlane.f32.xlu0 %v4013
        %v4015 = vpop.xlane.xlu0 %4014
        %v4016 = vcvt.f32.s32 %v4015
        %v4017 = vcvt.f32.s32 %v4011
        %v4018 = vshll.u32 %v4017, 16
        %v4019 = vadd.s32 %v4018, %v4016
        %v4020 = vand.u32 %v3611, 65535
        %v4021 = vshra.s32 %v3611, 16
        %v4022 = vcvt.s32.f32 %v4020
        %v4023 = vcvt.s32.f32 %v4021
        %4024 = vmin.xlane.f32.xlu0 %v4023
        %v4025 = vpop.xlane.xlu0 %4024
        %vm4026 = vcmp.eq.f32.partialorder %v4023, %v4025
        %v4027 = vsel %vm4026, %v4022, inf
        %4028 = vmin.xlane.f32.xlu0 %v4027
        %v4029 = vpop.xlane.xlu0 %4028
        %v4030 = vcvt.f32.s32 %v4029
        %v4031 = vcvt.f32.s32 %v4025
        %v4032 = vshll.u32 %v4031, 16
        %v4033 = vadd.s32 %v4032, %v4030
        %v4034 = vand.u32 %v3612, 65535
        %v4035 = vshra.s32 %v3612, 16
        %v4036 = vcvt.s32.f32 %v4034
        %v4037 = vcvt.s32.f32 %v4035
        %4038 = vmin.xlane.f32.xlu0 %v4037
        %v4039 = vpop.xlane.xlu0 %4038
        %vm4040 = vcmp.eq.f32.partialorder %v4037, %v4039
        %v4041 = vsel %vm4040, %v4036, inf
        %4042 = vmin.xlane.f32.xlu0 %v4041
        %v4043 = vpop.xlane.xlu0 %4042
        %v4044 = vcvt.f32.s32 %v4043
        %v4045 = vcvt.f32.s32 %v4039
        %v4046 = vshll.u32 %v4045, 16
        %v4047 = vadd.s32 %v4046, %v4044
        %v4048 = vand.u32 %v3613, 65535
        %v4049 = vshra.s32 %v3613, 16
        %v4050 = vcvt.s32.f32 %v4048
        %v4051 = vcvt.s32.f32 %v4049
        %4052 = vmin.xlane.f32.xlu0 %v4051
        %v4053 = vpop.xlane.xlu0 %4052
        %vm4054 = vcmp.eq.f32.partialorder %v4051, %v4053
        %v4055 = vsel %vm4054, %v4050, inf
        %4056 = vmin.xlane.f32.xlu0 %v4055
        %v4057 = vpop.xlane.xlu0 %4056
        %v4058 = vcvt.f32.s32 %v4057
        %v4059 = vcvt.f32.s32 %v4053
        %v4060 = vshll.u32 %v4059, 16
        %v4061 = vadd.s32 %v4060, %v4058
        %vm4062 = vcmp.eq.s32.totalorder %v368, %v3627
        %vm4063 = vcmp.eq.s32.totalorder %v368, %v3641
        %vm4064 = vcmp.eq.s32.totalorder %v368, %v3655
        %vm4065 = vcmp.eq.s32.totalorder %v368, %v3669
        %vm4066 = vcmp.eq.s32.totalorder %v368, %v3683
        %vm4067 = vcmp.eq.s32.totalorder %v368, %v3697
        %vm4068 = vcmp.eq.s32.totalorder %v368, %v3711
        %vm4069 = vcmp.eq.s32.totalorder %v368, %v3725
        %vm4070 = vcmp.eq.s32.totalorder %v368, %v3739
        %vm4071 = vcmp.eq.s32.totalorder %v368, %v3753
        %vm4072 = vcmp.eq.s32.totalorder %v368, %v3767
        %vm4073 = vcmp.eq.s32.totalorder %v368, %v3781
        %vm4074 = vcmp.eq.s32.totalorder %v368, %v3795
        %vm4075 = vcmp.eq.s32.totalorder %v368, %v3809
        %vm4076 = vcmp.eq.s32.totalorder %v368, %v3823
        %vm4077 = vcmp.eq.s32.totalorder %v368, %v3837
        %vm4078 = vcmp.eq.s32.totalorder %v368, %v3851
        %vm4079 = vcmp.eq.s32.totalorder %v368, %v3865
        %vm4080 = vcmp.eq.s32.totalorder %v368, %v3879
        %vm4081 = vcmp.eq.s32.totalorder %v368, %v3893
        %vm4082 = vcmp.eq.s32.totalorder %v368, %v3907
        %vm4083 = vcmp.eq.s32.totalorder %v368, %v3921
        %vm4084 = vcmp.eq.s32.totalorder %v368, %v3935
        %vm4085 = vcmp.eq.s32.totalorder %v368, %v3949
        %vm4086 = vcmp.eq.s32.totalorder %v368, %v3963
        %vm4087 = vcmp.eq.s32.totalorder %v368, %v3977
        %vm4088 = vcmp.eq.s32.totalorder %v368, %v3991
        %vm4089 = vcmp.eq.s32.totalorder %v368, %v4005
        %vm4090 = vcmp.eq.s32.totalorder %v368, %v4019
        %vm4091 = vcmp.eq.s32.totalorder %v368, %v4033
        %vm4092 = vcmp.eq.s32.totalorder %v368, %v4047
        %vm4093 = vcmp.eq.s32.totalorder %v368, %v4061
        %v4094 = vsel %vm4062, 1, 0
        %v4095 = vsel %vm4063, 1, 0
        %v4096 = vsel %vm4064, 1, 0
        %v4097 = vsel %vm4065, 1, 0
        %v4098 = vsel %vm4066, 1, 0
        %v4099 = vsel %vm4067, 1, 0
        %v4100 = vsel %vm4068, 1, 0
        %v4101 = vsel %vm4069, 1, 0
        %v4102 = vsel %vm4070, 1, 0
        %v4103 = vsel %vm4071, 1, 0
        %v4104 = vsel %vm4072, 1, 0
        %v4105 = vsel %vm4073, 1, 0
        %v4106 = vsel %vm4074, 1, 0
        %v4107 = vsel %vm4075, 1, 0
        %v4108 = vsel %vm4076, 1, 0
        %v4109 = vsel %vm4077, 1, 0
        %v4110 = vsel %vm4078, 1, 0
        %v4111 = vsel %vm4079, 1, 0
        %v4112 = vsel %vm4080, 1, 0
        %v4113 = vsel %vm4081, 1, 0
        %v4114 = vsel %vm4082, 1, 0
        %v4115 = vsel %vm4083, 1, 0
        %v4116 = vsel %vm4084, 1, 0
        %v4117 = vsel %vm4085, 1, 0
        %v4118 = vsel %vm4086, 1, 0
        %v4119 = vsel %vm4087, 1, 0
        %v4120 = vsel %vm4088, 1, 0
        %v4121 = vsel %vm4089, 1, 0
        %v4122 = vsel %vm4090, 1, 0
        %v4123 = vsel %vm4091, 1, 0
        %v4124 = vsel %vm4092, 1, 0
        %v4125 = vsel %vm4093, 1, 0
        %v4126 = vcvt.s32.f32 %v4094
        %v4127 = vcvt.s32.f32 %v4095
        %v4128 = vcvt.s32.f32 %v4096
        %v4129 = vcvt.s32.f32 %v4097
        %v4130 = vcvt.s32.f32 %v4098
        %v4131 = vcvt.s32.f32 %v4099
        %v4132 = vcvt.s32.f32 %v4100
        %v4133 = vcvt.s32.f32 %v4101
        %v4134 = vcvt.s32.f32 %v4102
        %v4135 = vcvt.s32.f32 %v4103
        %v4136 = vcvt.s32.f32 %v4104
        %v4137 = vcvt.s32.f32 %v4105
        %v4138 = vcvt.s32.f32 %v4106
        %v4139 = vcvt.s32.f32 %v4107
        %v4140 = vcvt.s32.f32 %v4108
        %v4141 = vcvt.s32.f32 %v4109
        %v4142 = vcvt.s32.f32 %v4110
        %v4143 = vcvt.s32.f32 %v4111
        %v4144 = vcvt.s32.f32 %v4112
        %v4145 = vcvt.s32.f32 %v4113
        %v4146 = vcvt.s32.f32 %v4114
        %v4147 = vcvt.s32.f32 %v4115
        %v4148 = vcvt.s32.f32 %v4116
        %v4149 = vcvt.s32.f32 %v4117
        %v4150 = vcvt.s32.f32 %v4118
        %v4151 = vcvt.s32.f32 %v4119
        %v4152 = vcvt.s32.f32 %v4120
        %v4153 = vcvt.s32.f32 %v4121
        %v4154 = vcvt.s32.f32 %v4122
        %v4155 = vcvt.s32.f32 %v4123
        %v4156 = vcvt.s32.f32 %v4124
        %v4157 = vcvt.s32.f32 %v4125
        %4158 = vmatprep.subr.mxu0 0.0
        %4159 = vmatpush1.msra.mxu0 %v333
        %4160 = vmatprep.subr.mxu0 0.0
        %4161 = vmatpush1.msra.mxu0 %v332
        %4162 = vmatprep.subr.mxu0 0.0
        %4163 = vmatpush1.msra.mxu0 %v331
        %4164 = vmatprep.subr.mxu0 0.0
        %4165 = vmatpush1.msra.mxu0 %v330
        %4166 = vmatprep.subr.mxu0 0.0
        %4167 = vmatpush1.msra.mxu0 %v329
        %4168 = vmatprep.subr.mxu0 0.0
        %4169 = vmatpush1.msra.mxu0 %v328
        %4170 = vmatprep.subr.mxu0 0.0
        %4171 = vmatpush1.msra.mxu0 %v327
        %4172 = vmatprep.subr.mxu0 0.0
        %4173 = vmatpush1.msra.mxu0 %v326
        %4174 = vmatprep.subr.mxu0 0.0
        %4175 = vmatpush1.msra.mxu0 %v325
        %4176 = vmatprep.subr.mxu0 0.0
        %4177 = vmatpush1.msra.mxu0 %v324
        %4178 = vmatprep.subr.mxu0 0.0
        %4179 = vmatpush1.msra.mxu0 %v323
        %4180 = vmatprep.subr.mxu0 0.0
        %4181 = vmatpush1.msra.mxu0 %v322
        %4182 = vmatprep.subr.mxu0 0.0
        %4183 = vmatpush1.msra.mxu0 %v321
        %4184 = vmatprep.subr.mxu0 0.0
        %4185 = vmatpush1.msra.mxu0 %v320
        %4186 = vmatprep.subr.mxu0 0.0
        %4187 = vmatpush1.msra.mxu0 %v319
        %4188 = vmatprep.subr.mxu0 0.0
        %4189 = vmatpush1.msra.mxu0 %v318
        %4190 = vmatprep.subr.mxu0 0.0
        %4191 = vmatpush2.msra.mxu0 0.0
        %4192 = vmatprep.subr.mxu0 0.0
        %4193 = vmatpush2.msra.mxu0 0.0
        %4194 = vmatprep.subr.mxu0 0.0
        %4195 = vmatpush2.msra.mxu0 0.0
        %4196 = vmatprep.subr.mxu0 0.0
        %4197 = vmatpush2.msra.mxu0 0.0
        %4198 = vmatprep.subr.mxu0 0.0
        %4199 = vmatpush2.msra.mxu0 0.0
        %4200 = vmatprep.subr.mxu0 0.0
        %4201 = vmatpush2.msra.mxu0 0.0
        %4202 = vmatprep.subr.mxu0 0.0
        %4203 = vmatpush2.msra.mxu0 0.0
        %4204 = vmatprep.subr.mxu0 0.0
        %4205 = vmatpush2.msra.mxu0 0.0
        %4206 = vmatprep.subr.mxu0 0.0
        %4207 = vmatpush2.msra.mxu0 0.0
        %4208 = vmatprep.subr.mxu0 0.0
        %4209 = vmatpush2.msra.mxu0 0.0
        %4210 = vmatprep.subr.mxu0 0.0
        %4211 = vmatpush2.msra.mxu0 0.0
        %4212 = vmatprep.subr.mxu0 0.0
        %4213 = vmatpush2.msra.mxu0 0.0
        %4214 = vmatprep.subr.mxu0 0.0
        %4215 = vmatpush2.msra.mxu0 0.0
        %4216 = vmatprep.subr.mxu0 0.0
        %4217 = vmatpush2.msra.mxu0 0.0
        %4218 = vmatprep.subr.mxu0 0.0
        %4219 = vmatpush2.msra.mxu0 0.0
        %4220 = vmatprep.subr.mxu0 0.0
        %4221 = vmatpush2.msra.mxu0 0.0
        %4222 = vmatprep.mubr.f32.mxu0 0.0
        %4223 = vmatmul.mubr.f32.gmra.mxu0 %v4126
        %v4224 = vpop.f32.mrf.mxu0
        %v4225 = vadd.f32 0.0, %v4224
        %v4226 = vpop.f32.mrf.mxu0
        %4227 = vmatprep.mubr.f32.mxu0 0.0
        %4228 = vmatmul.mubr.f32.gmra.mxu0 %v4127
        %v4229 = vpop.f32.mrf.mxu0
        %v4230 = vadd.f32 0.0, %v4229
        %v4231 = vpop.f32.mrf.mxu0
        %4232 = vmatprep.mubr.f32.mxu0 0.0
        %4233 = vmatmul.mubr.f32.gmra.mxu0 %v4128
        %v4234 = vpop.f32.mrf.mxu0
        %v4235 = vadd.f32 0.0, %v4234
        %v4236 = vpop.f32.mrf.mxu0
        %4237 = vmatprep.mubr.f32.mxu0 0.0
        %4238 = vmatmul.mubr.f32.gmra.mxu0 %v4129
        %v4239 = vpop.f32.mrf.mxu0
        %v4240 = vadd.f32 0.0, %v4239
        %v4241 = vpop.f32.mrf.mxu0
        %4242 = vmatprep.mubr.f32.mxu0 0.0
        %4243 = vmatmul.mubr.f32.gmra.mxu0 %v4130
        %v4244 = vpop.f32.mrf.mxu0
        %v4245 = vadd.f32 0.0, %v4244
        %v4246 = vpop.f32.mrf.mxu0
        %4247 = vmatprep.mubr.f32.mxu0 0.0
        %4248 = vmatmul.mubr.f32.gmra.mxu0 %v4131
        %v4249 = vpop.f32.mrf.mxu0
        %v4250 = vadd.f32 0.0, %v4249
        %v4251 = vpop.f32.mrf.mxu0
        %4252 = vmatprep.mubr.f32.mxu0 0.0
        %4253 = vmatmul.mubr.f32.gmra.mxu0 %v4132
        %v4254 = vpop.f32.mrf.mxu0
        %v4255 = vadd.f32 0.0, %v4254
        %v4256 = vpop.f32.mrf.mxu0
        %4257 = vmatprep.mubr.f32.mxu0 0.0
        %4258 = vmatmul.mubr.f32.gmra.mxu0 %v4133
        %v4259 = vpop.f32.mrf.mxu0
        %v4260 = vadd.f32 0.0, %v4259
        %v4261 = vpop.f32.mrf.mxu0
        %4262 = vmatprep.mubr.f32.mxu0 0.0
        %4263 = vmatmul.mubr.f32.gmra.mxu0 %v4134
        %v4264 = vpop.f32.mrf.mxu0
        %v4265 = vadd.f32 0.0, %v4264
        %v4266 = vpop.f32.mrf.mxu0
        %4267 = vmatprep.mubr.f32.mxu0 0.0
        %4268 = vmatmul.mubr.f32.gmra.mxu0 %v4135
        %v4269 = vpop.f32.mrf.mxu0
        %v4270 = vadd.f32 0.0, %v4269
        %v4271 = vpop.f32.mrf.mxu0
        %4272 = vmatprep.mubr.f32.mxu0 0.0
        %4273 = vmatmul.mubr.f32.gmra.mxu0 %v4136
        %v4274 = vpop.f32.mrf.mxu0
        %v4275 = vadd.f32 0.0, %v4274
        %v4276 = vpop.f32.mrf.mxu0
        %4277 = vmatprep.mubr.f32.mxu0 0.0
        %4278 = vmatmul.mubr.f32.gmra.mxu0 %v4137
        %v4279 = vpop.f32.mrf.mxu0
        %v4280 = vadd.f32 0.0, %v4279
        %v4281 = vpop.f32.mrf.mxu0
        %4282 = vmatprep.mubr.f32.mxu0 0.0
        %4283 = vmatmul.mubr.f32.gmra.mxu0 %v4138
        %v4284 = vpop.f32.mrf.mxu0
        %v4285 = vadd.f32 0.0, %v4284
        %v4286 = vpop.f32.mrf.mxu0
        %4287 = vmatprep.mubr.f32.mxu0 0.0
        %4288 = vmatmul.mubr.f32.gmra.mxu0 %v4139
        %v4289 = vpop.f32.mrf.mxu0
        %v4290 = vadd.f32 0.0, %v4289
        %v4291 = vpop.f32.mrf.mxu0
        %4292 = vmatprep.mubr.f32.mxu0 0.0
        %4293 = vmatmul.mubr.f32.gmra.mxu0 %v4140
        %v4294 = vpop.f32.mrf.mxu0
        %v4295 = vadd.f32 0.0, %v4294
        %v4296 = vpop.f32.mrf.mxu0
        %4297 = vmatprep.mubr.f32.mxu0 0.0
        %4298 = vmatmul.mubr.f32.gmra.mxu0 %v4141
        %v4299 = vpop.f32.mrf.mxu0
        %v4300 = vadd.f32 0.0, %v4299
        %v4301 = vpop.f32.mrf.mxu0
        %4302 = vmatprep.mubr.f32.mxu0 0.0
        %4303 = vmatmul.mubr.f32.gmra.mxu0 %v4142
        %v4304 = vpop.f32.mrf.mxu0
        %v4305 = vadd.f32 0.0, %v4304
        %v4306 = vpop.f32.mrf.mxu0
        %4307 = vmatprep.mubr.f32.mxu0 0.0
        %4308 = vmatmul.mubr.f32.gmra.mxu0 %v4143
        %v4309 = vpop.f32.mrf.mxu0
        %v4310 = vadd.f32 0.0, %v4309
        %v4311 = vpop.f32.mrf.mxu0
        %4312 = vmatprep.mubr.f32.mxu0 0.0
        %4313 = vmatmul.mubr.f32.gmra.mxu0 %v4144
        %v4314 = vpop.f32.mrf.mxu0
        %v4315 = vadd.f32 0.0, %v4314
        %v4316 = vpop.f32.mrf.mxu0
        %4317 = vmatprep.mubr.f32.mxu0 0.0
        %4318 = vmatmul.mubr.f32.gmra.mxu0 %v4145
        %v4319 = vpop.f32.mrf.mxu0
        %v4320 = vadd.f32 0.0, %v4319
        %v4321 = vpop.f32.mrf.mxu0
        %4322 = vmatprep.mubr.f32.mxu0 0.0
        %4323 = vmatmul.mubr.f32.gmra.mxu0 %v4146
        %v4324 = vpop.f32.mrf.mxu0
        %v4325 = vadd.f32 0.0, %v4324
        %v4326 = vpop.f32.mrf.mxu0
        %4327 = vmatprep.mubr.f32.mxu0 0.0
        %4328 = vmatmul.mubr.f32.gmra.mxu0 %v4147
        %v4329 = vpop.f32.mrf.mxu0
        %v4330 = vadd.f32 0.0, %v4329
        %v4331 = vpop.f32.mrf.mxu0
        %4332 = vmatprep.mubr.f32.mxu0 0.0
        %4333 = vmatmul.mubr.f32.gmra.mxu0 %v4148
        %v4334 = vpop.f32.mrf.mxu0
        %v4335 = vadd.f32 0.0, %v4334
        %v4336 = vpop.f32.mrf.mxu0
        %4337 = vmatprep.mubr.f32.mxu0 0.0
        %4338 = vmatmul.mubr.f32.gmra.mxu0 %v4149
        %v4339 = vpop.f32.mrf.mxu0
        %v4340 = vadd.f32 0.0, %v4339
        %v4341 = vpop.f32.mrf.mxu0
        %4342 = vmatprep.mubr.f32.mxu0 0.0
        %4343 = vmatmul.mubr.f32.gmra.mxu0 %v4150
        %v4344 = vpop.f32.mrf.mxu0
        %v4345 = vadd.f32 0.0, %v4344
        %v4346 = vpop.f32.mrf.mxu0
        %4347 = vmatprep.mubr.f32.mxu0 0.0
        %4348 = vmatmul.mubr.f32.gmra.mxu0 %v4151
        %v4349 = vpop.f32.mrf.mxu0
        %v4350 = vadd.f32 0.0, %v4349
        %v4351 = vpop.f32.mrf.mxu0
        %4352 = vmatprep.mubr.f32.mxu0 0.0
        %4353 = vmatmul.mubr.f32.gmra.mxu0 %v4152
        %v4354 = vpop.f32.mrf.mxu0
        %v4355 = vadd.f32 0.0, %v4354
        %v4356 = vpop.f32.mrf.mxu0
        %4357 = vmatprep.mubr.f32.mxu0 0.0
        %4358 = vmatmul.mubr.f32.gmra.mxu0 %v4153
        %v4359 = vpop.f32.mrf.mxu0
        %v4360 = vadd.f32 0.0, %v4359
        %v4361 = vpop.f32.mrf.mxu0
        %4362 = vmatprep.mubr.f32.mxu0 0.0
        %4363 = vmatmul.mubr.f32.gmra.mxu0 %v4154
        %v4364 = vpop.f32.mrf.mxu0
        %v4365 = vadd.f32 0.0, %v4364
        %v4366 = vpop.f32.mrf.mxu0
        %4367 = vmatprep.mubr.f32.mxu0 0.0
        %4368 = vmatmul.mubr.f32.gmra.mxu0 %v4155
        %v4369 = vpop.f32.mrf.mxu0
        %v4370 = vadd.f32 0.0, %v4369
        %v4371 = vpop.f32.mrf.mxu0
        %4372 = vmatprep.mubr.f32.mxu0 0.0
        %4373 = vmatmul.mubr.f32.gmra.mxu0 %v4156
        %v4374 = vpop.f32.mrf.mxu0
        %v4375 = vadd.f32 0.0, %v4374
        %v4376 = vpop.f32.mrf.mxu0
        %4377 = vmatprep.mubr.f32.mxu0 0.0
        %4378 = vmatmul.mubr.f32.gmra.mxu0 %v4157
        %v4379 = vpop.f32.mrf.mxu0
        %v4380 = vadd.f32 0.0, %v4379
        %v4381 = vpop.f32.mrf.mxu0
        %4382 = vdwg.mxu0
        %v4383 = vsub.f32 %v3036, %v4225
        %v4384 = vsub.f32 %v3037, %v4230
        %v4385 = vsub.f32 %v3038, %v4235
        %v4386 = vsub.f32 %v3039, %v4240
        %v4387 = vsub.f32 %v3040, %v4245
        %v4388 = vsub.f32 %v3041, %v4250
        %v4389 = vsub.f32 %v3042, %v4255
        %v4390 = vsub.f32 %v3043, %v4260
        %v4391 = vsub.f32 %v3044, %v4265
        %v4392 = vsub.f32 %v3045, %v4270
        %v4393 = vsub.f32 %v3046, %v4275
        %v4394 = vsub.f32 %v3047, %v4280
        %v4395 = vsub.f32 %v3048, %v4285
        %v4396 = vsub.f32 %v3049, %v4290
        %v4397 = vsub.f32 %v3050, %v4295
        %v4398 = vsub.f32 %v3051, %v4300
        %v4399 = vsub.f32 %v3052, %v4305
        %v4400 = vsub.f32 %v3053, %v4310
        %v4401 = vsub.f32 %v3054, %v4315
        %v4402 = vsub.f32 %v3055, %v4320
        %v4403 = vsub.f32 %v3056, %v4325
        %v4404 = vsub.f32 %v3057, %v4330
        %v4405 = vsub.f32 %v3058, %v4335
        %v4406 = vsub.f32 %v3059, %v4340
        %v4407 = vsub.f32 %v3060, %v4345
        %v4408 = vsub.f32 %v3061, %v4350
        %v4409 = vsub.f32 %v3062, %v4355
        %v4410 = vsub.f32 %v3063, %v4360
        %v4411 = vsub.f32 %v3064, %v4365
        %v4412 = vsub.f32 %v3065, %v4370
        %v4413 = vsub.f32 %v3066, %v4375
        %v4414 = vsub.f32 %v3067, %v4380
        %v4415 = vsub.f32 %v286, %v4383
        %v4416 = vsub.f32 %v287, %v4384
        %v4417 = vsub.f32 %v288, %v4385
        %v4418 = vsub.f32 %v289, %v4386
        %v4419 = vsub.f32 %v290, %v4387
        %v4420 = vsub.f32 %v291, %v4388
        %v4421 = vsub.f32 %v292, %v4389
        %v4422 = vsub.f32 %v293, %v4390
        %v4423 = vsub.f32 %v294, %v4391
        %v4424 = vsub.f32 %v295, %v4392
        %v4425 = vsub.f32 %v296, %v4393
        %v4426 = vsub.f32 %v297, %v4394
        %v4427 = vsub.f32 %v298, %v4395
        %v4428 = vsub.f32 %v299, %v4396
        %v4429 = vsub.f32 %v300, %v4397
        %v4430 = vsub.f32 %v301, %v4398
        %v4431 = vsub.f32 %v302, %v4399
        %v4432 = vsub.f32 %v303, %v4400
        %v4433 = vsub.f32 %v304, %v4401
        %v4434 = vsub.f32 %v305, %v4402
        %v4435 = vsub.f32 %v306, %v4403
        %v4436 = vsub.f32 %v307, %v4404
        %v4437 = vsub.f32 %v308, %v4405
        %v4438 = vsub.f32 %v309, %v4406
        %v4439 = vsub.f32 %v310, %v4407
        %v4440 = vsub.f32 %v311, %v4408
        %v4441 = vsub.f32 %v312, %v4409
        %v4442 = vsub.f32 %v313, %v4410
        %v4443 = vsub.f32 %v314, %v4411
        %v4444 = vsub.f32 %v315, %v4412
        %v4445 = vsub.f32 %v316, %v4413
        %v4446 = vsub.f32 %v317, %v4414
        %4447 = vst [vmem:[%s275] sm:$0xff] %v4415
        %4448 = vst [vmem:[%s275 + $0x8] sm:$0xff] %v4416
        %4449 = vst [vmem:[%s275 + $0x10] sm:$0xff] %v4417
        %4450 = vst [vmem:[%s275 + $0x18] sm:$0xff] %v4418
        %4451 = vst [vmem:[%s275 + $0x20] sm:$0xff] %v4419
        %4452 = vst [vmem:[%s275 + $0x28] sm:$0xff] %v4420
        %4453 = vst [vmem:[%s275 + $0x30] sm:$0xff] %v4421
        %4454 = vst [vmem:[%s275 + $0x38] sm:$0xff] %v4422
        %4455 = vst [vmem:[%s275 + $0x40] sm:$0xff] %v4423
        %4456 = vst [vmem:[%s275 + $0x48] sm:$0xff] %v4424
        %4457 = vst [vmem:[%s275 + $0x50] sm:$0xff] %v4425
        %4458 = vst [vmem:[%s275 + $0x58] sm:$0xff] %v4426
        %4459 = vst [vmem:[%s275 + $0x60] sm:$0xff] %v4427
        %4460 = vst [vmem:[%s275 + $0x68] sm:$0xff] %v4428
        %4461 = vst [vmem:[%s275 + $0x70] sm:$0xff] %v4429
        %4462 = vst [vmem:[%s275 + $0x78] sm:$0xff] %v4430
        %4463 = vst [vmem:[%s275 + $0x80] sm:$0xff] %v4431
        %4464 = vst [vmem:[%s275 + $0x88] sm:$0xff] %v4432
        %4465 = vst [vmem:[%s275 + $0x90] sm:$0xff] %v4433
        %4466 = vst [vmem:[%s275 + $0x98] sm:$0xff] %v4434
        %4467 = vst [vmem:[%s275 + $0xa0] sm:$0xff] %v4435
        %4468 = vst [vmem:[%s275 + $0xa8] sm:$0xff] %v4436
        %4469 = vst [vmem:[%s275 + $0xb0] sm:$0xff] %v4437
        %4470 = vst [vmem:[%s275 + $0xb8] sm:$0xff] %v4438
        %4471 = vst [vmem:[%s275 + $0xc0] sm:$0xff] %v4439
        %4472 = vst [vmem:[%s275 + $0xc8] sm:$0xff] %v4440
        %4473 = vst [vmem:[%s275 + $0xd0] sm:$0xff] %v4441
        %4474 = vst [vmem:[%s275 + $0xd8] sm:$0xff] %v4442
        %4475 = vst [vmem:[%s275 + $0xe0] sm:$0xff] %v4443
        %4476 = vst [vmem:[%s275 + $0xe8] sm:$0xff] %v4444
        %4477 = vst [vmem:[%s275 + $0xf0] sm:$0xff] %v4445
        %4478 = vst [vmem:[%s275 + $0xf8] sm:$0xff] %v4446
        %s4479 = sand.u32 %s124, 1
        %s4480 = scalar_lea.sflag [#allocation4], %s4479
        %s4481 = sand.u32 %s124, 1
        %s4482 = smul.addr %s4481, 256
        %s4483 = scalar_lea.vmem [#allocation8], %s4482
        %s4484 = sand.u32 %s150, 1
        %s4485 = scalar_lea.sflag [#allocation10], %s4484
        %s4486 = sand.u32 %s150, 1
        %s4487 = smul.addr %s4486, 768
        %s4488 = scalar_lea.vmem [#allocation9], %s4487
        // Predicated region
        $region49: #{tpu_custom_call.1} parent=35 // pred_check
          %p4489 = pneg %p134
        $region50: #{tpu_custom_call.1} parent=35 // pred_check_branch
          %4491 = sbr.rel (%p4489) target = $region52
        $region51: #{tpu_custom_call.1} parent=35 // pred_region
          %s4492 = smul.u32 32, %s27
          %s4494 = ssub.s32 4096, 4096
          %4495 = vsyncadd %s4480, %s4494
          %s4496 = smul.addr %s4492, 128
          %s4497 = scalar_lea.hbm %s4, %s4496
          %s4498 = sshll.u32 %s4483, 4
          %s4499 = int_to_ptr.vmem [resolvable:$true] %s4498
          %4504 = dma.vmem_to_hbm [thread:$0]  %s4499, 4096, %s4497, %s4480, 128, 128, 8
        $region52: #{tpu_custom_call.1} parent=35 // pred_fallthru
          _
        // Predicated region
        $region53: #{tpu_custom_call.1} parent=35 // pred_check
          %p4505 = pneg %p160
        $region54: #{tpu_custom_call.1} parent=35 // pred_check_branch
          %4507 = sbr.rel (%p4505) target = $region56
        $region55: #{tpu_custom_call.1} parent=35 // pred_region
          #allocation12 [shape = 'u32[6]{0}', space=smem, size = 0x18, scoped, tag = 'DMA stride descriptor']
          %s4508 = smul.u32 32, %s27
          %s4510 = ssub.s32 12288, 12288
          %4511 = vsyncadd %s4485, %s4510
          %s4512 = smul.addr %s4508, 128
          %s4513 = scalar_lea.hbm %s5, %s4512
          %s4515 = sshll.u32 1, 14
          %s4516 = sxor.u32 4294967295, %s4515
          %s4519 = sshll.u32 7, 18
          %s4520 = sxor.u32 4294967295, %s4519
          %s4521 = sand.u32 0, %s4520
          %s4523 = sor.u32 %s4521, 0
          %s4524 = sshll.u32 %s4488, 4
          %s4525 = int_to_ptr.vmem [resolvable:$true] %s4524
          %4531 = sst [smem:[#allocation12]] 4096
          %s4532 = scalar_lea.smem [#allocation12], 1
          %4533 = sst [smem:[%s4532]] 8192
          %s4534 = scalar_lea.smem [#allocation12], 2
          %4535 = sst [smem:[%s4534]] 32
          %s4536 = scalar_lea.smem [#allocation12], 3
          %4537 = sst [smem:[%s4536]] 128
          %s4538 = scalar_lea.smem [#allocation12], 4
          %4539 = sst [smem:[%s4538]] 128
          %s4540 = scalar_lea.smem [#allocation12], 5
          %4541 = sst [smem:[%s4540]] 8
          %4543 = dma.general %s4525, 12288, %s4513, %s4485, 131072, [#allocation12], %s4523, 0
        $region56: #{tpu_custom_call.1} parent=35 // pred_fallthru
          _
      $region36: #{tpu_custom_call.1} parent=5 // pred_fallthru
        _
      %p4544 = scmp.le.s32.totalorder 2, %s22
      // Predicated region
      $region57: #{tpu_custom_call.1} parent=5 // pred_check
        %p4545 = pneg %p4544
      $region58: #{tpu_custom_call.1} parent=5 // pred_check_branch
        %4547 = sbr.rel (%p4545) target = $region60
      $region59: #{tpu_custom_call.1} parent=5 // pred_region
        %s4548 = ssub.s32 %s22, 2
        // Predicated region
        $region61: #{tpu_custom_call.1} parent=59 // pred_check
          %p4549 = pneg %p140
        $region62: #{tpu_custom_call.1} parent=59 // pred_check_branch
          %4551 = sbr.rel (%p4549) target = $region64
        $region63: #{tpu_custom_call.1} parent=59 // pred_region
          %s4552 = sand.u32 %s125, 1
          %s4553 = scalar_lea.sflag [#allocation4], %s4552
          %s4554 = sand.u32 %s125, 1
          %s4555 = smul.addr %s4554, 256
          %s4556 = scalar_lea.vmem [#allocation8], %s4555
          %4557 = dma.done %s4553, 4096
        $region64: #{tpu_custom_call.1} parent=59 // pred_fallthru
          _
        // Predicated region
        $region65: #{tpu_custom_call.1} parent=59 // pred_check
          %p4558 = pneg %p166
        $region66: #{tpu_custom_call.1} parent=59 // pred_check_branch
          %4560 = sbr.rel (%p4558) target = $region68
        $region67: #{tpu_custom_call.1} parent=59 // pred_region
          %s4561 = sand.u32 %s151, 1
          %s4562 = scalar_lea.sflag [#allocation10], %s4561
          %s4563 = sand.u32 %s151, 1
          %s4564 = smul.addr %s4563, 768
          %s4565 = scalar_lea.vmem [#allocation9], %s4564
          %4566 = dma.done %s4562, 12288
        $region68: #{tpu_custom_call.1} parent=59 // pred_fallthru
          _
      $region60: #{tpu_custom_call.1} parent=5 // pred_fallthru
        _
    $region6: #{tpu_custom_call.1} parent=1 // loop_footer
      %s26 = sadd.s32 1, %s22
    $region7: #{tpu_custom_call.1} parent=1 // loop_footer_branch
      %21 = sbr.rel target = $region3
    $region8: #{tpu_custom_call.1} parent=1 // loop_exit
      _
    %4567 = vsyncpa [#allocation3], 1
    %s4568 = scalar_lea.sflag [#allocation3], 1
    %4569 = vsyncpa %s4568, 1
    %4570 = vsyncpa [#allocation6], 1
    %4571 = vsyncpa [#allocation4], 1
    %s4572 = scalar_lea.sflag [#allocation4], 1
    %4573 = vsyncpa %s4572, 1
    %4574 = vsyncpa [#allocation10], 1
    %s4575 = scalar_lea.sflag [#allocation10], 1
    %4576 = vsyncpa %s4575, 1

</llo_original>
